<compile_context>
chip_gen: v5e
topology: v5e:2x2
jax: 0.10.0
libtpu: 0.0.40
codegen_flags: <defaults>
</compile_context>

<pallas_src>
import functools

import jax
import jax.numpy as jnp
from jax.experimental import pallas as pl
from jax.experimental.pallas import tpu as pltpu


# ----------------------------------------------------------------------------
# Fused kernel: 2 layers x 2 directions, single invocation.
# x is time-major and flattened to 2D: row index = t * B + b.
# Weights are pre-transposed to (D, 3H) / (H, 3H); gate order is PyTorch's (r, z, n).
# ----------------------------------------------------------------------------
def _gru_encoder_kernel(x_ref, wih0_ref, whh0_ref, bc0_ref, bn0_ref,
                        wih1_ref, whh1_ref, bc1_ref, bn1_ref,
                        out_ref, hseq0_ref, *, T, B, H):
    H2 = 2 * H
    H3 = 3 * H

    def gru_gates(gi_t, gh, h_prev, bn):
        # gi_t already contains b_ih (all gates) + b_hh (r, z gates). bn = b_hh_n.
        r = jax.nn.sigmoid(gi_t[:, 0:H] + gh[:, 0:H])
        z = jax.nn.sigmoid(gi_t[:, H:H2] + gh[:, H:H2])
        n = jnp.tanh(gi_t[:, H2:H3] + r * (gh[:, H2:H3] + bn))
        return (1.0 - z) * n + z * h_prev

    def run_layer(gi_f, gi_b, whh_ref, bn_ref, write_seq):
        """Run fwd+bwd recurrences over T steps. Returns (h_fwd_final, h_bwd_final)."""
        whh_f = whh_ref[0]          # (H, 3H), loop-invariant
        whh_b = whh_ref[1]
        bn_f = bn_ref[0:1, :]       # (1, H)
        bn_b = bn_ref[1:2, :]
        h_f = jnp.zeros((B, H), jnp.float32)
        h_b = jnp.zeros((B, H), jnp.float32)
        for i in range(T):          # static unroll: all slice indices are compile-time constants
            tf = i                  # forward direction walks t = 0 .. T-1
            tb = T - 1 - i          # backward direction walks t = T-1 .. 0 (no flips needed)
            gh_f = jnp.dot(h_f, whh_f, preferred_element_type=jnp.float32)
            h_f = gru_gates(gi_f[tf * B:(tf + 1) * B, :], gh_f, h_f, bn_f)
            gh_b = jnp.dot(h_b, whh_b, preferred_element_type=jnp.float32)
            h_b = gru_gates(gi_b[tb * B:(tb + 1) * B, :], gh_b, h_b, bn_b)
            if write_seq:
                # write directly into the concatenated (fwd | bwd) layer-output slab
                hseq0_ref[tf * B:(tf + 1) * B, 0:H] = h_f
                hseq0_ref[tb * B:(tb + 1) * B, H:H2] = h_b
        return h_f, h_b

    # ---- layer 0: hoisted input projection (one matmul per direction over all T) ----
    x2d = x_ref[...]                                                    # (T*B, D_in)
    gi0f = jnp.dot(x2d, wih0_ref[0], preferred_element_type=jnp.float32) + bc0_ref[0:1, :]
    gi0b = jnp.dot(x2d, wih0_ref[1], preferred_element_type=jnp.float32) + bc0_ref[1:2, :]
    run_layer(gi0f, gi0b, whh0_ref, bn0_ref, write_seq=True)

    # ---- layer 1: input is layer-0's (T*B, 2H) slab, still resident in VMEM ----
    xin1 = hseq0_ref[...]                                               # (T*B, 2H)
    gi1f = jnp.dot(xin1, wih1_ref[0], preferred_element_type=jnp.float32) + bc1_ref[0:1, :]
    gi1b = jnp.dot(xin1, wih1_ref[1], preferred_element_type=jnp.float32) + bc1_ref[1:2, :]
    h_f1, h_b1 = run_layer(gi1f, gi1b, whh1_ref, bn1_ref, write_seq=False)

    # final output = cat(h_n[-2], h_n[-1]) = cat(layer1_fwd_final, layer1_bwd_final)
    out_ref[:, 0:H] = h_f1
    out_ref[:, H:H2] = h_b1


# ----------------------------------------------------------------------------
# Weight preparation (from PyTorch nn.GRU-convention parameters)
# ----------------------------------------------------------------------------
def _prep_direction(w_ih, w_hh, b_ih, b_hh):
    H = w_hh.shape[1]
    wih_t = jnp.transpose(w_ih)                                         # (D, 3H)
    whh_t = jnp.transpose(w_hh)                                         # (H, 3H)
    # folded bias: [b_ih_r + b_hh_r, b_ih_z + b_hh_z, b_ih_n]; keep b_hh_n separate.
    bc = jnp.concatenate([b_ih[:2 * H] + b_hh[:2 * H], b_ih[2 * H:]])   # (3H,)
    bn = b_hh[2 * H:]                                                   # (H,)
    return wih_t, whh_t, bc, bn


def _prep_layer(p):
    fwd = _prep_direction(p["w_ih_f"], p["w_hh_f"], p["b_ih_f"], p["b_hh_f"])
    bwd = _prep_direction(p["w_ih_b"], p["w_hh_b"], p["b_ih_b"], p["b_hh_b"])
    return tuple(jnp.stack([f, b]) for f, b in zip(fwd, bwd))           # each stacked on dir axis


# ----------------------------------------------------------------------------
# Public forward: equivalent of GRUEncoder.forward (eval mode), 2-layer bidirectional.
# ----------------------------------------------------------------------------
def gru_encoder_forward(x_btd, params):
    B, T, D = x_btd.shape
    H = params[0]["w_hh_f"].shape[1]

    # batch-first -> time-major, flattened to 2D (row = t*B + b). Tiny; done once in XLA.
    x2d = jnp.transpose(x_btd, (1, 0, 2)).reshape(T * B, D)

    wih0, whh0, bc0, bn0 = _prep_layer(params[0])
    wih1, whh1, bc1, bn1 = _prep_layer(params[1])

    kernel = functools.partial(_gru_encoder_kernel, T=T, B=B, H=H)
    out = pl.pallas_call(
        kernel,
        out_shape=jax.ShapeDtypeStruct((B, 2 * H), jnp.float32),
        # no grid: single invocation; all operands (a few tens of KiB) are placed whole in VMEM.
        scratch_shapes=[pltpu.VMEM((T * B, 2 * H), jnp.float32)],       # layer-0 hseq slab
    )(x2d, wih0, whh0, bc0, bn0, wih1, whh1, bc1, bn1)
    return out
    # TODO(synk): inter-layer dropout (p=0.4) applies only in training mode; eval forward omits it.


# ----------------------------------------------------------------------------
# Pure-JAX reference (for correctness check)
# ----------------------------------------------------------------------------
def _gru_cell_ref(x_t, h, w_ih, w_hh, b_ih, b_hh):
    H = w_hh.shape[1]
    gi = x_t @ w_ih.T + b_ih
    gh = h @ w_hh.T + b_hh
    r = jax.nn.sigmoid(gi[:, :H] + gh[:, :H])
    z = jax.nn.sigmoid(gi[:, H:2 * H] + gh[:, H:2 * H])
    n = jnp.tanh(gi[:, 2 * H:] + r * gh[:, 2 * H:])
    return (1.0 - z) * n + z * h


def _gru_dir_ref(x_tbd, w_ih, w_hh, b_ih, b_hh):
    B = x_tbd.shape[1]
    H = w_hh.shape[1]
    h0 = jnp.zeros((B, H), jnp.float32)

    def step(h, x_t):
        h_new = _gru_cell_ref(x_t, h, w_ih, w_hh, b_ih, b_hh)
        return h_new, h_new

    _, hseq = jax.lax.scan(step, h0, x_tbd)
    return hseq


def gru_encoder_ref(x_btd, params, *, num_layers=2, bidirectional=True):
    x = jnp.transpose(x_btd, (1, 0, 2))
    layer_in = x
    h_last_fwd = h_last_bwd = None
    for layer in range(num_layers):
        p = params[layer]
        hseq_f = _gru_dir_ref(layer_in, p["w_ih_f"], p["w_hh_f"], p["b_ih_f"], p["b_hh_f"])
        h_last_fwd = hseq_f[-1]
        if bidirectional:
            hseq_b_rev = _gru_dir_ref(jnp.flip(layer_in, axis=0),
                                      p["w_ih_b"], p["w_hh_b"], p["b_ih_b"], p["b_hh_b"])
            h_last_bwd = hseq_b_rev[-1]
            layer_in = jnp.concatenate([hseq_f, jnp.flip(hseq_b_rev, axis=0)], axis=-1)
        else:
            layer_in = hseq_f
    if bidirectional:
        return jnp.concatenate([h_last_fwd, h_last_bwd], axis=1)
    return h_last_fwd


# ----------------------------------------------------------------------------
# Deterministic parameter init (PyTorch nn.GRU shapes, uniform(-1/sqrt(H), 1/sqrt(H)))
# ----------------------------------------------------------------------------
def init_params(key, input_dim, hidden_dim, num_layers, bidirectional):
    params = []
    bound = 1.0 / (hidden_dim ** 0.5)
    dirs = ["f", "b"] if bidirectional else ["f"]
    for layer in range(num_layers):
        d_in = input_dim if layer == 0 else hidden_dim * (2 if bidirectional else 1)
        layer_p = {}
        for d in dirs:
            key, k1, k2, k3, k4 = jax.random.split(key, 5)
            layer_p[f"w_ih_{d}"] = jax.random.uniform(
                k1, (3 * hidden_dim, d_in), jnp.float32, -bound, bound)
            layer_p[f"w_hh_{d}"] = jax.random.uniform(
                k2, (3 * hidden_dim, hidden_dim), jnp.float32, -bound, bound)
            layer_p[f"b_ih_{d}"] = jax.random.uniform(
                k3, (3 * hidden_dim,), jnp.float32, -bound, bound)
            layer_p[f"b_hh_{d}"] = jax.random.uniform(
                k4, (3 * hidden_dim,), jnp.float32, -bound, bound)
        params.append(layer_p)
    return params


if __name__ == "__main__":
    # Small shapes consistent with GRUEncoder(input_dim=5, hidden_dim=..., num_layers=2, bidirectional=True)
    B, T, INPUT_DIM, HIDDEN_DIM, NUM_LAYERS = 2, 8, 5, 32, 2
    BIDIRECTIONAL = True

    key = jax.random.PRNGKey(0)
    key, xk = jax.random.split(key)
    x = jax.random.normal(xk, (B, T, INPUT_DIM), jnp.float32)   # batch-first, like PyTorch

    params = init_params(key, INPUT_DIM, HIDDEN_DIM, NUM_LAYERS, BIDIRECTIONAL)

    out = jax.block_until_ready(gru_encoder_forward(x, params))
    ref = jax.block_until_ready(
        gru_encoder_ref(x, params, num_layers=NUM_LAYERS, bidirectional=BIDIRECTIONAL))

    assert out.shape == (B, HIDDEN_DIM * 2), out.shape
    assert jnp.allclose(out, ref, atol=1e-4, rtol=1e-4), float(jnp.max(jnp.abs(out - ref)))

    print("KERNEL_OK")
</pallas_src>

<mosaic_0001>
module attributes {stable_mosaic.version = 11 : i64} {
  func.func @_gru_encoder_kernel(%arg0: memref<16x5xf32, #tpu.memory_space<vmem>>, %arg1: memref<2x5x96xf32, #tpu.memory_space<vmem>>, %arg2: memref<2x32x96xf32, #tpu.memory_space<vmem>>, %arg3: memref<2x96xf32, #tpu.memory_space<vmem>>, %arg4: memref<2x32xf32, #tpu.memory_space<vmem>>, %arg5: memref<2x64x96xf32, #tpu.memory_space<vmem>>, %arg6: memref<2x32x96xf32, #tpu.memory_space<vmem>>, %arg7: memref<2x96xf32, #tpu.memory_space<vmem>>, %arg8: memref<2x32xf32, #tpu.memory_space<vmem>>, %arg9: memref<2x64xf32, #tpu.memory_space<vmem>>, %arg10: memref<16x64xf32, #tpu.memory_space<vmem>>) attributes {dimension_semantics = [], scalar_prefetch = 0 : i64, scratch_operands = 1 : i64, tpu.core_type = #tpu.core_type<tc>} {
    %c0 = arith.constant 0 : index
    %c0_0 = arith.constant 0 : index
    %0 = vector.load %arg0[%c0, %c0_0] : memref<16x5xf32, #tpu.memory_space<vmem>>, vector<16x5xf32>
    %c0_1 = arith.constant 0 : index
    %c0_2 = arith.constant 0 : index
    %c0_3 = arith.constant 0 : index
    %1 = vector.load %arg1[%c0_1, %c0_2, %c0_3] : memref<2x5x96xf32, #tpu.memory_space<vmem>>, vector<1x5x96xf32>
    %2 = vector.shape_cast %1 : vector<1x5x96xf32> to vector<5x96xf32>
    %cst = arith.constant dense<0.000000e+00> : vector<16x96xf32>
    %3 = tpu.matmul %0, %2, %cst {dimension_numbers = #tpu.dot_dimension_numbers<[1], [0], [0], [1], [0, 0, 1, 1], [], []>} : vector<16x5xf32>, vector<5x96xf32>, vector<16x96xf32> -> vector<16x96xf32>
    %c0_4 = arith.constant 0 : index
    %c0_5 = arith.constant 0 : index
    %4 = vector.load %arg3[%c0_4, %c0_5] : memref<2x96xf32, #tpu.memory_space<vmem>>, vector<1x96xf32>
    %5 = vector.broadcast %4 : vector<1x96xf32> to vector<16x96xf32>
    %6 = arith.addf %3, %5 : vector<16x96xf32>
    %c1 = arith.constant 1 : index
    %c0_6 = arith.constant 0 : index
    %c0_7 = arith.constant 0 : index
    %7 = vector.load %arg1[%c1, %c0_6, %c0_7] : memref<2x5x96xf32, #tpu.memory_space<vmem>>, vector<1x5x96xf32>
    %8 = vector.shape_cast %7 : vector<1x5x96xf32> to vector<5x96xf32>
    %cst_8 = arith.constant dense<0.000000e+00> : vector<16x96xf32>
    %9 = tpu.matmul %0, %8, %cst_8 {dimension_numbers = #tpu.dot_dimension_numbers<[1], [0], [0], [1], [0, 0, 1, 1], [], []>} : vector<16x5xf32>, vector<5x96xf32>, vector<16x96xf32> -> vector<16x96xf32>
    %c1_9 = arith.constant 1 : index
    %c0_10 = arith.constant 0 : index
    %10 = vector.load %arg3[%c1_9, %c0_10] : memref<2x96xf32, #tpu.memory_space<vmem>>, vector<1x96xf32>
    %11 = vector.broadcast %10 : vector<1x96xf32> to vector<16x96xf32>
    %12 = arith.addf %9, %11 : vector<16x96xf32>
    %c0_11 = arith.constant 0 : index
    %c0_12 = arith.constant 0 : index
    %c0_13 = arith.constant 0 : index
    %13 = vector.load %arg2[%c0_11, %c0_12, %c0_13] : memref<2x32x96xf32, #tpu.memory_space<vmem>>, vector<1x32x96xf32>
    %14 = vector.shape_cast %13 : vector<1x32x96xf32> to vector<32x96xf32>
    %c1_14 = arith.constant 1 : index
    %c0_15 = arith.constant 0 : index
    %c0_16 = arith.constant 0 : index
    %15 = vector.load %arg2[%c1_14, %c0_15, %c0_16] : memref<2x32x96xf32, #tpu.memory_space<vmem>>, vector<1x32x96xf32>
    %16 = vector.shape_cast %15 : vector<1x32x96xf32> to vector<32x96xf32>
    %c0_17 = arith.constant 0 : index
    %c0_18 = arith.constant 0 : index
    %17 = vector.load %arg4[%c0_17, %c0_18] : memref<2x32xf32, #tpu.memory_space<vmem>>, vector<1x32xf32>
    %c1_19 = arith.constant 1 : index
    %c0_20 = arith.constant 0 : index
    %18 = vector.load %arg4[%c1_19, %c0_20] : memref<2x32xf32, #tpu.memory_space<vmem>>, vector<1x32xf32>
    %cst_21 = arith.constant 0.000000e+00 : f32
    %19 = vector.broadcast %cst_21 : f32 to vector<2x32xf32>
    %cst_22 = arith.constant 0.000000e+00 : f32
    %20 = vector.broadcast %cst_22 : f32 to vector<2x32xf32>
    %cst_23 = arith.constant dense<0.000000e+00> : vector<2x96xf32>
    %21 = tpu.matmul %19, %14, %cst_23 {dimension_numbers = #tpu.dot_dimension_numbers<[1], [0], [0], [1], [0, 0, 1, 1], [], []>} : vector<2x32xf32>, vector<32x96xf32>, vector<2x96xf32> -> vector<2x96xf32>
    %22 = vector.extract_strided_slice %6 {offsets = [0, 0], sizes = [2, 96], strides = [1, 1]} : vector<16x96xf32> to vector<2x96xf32>
    %23 = vector.extract_strided_slice %22 {offsets = [0, 0], sizes = [2, 32], strides = [1, 1]} : vector<2x96xf32> to vector<2x32xf32>
    %24 = vector.extract_strided_slice %21 {offsets = [0, 0], sizes = [2, 32], strides = [1, 1]} : vector<2x96xf32> to vector<2x32xf32>
    %25 = arith.addf %23, %24 : vector<2x32xf32>
    %26 = arith.negf %25 : vector<2x32xf32>
    %27 = math.exp %26 : vector<2x32xf32>
    %cst_24 = arith.constant 1.000000e+00 : f32
    %28 = vector.broadcast %cst_24 : f32 to vector<2x32xf32>
    %29 = arith.addf %28, %27 : vector<2x32xf32>
    %30 = arith.divf %28, %29 : vector<2x32xf32>
    %31 = vector.extract_strided_slice %22 {offsets = [0, 32], sizes = [2, 32], strides = [1, 1]} : vector<2x96xf32> to vector<2x32xf32>
    %32 = vector.extract_strided_slice %21 {offsets = [0, 32], sizes = [2, 32], strides = [1, 1]} : vector<2x96xf32> to vector<2x32xf32>
    %33 = arith.addf %31, %32 : vector<2x32xf32>
    %34 = arith.negf %33 : vector<2x32xf32>
    %35 = math.exp %34 : vector<2x32xf32>
    %cst_25 = arith.constant 1.000000e+00 : f32
    %36 = vector.broadcast %cst_25 : f32 to vector<2x32xf32>
    %37 = arith.addf %36, %35 : vector<2x32xf32>
    %38 = arith.divf %36, %37 : vector<2x32xf32>
    %39 = vector.extract_strided_slice %22 {offsets = [0, 64], sizes = [2, 32], strides = [1, 1]} : vector<2x96xf32> to vector<2x32xf32>
    %40 = vector.extract_strided_slice %21 {offsets = [0, 64], sizes = [2, 32], strides = [1, 1]} : vector<2x96xf32> to vector<2x32xf32>
    %41 = vector.broadcast %17 : vector<1x32xf32> to vector<2x32xf32>
    %42 = arith.addf %40, %41 : vector<2x32xf32>
    %43 = arith.mulf %30, %42 : vector<2x32xf32>
    %44 = arith.addf %39, %43 : vector<2x32xf32>
    %45 = math.tanh %44 : vector<2x32xf32>
    %cst_26 = arith.constant 1.000000e+00 : f32
    %46 = vector.broadcast %cst_26 : f32 to vector<2x32xf32>
    %47 = arith.subf %46, %38 : vector<2x32xf32>
    %48 = arith.mulf %47, %45 : vector<2x32xf32>
    %49 = arith.mulf %38, %19 : vector<2x32xf32>
    %50 = arith.addf %48, %49 : vector<2x32xf32>
    %cst_27 = arith.constant dense<0.000000e+00> : vector<2x96xf32>
    %51 = tpu.matmul %20, %16, %cst_27 {dimension_numbers = #tpu.dot_dimension_numbers<[1], [0], [0], [1], [0, 0, 1, 1], [], []>} : vector<2x32xf32>, vector<32x96xf32>, vector<2x96xf32> -> vector<2x96xf32>
    %52 = vector.extract_strided_slice %12 {offsets = [14, 0], sizes = [2, 96], strides = [1, 1]} : vector<16x96xf32> to vector<2x96xf32>
    %53 = vector.extract_strided_slice %52 {offsets = [0, 0], sizes = [2, 32], strides = [1, 1]} : vector<2x96xf32> to vector<2x32xf32>
    %54 = vector.extract_strided_slice %51 {offsets = [0, 0], sizes = [2, 32], strides = [1, 1]} : vector<2x96xf32> to vector<2x32xf32>
    %55 = arith.addf %53, %54 : vector<2x32xf32>
    %56 = arith.negf %55 : vector<2x32xf32>
    %57 = math.exp %56 : vector<2x32xf32>
    %cst_28 = arith.constant 1.000000e+00 : f32
    %58 = vector.broadcast %cst_28 : f32 to vector<2x32xf32>
    %59 = arith.addf %58, %57 : vector<2x32xf32>
    %60 = arith.divf %58, %59 : vector<2x32xf32>
    %61 = vector.extract_strided_slice %52 {offsets = [0, 32], sizes = [2, 32], strides = [1, 1]} : vector<2x96xf32> to vector<2x32xf32>
    %62 = vector.extract_strided_slice %51 {offsets = [0, 32], sizes = [2, 32], strides = [1, 1]} : vector<2x96xf32> to vector<2x32xf32>
    %63 = arith.addf %61, %62 : vector<2x32xf32>
    %64 = arith.negf %63 : vector<2x32xf32>
    %65 = math.exp %64 : vector<2x32xf32>
    %cst_29 = arith.constant 1.000000e+00 : f32
    %66 = vector.broadcast %cst_29 : f32 to vector<2x32xf32>
    %67 = arith.addf %66, %65 : vector<2x32xf32>
    %68 = arith.divf %66, %67 : vector<2x32xf32>
    %69 = vector.extract_strided_slice %52 {offsets = [0, 64], sizes = [2, 32], strides = [1, 1]} : vector<2x96xf32> to vector<2x32xf32>
    %70 = vector.extract_strided_slice %51 {offsets = [0, 64], sizes = [2, 32], strides = [1, 1]} : vector<2x96xf32> to vector<2x32xf32>
    %71 = vector.broadcast %18 : vector<1x32xf32> to vector<2x32xf32>
    %72 = arith.addf %70, %71 : vector<2x32xf32>
    %73 = arith.mulf %60, %72 : vector<2x32xf32>
    %74 = arith.addf %69, %73 : vector<2x32xf32>
    %75 = math.tanh %74 : vector<2x32xf32>
    %cst_30 = arith.constant 1.000000e+00 : f32
    %76 = vector.broadcast %cst_30 : f32 to vector<2x32xf32>
    %77 = arith.subf %76, %68 : vector<2x32xf32>
    %78 = arith.mulf %77, %75 : vector<2x32xf32>
    %79 = arith.mulf %68, %20 : vector<2x32xf32>
    %80 = arith.addf %78, %79 : vector<2x32xf32>
    %c0_31 = arith.constant 0 : index
    %c0_32 = arith.constant 0 : index
    %81 = vector.load %arg10[%c0_31, %c0_32] : memref<16x64xf32, #tpu.memory_space<vmem>>, vector<2x32xf32>
    tpu.vector_store %arg10[%c0_31, %c0_32], %50 {strides = array<i32>} : memref<16x64xf32, #tpu.memory_space<vmem>>, vector<2x32xf32>,
    %c14 = arith.constant 14 : index
    %c32 = arith.constant 32 : index
    %82 = vector.load %arg10[%c14, %c32] : memref<16x64xf32, #tpu.memory_space<vmem>>, vector<2x32xf32>
    tpu.vector_store %arg10[%c14, %c32], %80 {strides = array<i32>} : memref<16x64xf32, #tpu.memory_space<vmem>>, vector<2x32xf32>,
    %cst_33 = arith.constant dense<0.000000e+00> : vector<2x96xf32>
    %83 = tpu.matmul %50, %14, %cst_33 {dimension_numbers = #tpu.dot_dimension_numbers<[1], [0], [0], [1], [0, 0, 1, 1], [], []>} : vector<2x32xf32>, vector<32x96xf32>, vector<2x96xf32> -> vector<2x96xf32>
    %84 = vector.extract_strided_slice %6 {offsets = [2, 0], sizes = [2, 96], strides = [1, 1]} : vector<16x96xf32> to vector<2x96xf32>
    %85 = vector.extract_strided_slice %84 {offsets = [0, 0], sizes = [2, 32], strides = [1, 1]} : vector<2x96xf32> to vector<2x32xf32>
    %86 = vector.extract_strided_slice %83 {offsets = [0, 0], sizes = [2, 32], strides = [1, 1]} : vector<2x96xf32> to vector<2x32xf32>
    %87 = arith.addf %85, %86 : vector<2x32xf32>
    %88 = arith.negf %87 : vector<2x32xf32>
    %89 = math.exp %88 : vector<2x32xf32>
    %cst_34 = arith.constant 1.000000e+00 : f32
    %90 = vector.broadcast %cst_34 : f32 to vector<2x32xf32>
    %91 = arith.addf %90, %89 : vector<2x32xf32>
    %92 = arith.divf %90, %91 : vector<2x32xf32>
    %93 = vector.extract_strided_slice %84 {offsets = [0, 32], sizes = [2, 32], strides = [1, 1]} : vector<2x96xf32> to vector<2x32xf32>
    %94 = vector.extract_strided_slice %83 {offsets = [0, 32], sizes = [2, 32], strides = [1, 1]} : vector<2x96xf32> to vector<2x32xf32>
    %95 = arith.addf %93, %94 : vector<2x32xf32>
    %96 = arith.negf %95 : vector<2x32xf32>
    %97 = math.exp %96 : vector<2x32xf32>
    %cst_35 = arith.constant 1.000000e+00 : f32
    %98 = vector.broadcast %cst_35 : f32 to vector<2x32xf32>
    %99 = arith.addf %98, %97 : vector<2x32xf32>
    %100 = arith.divf %98, %99 : vector<2x32xf32>
    %101 = vector.extract_strided_slice %84 {offsets = [0, 64], sizes = [2, 32], strides = [1, 1]} : vector<2x96xf32> to vector<2x32xf32>
    %102 = vector.extract_strided_slice %83 {offsets = [0, 64], sizes = [2, 32], strides = [1, 1]} : vector<2x96xf32> to vector<2x32xf32>
    %103 = vector.broadcast %17 : vector<1x32xf32> to vector<2x32xf32>
    %104 = arith.addf %102, %103 : vector<2x32xf32>
    %105 = arith.mulf %92, %104 : vector<2x32xf32>
    %106 = arith.addf %101, %105 : vector<2x32xf32>
    %107 = math.tanh %106 : vector<2x32xf32>
    %cst_36 = arith.constant 1.000000e+00 : f32
    %108 = vector.broadcast %cst_36 : f32 to vector<2x32xf32>
    %109 = arith.subf %108, %100 : vector<2x32xf32>
    %110 = arith.mulf %109, %107 : vector<2x32xf32>
    %111 = arith.mulf %100, %50 : vector<2x32xf32>
    %112 = arith.addf %110, %111 : vector<2x32xf32>
    %cst_37 = arith.constant dense<0.000000e+00> : vector<2x96xf32>
    %113 = tpu.matmul %80, %16, %cst_37 {dimension_numbers = #tpu.dot_dimension_numbers<[1], [0], [0], [1], [0, 0, 1, 1], [], []>} : vector<2x32xf32>, vector<32x96xf32>, vector<2x96xf32> -> vector<2x96xf32>
    %114 = vector.extract_strided_slice %12 {offsets = [12, 0], sizes = [2, 96], strides = [1, 1]} : vector<16x96xf32> to vector<2x96xf32>
    %115 = vector.extract_strided_slice %114 {offsets = [0, 0], sizes = [2, 32], strides = [1, 1]} : vector<2x96xf32> to vector<2x32xf32>
    %116 = vector.extract_strided_slice %113 {offsets = [0, 0], sizes = [2, 32], strides = [1, 1]} : vector<2x96xf32> to vector<2x32xf32>
    %117 = arith.addf %115, %116 : vector<2x32xf32>
    %118 = arith.negf %117 : vector<2x32xf32>
    %119 = math.exp %118 : vector<2x32xf32>
    %cst_38 = arith.constant 1.000000e+00 : f32
    %120 = vector.broadcast %cst_38 : f32 to vector<2x32xf32>
    %121 = arith.addf %120, %119 : vector<2x32xf32>
    %122 = arith.divf %120, %121 : vector<2x32xf32>
    %123 = vector.extract_strided_slice %114 {offsets = [0, 32], sizes = [2, 32], strides = [1, 1]} : vector<2x96xf32> to vector<2x32xf32>
    %124 = vector.extract_strided_slice %113 {offsets = [0, 32], sizes = [2, 32], strides = [1, 1]} : vector<2x96xf32> to vector<2x32xf32>
    %125 = arith.addf %123, %124 : vector<2x32xf32>
    %126 = arith.negf %125 : vector<2x32xf32>
    %127 = math.exp %126 : vector<2x32xf32>
    %cst_39 = arith.constant 1.000000e+00 : f32
    %128 = vector.broadcast %cst_39 : f32 to vector<2x32xf32>
    %129 = arith.addf %128, %127 : vector<2x32xf32>
    %130 = arith.divf %128, %129 : vector<2x32xf32>
    %131 = vector.extract_strided_slice %114 {offsets = [0, 64], sizes = [2, 32], strides = [1, 1]} : vector<2x96xf32> to vector<2x32xf32>
    %132 = vector.extract_strided_slice %113 {offsets = [0, 64], sizes = [2, 32], strides = [1, 1]} : vector<2x96xf32> to vector<2x32xf32>
    %133 = vector.broadcast %18 : vector<1x32xf32> to vector<2x32xf32>
    %134 = arith.addf %132, %133 : vector<2x32xf32>
    %135 = arith.mulf %122, %134 : vector<2x32xf32>
    %136 = arith.addf %131, %135 : vector<2x32xf32>
    %137 = math.tanh %136 : vector<2x32xf32>
    %cst_40 = arith.constant 1.000000e+00 : f32
    %138 = vector.broadcast %cst_40 : f32 to vector<2x32xf32>
    %139 = arith.subf %138, %130 : vector<2x32xf32>
    %140 = arith.mulf %139, %137 : vector<2x32xf32>
    %141 = arith.mulf %130, %80 : vector<2x32xf32>
    %142 = arith.addf %140, %141 : vector<2x32xf32>
    %c2 = arith.constant 2 : index
    %c0_41 = arith.constant 0 : index
    %143 = vector.load %arg10[%c2, %c0_41] : memref<16x64xf32, #tpu.memory_space<vmem>>, vector<2x32xf32>
    tpu.vector_store %arg10[%c2, %c0_41], %112 {strides = array<i32>} : memref<16x64xf32, #tpu.memory_space<vmem>>, vector<2x32xf32>,
    %c12 = arith.constant 12 : index
    %c32_42 = arith.constant 32 : index
    %144 = vector.load %arg10[%c12, %c32_42] : memref<16x64xf32, #tpu.memory_space<vmem>>, vector<2x32xf32>
    tpu.vector_store %arg10[%c12, %c32_42], %142 {strides = array<i32>} : memref<16x64xf32, #tpu.memory_space<vmem>>, vector<2x32xf32>,
    %cst_43 = arith.constant dense<0.000000e+00> : vector<2x96xf32>
    %145 = tpu.matmul %112, %14, %cst_43 {dimension_numbers = #tpu.dot_dimension_numbers<[1], [0], [0], [1], [0, 0, 1, 1], [], []>} : vector<2x32xf32>, vector<32x96xf32>, vector<2x96xf32> -> vector<2x96xf32>
    %146 = vector.extract_strided_slice %6 {offsets = [4, 0], sizes = [2, 96], strides = [1, 1]} : vector<16x96xf32> to vector<2x96xf32>
    %147 = vector.extract_strided_slice %146 {offsets = [0, 0], sizes = [2, 32], strides = [1, 1]} : vector<2x96xf32> to vector<2x32xf32>
    %148 = vector.extract_strided_slice %145 {offsets = [0, 0], sizes = [2, 32], strides = [1, 1]} : vector<2x96xf32> to vector<2x32xf32>
    %149 = arith.addf %147, %148 : vector<2x32xf32>
    %150 = arith.negf %149 : vector<2x32xf32>
    %151 = math.exp %150 : vector<2x32xf32>
    %cst_44 = arith.constant 1.000000e+00 : f32
    %152 = vector.broadcast %cst_44 : f32 to vector<2x32xf32>
    %153 = arith.addf %152, %151 : vector<2x32xf32>
    %154 = arith.divf %152, %153 : vector<2x32xf32>
    %155 = vector.extract_strided_slice %146 {offsets = [0, 32], sizes = [2, 32], strides = [1, 1]} : vector<2x96xf32> to vector<2x32xf32>
    %156 = vector.extract_strided_slice %145 {offsets = [0, 32], sizes = [2, 32], strides = [1, 1]} : vector<2x96xf32> to vector<2x32xf32>
    %157 = arith.addf %155, %156 : vector<2x32xf32>
    %158 = arith.negf %157 : vector<2x32xf32>
    %159 = math.exp %158 : vector<2x32xf32>
    %cst_45 = arith.constant 1.000000e+00 : f32
    %160 = vector.broadcast %cst_45 : f32 to vector<2x32xf32>
    %161 = arith.addf %160, %159 : vector<2x32xf32>
    %162 = arith.divf %160, %161 : vector<2x32xf32>
    %163 = vector.extract_strided_slice %146 {offsets = [0, 64], sizes = [2, 32], strides = [1, 1]} : vector<2x96xf32> to vector<2x32xf32>
    %164 = vector.extract_strided_slice %145 {offsets = [0, 64], sizes = [2, 32], strides = [1, 1]} : vector<2x96xf32> to vector<2x32xf32>
    %165 = vector.broadcast %17 : vector<1x32xf32> to vector<2x32xf32>
    %166 = arith.addf %164, %165 : vector<2x32xf32>
    %167 = arith.mulf %154, %166 : vector<2x32xf32>
    %168 = arith.addf %163, %167 : vector<2x32xf32>
    %169 = math.tanh %168 : vector<2x32xf32>
    %cst_46 = arith.constant 1.000000e+00 : f32
    %170 = vector.broadcast %cst_46 : f32 to vector<2x32xf32>
    %171 = arith.subf %170, %162 : vector<2x32xf32>
    %172 = arith.mulf %171, %169 : vector<2x32xf32>
    %173 = arith.mulf %162, %112 : vector<2x32xf32>
    %174 = arith.addf %172, %173 : vector<2x32xf32>
    %cst_47 = arith.constant dense<0.000000e+00> : vector<2x96xf32>
    %175 = tpu.matmul %142, %16, %cst_47 {dimension_numbers = #tpu.dot_dimension_numbers<[1], [0], [0], [1], [0, 0, 1, 1], [], []>} : vector<2x32xf32>, vector<32x96xf32>, vector<2x96xf32> -> vector<2x96xf32>
    %176 = vector.extract_strided_slice %12 {offsets = [10, 0], sizes = [2, 96], strides = [1, 1]} : vector<16x96xf32> to vector<2x96xf32>
    %177 = vector.extract_strided_slice %176 {offsets = [0, 0], sizes = [2, 32], strides = [1, 1]} : vector<2x96xf32> to vector<2x32xf32>
    %178 = vector.extract_strided_slice %175 {offsets = [0, 0], sizes = [2, 32], strides = [1, 1]} : vector<2x96xf32> to vector<2x32xf32>
    %179 = arith.addf %177, %178 : vector<2x32xf32>
    %180 = arith.negf %179 : vector<2x32xf32>
    %181 = math.exp %180 : vector<2x32xf32>
    %cst_48 = arith.constant 1.000000e+00 : f32
    %182 = vector.broadcast %cst_48 : f32 to vector<2x32xf32>
    %183 = arith.addf %182, %181 : vector<2x32xf32>
    %184 = arith.divf %182, %183 : vector<2x32xf32>
    %185 = vector.extract_strided_slice %176 {offsets = [0, 32], sizes = [2, 32], strides = [1, 1]} : vector<2x96xf32> to vector<2x32xf32>
    %186 = vector.extract_strided_slice %175 {offsets = [0, 32], sizes = [2, 32], strides = [1, 1]} : vector<2x96xf32> to vector<2x32xf32>
    %187 = arith.addf %185, %186 : vector<2x32xf32>
    %188 = arith.negf %187 : vector<2x32xf32>
    %189 = math.exp %188 : vector<2x32xf32>
    %cst_49 = arith.constant 1.000000e+00 : f32
    %190 = vector.broadcast %cst_49 : f32 to vector<2x32xf32>
    %191 = arith.addf %190, %189 : vector<2x32xf32>
    %192 = arith.divf %190, %191 : vector<2x32xf32>
    %193 = vector.extract_strided_slice %176 {offsets = [0, 64], sizes = [2, 32], strides = [1, 1]} : vector<2x96xf32> to vector<2x32xf32>
    %194 = vector.extract_strided_slice %175 {offsets = [0, 64], sizes = [2, 32], strides = [1, 1]} : vector<2x96xf32> to vector<2x32xf32>
    %195 = vector.broadcast %18 : vector<1x32xf32> to vector<2x32xf32>
    %196 = arith.addf %194, %195 : vector<2x32xf32>
    %197 = arith.mulf %184, %196 : vector<2x32xf32>
    %198 = arith.addf %193, %197 : vector<2x32xf32>
    %199 = math.tanh %198 : vector<2x32xf32>
    %cst_50 = arith.constant 1.000000e+00 : f32
    %200 = vector.broadcast %cst_50 : f32 to vector<2x32xf32>
    %201 = arith.subf %200, %192 : vector<2x32xf32>
    %202 = arith.mulf %201, %199 : vector<2x32xf32>
    %203 = arith.mulf %192, %142 : vector<2x32xf32>
    %204 = arith.addf %202, %203 : vector<2x32xf32>
    %c4 = arith.constant 4 : index
    %c0_51 = arith.constant 0 : index
    %205 = vector.load %arg10[%c4, %c0_51] : memref<16x64xf32, #tpu.memory_space<vmem>>, vector<2x32xf32>
    tpu.vector_store %arg10[%c4, %c0_51], %174 {strides = array<i32>} : memref<16x64xf32, #tpu.memory_space<vmem>>, vector<2x32xf32>,
    %c10 = arith.constant 10 : index
    %c32_52 = arith.constant 32 : index
    %206 = vector.load %arg10[%c10, %c32_52] : memref<16x64xf32, #tpu.memory_space<vmem>>, vector<2x32xf32>
    tpu.vector_store %arg10[%c10, %c32_52], %204 {strides = array<i32>} : memref<16x64xf32, #tpu.memory_space<vmem>>, vector<2x32xf32>,
    %cst_53 = arith.constant dense<0.000000e+00> : vector<2x96xf32>
    %207 = tpu.matmul %174, %14, %cst_53 {dimension_numbers = #tpu.dot_dimension_numbers<[1], [0], [0], [1], [0, 0, 1, 1], [], []>} : vector<2x32xf32>, vector<32x96xf32>, vector<2x96xf32> -> vector<2x96xf32>
    %208 = vector.extract_strided_slice %6 {offsets = [6, 0], sizes = [2, 96], strides = [1, 1]} : vector<16x96xf32> to vector<2x96xf32>
    %209 = vector.extract_strided_slice %208 {offsets = [0, 0], sizes = [2, 32], strides = [1, 1]} : vector<2x96xf32> to vector<2x32xf32>
    %210 = vector.extract_strided_slice %207 {offsets = [0, 0], sizes = [2, 32], strides = [1, 1]} : vector<2x96xf32> to vector<2x32xf32>
    %211 = arith.addf %209, %210 : vector<2x32xf32>
    %212 = arith.negf %211 : vector<2x32xf32>
    %213 = math.exp %212 : vector<2x32xf32>
    %cst_54 = arith.constant 1.000000e+00 : f32
    %214 = vector.broadcast %cst_54 : f32 to vector<2x32xf32>
    %215 = arith.addf %214, %213 : vector<2x32xf32>
    %216 = arith.divf %214, %215 : vector<2x32xf32>
    %217 = vector.extract_strided_slice %208 {offsets = [0, 32], sizes = [2, 32], strides = [1, 1]} : vector<2x96xf32> to vector<2x32xf32>
    %218 = vector.extract_strided_slice %207 {offsets = [0, 32], sizes = [2, 32], strides = [1, 1]} : vector<2x96xf32> to vector<2x32xf32>
    %219 = arith.addf %217, %218 : vector<2x32xf32>
    %220 = arith.negf %219 : vector<2x32xf32>
    %221 = math.exp %220 : vector<2x32xf32>
    %cst_55 = arith.constant 1.000000e+00 : f32
    %222 = vector.broadcast %cst_55 : f32 to vector<2x32xf32>
    %223 = arith.addf %222, %221 : vector<2x32xf32>
    %224 = arith.divf %222, %223 : vector<2x32xf32>
    %225 = vector.extract_strided_slice %208 {offsets = [0, 64], sizes = [2, 32], strides = [1, 1]} : vector<2x96xf32> to vector<2x32xf32>
    %226 = vector.extract_strided_slice %207 {offsets = [0, 64], sizes = [2, 32], strides = [1, 1]} : vector<2x96xf32> to vector<2x32xf32>
    %227 = vector.broadcast %17 : vector<1x32xf32> to vector<2x32xf32>
    %228 = arith.addf %226, %227 : vector<2x32xf32>
    %229 = arith.mulf %216, %228 : vector<2x32xf32>
    %230 = arith.addf %225, %229 : vector<2x32xf32>
    %231 = math.tanh %230 : vector<2x32xf32>
    %cst_56 = arith.constant 1.000000e+00 : f32
    %232 = vector.broadcast %cst_56 : f32 to vector<2x32xf32>
    %233 = arith.subf %232, %224 : vector<2x32xf32>
    %234 = arith.mulf %233, %231 : vector<2x32xf32>
    %235 = arith.mulf %224, %174 : vector<2x32xf32>
    %236 = arith.addf %234, %235 : vector<2x32xf32>
    %cst_57 = arith.constant dense<0.000000e+00> : vector<2x96xf32>
    %237 = tpu.matmul %204, %16, %cst_57 {dimension_numbers = #tpu.dot_dimension_numbers<[1], [0], [0], [1], [0, 0, 1, 1], [], []>} : vector<2x32xf32>, vector<32x96xf32>, vector<2x96xf32> -> vector<2x96xf32>
    %238 = vector.extract_strided_slice %12 {offsets = [8, 0], sizes = [2, 96], strides = [1, 1]} : vector<16x96xf32> to vector<2x96xf32>
    %239 = vector.extract_strided_slice %238 {offsets = [0, 0], sizes = [2, 32], strides = [1, 1]} : vector<2x96xf32> to vector<2x32xf32>
    %240 = vector.extract_strided_slice %237 {offsets = [0, 0], sizes = [2, 32], strides = [1, 1]} : vector<2x96xf32> to vector<2x32xf32>
    %241 = arith.addf %239, %240 : vector<2x32xf32>
    %242 = arith.negf %241 : vector<2x32xf32>
    %243 = math.exp %242 : vector<2x32xf32>
    %cst_58 = arith.constant 1.000000e+00 : f32
    %244 = vector.broadcast %cst_58 : f32 to vector<2x32xf32>
    %245 = arith.addf %244, %243 : vector<2x32xf32>
    %246 = arith.divf %244, %245 : vector<2x32xf32>
    %247 = vector.extract_strided_slice %238 {offsets = [0, 32], sizes = [2, 32], strides = [1, 1]} : vector<2x96xf32> to vector<2x32xf32>
    %248 = vector.extract_strided_slice %237 {offsets = [0, 32], sizes = [2, 32], strides = [1, 1]} : vector<2x96xf32> to vector<2x32xf32>
    %249 = arith.addf %247, %248 : vector<2x32xf32>
    %250 = arith.negf %249 : vector<2x32xf32>
    %251 = math.exp %250 : vector<2x32xf32>
    %cst_59 = arith.constant 1.000000e+00 : f32
    %252 = vector.broadcast %cst_59 : f32 to vector<2x32xf32>
    %253 = arith.addf %252, %251 : vector<2x32xf32>
    %254 = arith.divf %252, %253 : vector<2x32xf32>
    %255 = vector.extract_strided_slice %238 {offsets = [0, 64], sizes = [2, 32], strides = [1, 1]} : vector<2x96xf32> to vector<2x32xf32>
    %256 = vector.extract_strided_slice %237 {offsets = [0, 64], sizes = [2, 32], strides = [1, 1]} : vector<2x96xf32> to vector<2x32xf32>
    %257 = vector.broadcast %18 : vector<1x32xf32> to vector<2x32xf32>
    %258 = arith.addf %256, %257 : vector<2x32xf32>
    %259 = arith.mulf %246, %258 : vector<2x32xf32>
    %260 = arith.addf %255, %259 : vector<2x32xf32>
    %261 = math.tanh %260 : vector<2x32xf32>
    %cst_60 = arith.constant 1.000000e+00 : f32
    %262 = vector.broadcast %cst_60 : f32 to vector<2x32xf32>
    %263 = arith.subf %262, %254 : vector<2x32xf32>
    %264 = arith.mulf %263, %261 : vector<2x32xf32>
    %265 = arith.mulf %254, %204 : vector<2x32xf32>
    %266 = arith.addf %264, %265 : vector<2x32xf32>
    %c6 = arith.constant 6 : index
    %c0_61 = arith.constant 0 : index
    %267 = vector.load %arg10[%c6, %c0_61] : memref<16x64xf32, #tpu.memory_space<vmem>>, vector<2x32xf32>
    tpu.vector_store %arg10[%c6, %c0_61], %236 {strides = array<i32>} : memref<16x64xf32, #tpu.memory_space<vmem>>, vector<2x32xf32>,
    %c8 = arith.constant 8 : index
    %c32_62 = arith.constant 32 : index
    %268 = vector.load %arg10[%c8, %c32_62] : memref<16x64xf32, #tpu.memory_space<vmem>>, vector<2x32xf32>
    tpu.vector_store %arg10[%c8, %c32_62], %266 {strides = array<i32>} : memref<16x64xf32, #tpu.memory_space<vmem>>, vector<2x32xf32>,
    %cst_63 = arith.constant dense<0.000000e+00> : vector<2x96xf32>
    %269 = tpu.matmul %236, %14, %cst_63 {dimension_numbers = #tpu.dot_dimension_numbers<[1], [0], [0], [1], [0, 0, 1, 1], [], []>} : vector<2x32xf32>, vector<32x96xf32>, vector<2x96xf32> -> vector<2x96xf32>
    %270 = vector.extract_strided_slice %6 {offsets = [8, 0], sizes = [2, 96], strides = [1, 1]} : vector<16x96xf32> to vector<2x96xf32>
    %271 = vector.extract_strided_slice %270 {offsets = [0, 0], sizes = [2, 32], strides = [1, 1]} : vector<2x96xf32> to vector<2x32xf32>
    %272 = vector.extract_strided_slice %269 {offsets = [0, 0], sizes = [2, 32], strides = [1, 1]} : vector<2x96xf32> to vector<2x32xf32>
    %273 = arith.addf %271, %272 : vector<2x32xf32>
    %274 = arith.negf %273 : vector<2x32xf32>
    %275 = math.exp %274 : vector<2x32xf32>
    %cst_64 = arith.constant 1.000000e+00 : f32
    %276 = vector.broadcast %cst_64 : f32 to vector<2x32xf32>
    %277 = arith.addf %276, %275 : vector<2x32xf32>
    %278 = arith.divf %276, %277 : vector<2x32xf32>
    %279 = vector.extract_strided_slice %270 {offsets = [0, 32], sizes = [2, 32], strides = [1, 1]} : vector<2x96xf32> to vector<2x32xf32>
    %280 = vector.extract_strided_slice %269 {offsets = [0, 32], sizes = [2, 32], strides = [1, 1]} : vector<2x96xf32> to vector<2x32xf32>
    %281 = arith.addf %279, %280 : vector<2x32xf32>
    %282 = arith.negf %281 : vector<2x32xf32>
    %283 = math.exp %282 : vector<2x32xf32>
    %cst_65 = arith.constant 1.000000e+00 : f32
    %284 = vector.broadcast %cst_65 : f32 to vector<2x32xf32>
    %285 = arith.addf %284, %283 : vector<2x32xf32>
    %286 = arith.divf %284, %285 : vector<2x32xf32>
    %287 = vector.extract_strided_slice %270 {offsets = [0, 64], sizes = [2, 32], strides = [1, 1]} : vector<2x96xf32> to vector<2x32xf32>
    %288 = vector.extract_strided_slice %269 {offsets = [0, 64], sizes = [2, 32], strides = [1, 1]} : vector<2x96xf32> to vector<2x32xf32>
    %289 = vector.broadcast %17 : vector<1x32xf32> to vector<2x32xf32>
    %290 = arith.addf %288, %289 : vector<2x32xf32>
    %291 = arith.mulf %278, %290 : vector<2x32xf32>
    %292 = arith.addf %287, %291 : vector<2x32xf32>
    %293 = math.tanh %292 : vector<2x32xf32>
    %cst_66 = arith.constant 1.000000e+00 : f32
    %294 = vector.broadcast %cst_66 : f32 to vector<2x32xf32>
    %295 = arith.subf %294, %286 : vector<2x32xf32>
    %296 = arith.mulf %295, %293 : vector<2x32xf32>
    %297 = arith.mulf %286, %236 : vector<2x32xf32>
    %298 = arith.addf %296, %297 : vector<2x32xf32>
    %cst_67 = arith.constant dense<0.000000e+00> : vector<2x96xf32>
    %299 = tpu.matmul %266, %16, %cst_67 {dimension_numbers = #tpu.dot_dimension_numbers<[1], [0], [0], [1], [0, 0, 1, 1], [], []>} : vector<2x32xf32>, vector<32x96xf32>, vector<2x96xf32> -> vector<2x96xf32>
    %300 = vector.extract_strided_slice %12 {offsets = [6, 0], sizes = [2, 96], strides = [1, 1]} : vector<16x96xf32> to vector<2x96xf32>
    %301 = vector.extract_strided_slice %300 {offsets = [0, 0], sizes = [2, 32], strides = [1, 1]} : vector<2x96xf32> to vector<2x32xf32>
    %302 = vector.extract_strided_slice %299 {offsets = [0, 0], sizes = [2, 32], strides = [1, 1]} : vector<2x96xf32> to vector<2x32xf32>
    %303 = arith.addf %301, %302 : vector<2x32xf32>
    %304 = arith.negf %303 : vector<2x32xf32>
    %305 = math.exp %304 : vector<2x32xf32>
    %cst_68 = arith.constant 1.000000e+00 : f32
    %306 = vector.broadcast %cst_68 : f32 to vector<2x32xf32>
    %307 = arith.addf %306, %305 : vector<2x32xf32>
    %308 = arith.divf %306, %307 : vector<2x32xf32>
    %309 = vector.extract_strided_slice %300 {offsets = [0, 32], sizes = [2, 32], strides = [1, 1]} : vector<2x96xf32> to vector<2x32xf32>
    %310 = vector.extract_strided_slice %299 {offsets = [0, 32], sizes = [2, 32], strides = [1, 1]} : vector<2x96xf32> to vector<2x32xf32>
    %311 = arith.addf %309, %310 : vector<2x32xf32>
    %312 = arith.negf %311 : vector<2x32xf32>
    %313 = math.exp %312 : vector<2x32xf32>
    %cst_69 = arith.constant 1.000000e+00 : f32
    %314 = vector.broadcast %cst_69 : f32 to vector<2x32xf32>
    %315 = arith.addf %314, %313 : vector<2x32xf32>
    %316 = arith.divf %314, %315 : vector<2x32xf32>
    %317 = vector.extract_strided_slice %300 {offsets = [0, 64], sizes = [2, 32], strides = [1, 1]} : vector<2x96xf32> to vector<2x32xf32>
    %318 = vector.extract_strided_slice %299 {offsets = [0, 64], sizes = [2, 32], strides = [1, 1]} : vector<2x96xf32> to vector<2x32xf32>
    %319 = vector.broadcast %18 : vector<1x32xf32> to vector<2x32xf32>
    %320 = arith.addf %318, %319 : vector<2x32xf32>
    %321 = arith.mulf %308, %320 : vector<2x32xf32>
    %322 = arith.addf %317, %321 : vector<2x32xf32>
    %323 = math.tanh %322 : vector<2x32xf32>
    %cst_70 = arith.constant 1.000000e+00 : f32
    %324 = vector.broadcast %cst_70 : f32 to vector<2x32xf32>
    %325 = arith.subf %324, %316 : vector<2x32xf32>
    %326 = arith.mulf %325, %323 : vector<2x32xf32>
    %327 = arith.mulf %316, %266 : vector<2x32xf32>
    %328 = arith.addf %326, %327 : vector<2x32xf32>
    %c8_71 = arith.constant 8 : index
    %c0_72 = arith.constant 0 : index
    %329 = vector.load %arg10[%c8_71, %c0_72] : memref<16x64xf32, #tpu.memory_space<vmem>>, vector<2x32xf32>
    tpu.vector_store %arg10[%c8_71, %c0_72], %298 {strides = array<i32>} : memref<16x64xf32, #tpu.memory_space<vmem>>, vector<2x32xf32>,
    %c6_73 = arith.constant 6 : index
    %c32_74 = arith.constant 32 : index
    %330 = vector.load %arg10[%c6_73, %c32_74] : memref<16x64xf32, #tpu.memory_space<vmem>>, vector<2x32xf32>
    tpu.vector_store %arg10[%c6_73, %c32_74], %328 {strides = array<i32>} : memref<16x64xf32, #tpu.memory_space<vmem>>, vector<2x32xf32>,
    %cst_75 = arith.constant dense<0.000000e+00> : vector<2x96xf32>
    %331 = tpu.matmul %298, %14, %cst_75 {dimension_numbers = #tpu.dot_dimension_numbers<[1], [0], [0], [1], [0, 0, 1, 1], [], []>} : vector<2x32xf32>, vector<32x96xf32>, vector<2x96xf32> -> vector<2x96xf32>
    %332 = vector.extract_strided_slice %6 {offsets = [10, 0], sizes = [2, 96], strides = [1, 1]} : vector<16x96xf32> to vector<2x96xf32>
    %333 = vector.extract_strided_slice %332 {offsets = [0, 0], sizes = [2, 32], strides = [1, 1]} : vector<2x96xf32> to vector<2x32xf32>
    %334 = vector.extract_strided_slice %331 {offsets = [0, 0], sizes = [2, 32], strides = [1, 1]} : vector<2x96xf32> to vector<2x32xf32>
    %335 = arith.addf %333, %334 : vector<2x32xf32>
    %336 = arith.negf %335 : vector<2x32xf32>
    %337 = math.exp %336 : vector<2x32xf32>
    %cst_76 = arith.constant 1.000000e+00 : f32
    %338 = vector.broadcast %cst_76 : f32 to vector<2x32xf32>
    %339 = arith.addf %338, %337 : vector<2x32xf32>
    %340 = arith.divf %338, %339 : vector<2x32xf32>
    %341 = vector.extract_strided_slice %332 {offsets = [0, 32], sizes = [2, 32], strides = [1, 1]} : vector<2x96xf32> to vector<2x32xf32>
    %342 = vector.extract_strided_slice %331 {offsets = [0, 32], sizes = [2, 32], strides = [1, 1]} : vector<2x96xf32> to vector<2x32xf32>
    %343 = arith.addf %341, %342 : vector<2x32xf32>
    %344 = arith.negf %343 : vector<2x32xf32>
    %345 = math.exp %344 : vector<2x32xf32>
    %cst_77 = arith.constant 1.000000e+00 : f32
    %346 = vector.broadcast %cst_77 : f32 to vector<2x32xf32>
    %347 = arith.addf %346, %345 : vector<2x32xf32>
    %348 = arith.divf %346, %347 : vector<2x32xf32>
    %349 = vector.extract_strided_slice %332 {offsets = [0, 64], sizes = [2, 32], strides = [1, 1]} : vector<2x96xf32> to vector<2x32xf32>
    %350 = vector.extract_strided_slice %331 {offsets = [0, 64], sizes = [2, 32], strides = [1, 1]} : vector<2x96xf32> to vector<2x32xf32>
    %351 = vector.broadcast %17 : vector<1x32xf32> to vector<2x32xf32>
    %352 = arith.addf %350, %351 : vector<2x32xf32>
    %353 = arith.mulf %340, %352 : vector<2x32xf32>
    %354 = arith.addf %349, %353 : vector<2x32xf32>
    %355 = math.tanh %354 : vector<2x32xf32>
    %cst_78 = arith.constant 1.000000e+00 : f32
    %356 = vector.broadcast %cst_78 : f32 to vector<2x32xf32>
    %357 = arith.subf %356, %348 : vector<2x32xf32>
    %358 = arith.mulf %357, %355 : vector<2x32xf32>
    %359 = arith.mulf %348, %298 : vector<2x32xf32>
    %360 = arith.addf %358, %359 : vector<2x32xf32>
    %cst_79 = arith.constant dense<0.000000e+00> : vector<2x96xf32>
    %361 = tpu.matmul %328, %16, %cst_79 {dimension_numbers = #tpu.dot_dimension_numbers<[1], [0], [0], [1], [0, 0, 1, 1], [], []>} : vector<2x32xf32>, vector<32x96xf32>, vector<2x96xf32> -> vector<2x96xf32>
    %362 = vector.extract_strided_slice %12 {offsets = [4, 0], sizes = [2, 96], strides = [1, 1]} : vector<16x96xf32> to vector<2x96xf32>
    %363 = vector.extract_strided_slice %362 {offsets = [0, 0], sizes = [2, 32], strides = [1, 1]} : vector<2x96xf32> to vector<2x32xf32>
    %364 = vector.extract_strided_slice %361 {offsets = [0, 0], sizes = [2, 32], strides = [1, 1]} : vector<2x96xf32> to vector<2x32xf32>
    %365 = arith.addf %363, %364 : vector<2x32xf32>
    %366 = arith.negf %365 : vector<2x32xf32>
    %367 = math.exp %366 : vector<2x32xf32>
    %cst_80 = arith.constant 1.000000e+00 : f32
    %368 = vector.broadcast %cst_80 : f32 to vector<2x32xf32>
    %369 = arith.addf %368, %367 : vector<2x32xf32>
    %370 = arith.divf %368, %369 : vector<2x32xf32>
    %371 = vector.extract_strided_slice %362 {offsets = [0, 32], sizes = [2, 32], strides = [1, 1]} : vector<2x96xf32> to vector<2x32xf32>
    %372 = vector.extract_strided_slice %361 {offsets = [0, 32], sizes = [2, 32], strides = [1, 1]} : vector<2x96xf32> to vector<2x32xf32>
    %373 = arith.addf %371, %372 : vector<2x32xf32>
    %374 = arith.negf %373 : vector<2x32xf32>
    %375 = math.exp %374 : vector<2x32xf32>
    %cst_81 = arith.constant 1.000000e+00 : f32
    %376 = vector.broadcast %cst_81 : f32 to vector<2x32xf32>
    %377 = arith.addf %376, %375 : vector<2x32xf32>
    %378 = arith.divf %376, %377 : vector<2x32xf32>
    %379 = vector.extract_strided_slice %362 {offsets = [0, 64], sizes = [2, 32], strides = [1, 1]} : vector<2x96xf32> to vector<2x32xf32>
    %380 = vector.extract_strided_slice %361 {offsets = [0, 64], sizes = [2, 32], strides = [1, 1]} : vector<2x96xf32> to vector<2x32xf32>
    %381 = vector.broadcast %18 : vector<1x32xf32> to vector<2x32xf32>
    %382 = arith.addf %380, %381 : vector<2x32xf32>
    %383 = arith.mulf %370, %382 : vector<2x32xf32>
    %384 = arith.addf %379, %383 : vector<2x32xf32>
    %385 = math.tanh %384 : vector<2x32xf32>
    %cst_82 = arith.constant 1.000000e+00 : f32
    %386 = vector.broadcast %cst_82 : f32 to vector<2x32xf32>
    %387 = arith.subf %386, %378 : vector<2x32xf32>
    %388 = arith.mulf %387, %385 : vector<2x32xf32>
    %389 = arith.mulf %378, %328 : vector<2x32xf32>
    %390 = arith.addf %388, %389 : vector<2x32xf32>
    %c10_83 = arith.constant 10 : index
    %c0_84 = arith.constant 0 : index
    %391 = vector.load %arg10[%c10_83, %c0_84] : memref<16x64xf32, #tpu.memory_space<vmem>>, vector<2x32xf32>
    tpu.vector_store %arg10[%c10_83, %c0_84], %360 {strides = array<i32>} : memref<16x64xf32, #tpu.memory_space<vmem>>, vector<2x32xf32>,
    %c4_85 = arith.constant 4 : index
    %c32_86 = arith.constant 32 : index
    %392 = vector.load %arg10[%c4_85, %c32_86] : memref<16x64xf32, #tpu.memory_space<vmem>>, vector<2x32xf32>
    tpu.vector_store %arg10[%c4_85, %c32_86], %390 {strides = array<i32>} : memref<16x64xf32, #tpu.memory_space<vmem>>, vector<2x32xf32>,
    %cst_87 = arith.constant dense<0.000000e+00> : vector<2x96xf32>
    %393 = tpu.matmul %360, %14, %cst_87 {dimension_numbers = #tpu.dot_dimension_numbers<[1], [0], [0], [1], [0, 0, 1, 1], [], []>} : vector<2x32xf32>, vector<32x96xf32>, vector<2x96xf32> -> vector<2x96xf32>
    %394 = vector.extract_strided_slice %6 {offsets = [12, 0], sizes = [2, 96], strides = [1, 1]} : vector<16x96xf32> to vector<2x96xf32>
    %395 = vector.extract_strided_slice %394 {offsets = [0, 0], sizes = [2, 32], strides = [1, 1]} : vector<2x96xf32> to vector<2x32xf32>
    %396 = vector.extract_strided_slice %393 {offsets = [0, 0], sizes = [2, 32], strides = [1, 1]} : vector<2x96xf32> to vector<2x32xf32>
    %397 = arith.addf %395, %396 : vector<2x32xf32>
    %398 = arith.negf %397 : vector<2x32xf32>
    %399 = math.exp %398 : vector<2x32xf32>
    %cst_88 = arith.constant 1.000000e+00 : f32
    %400 = vector.broadcast %cst_88 : f32 to vector<2x32xf32>
    %401 = arith.addf %400, %399 : vector<2x32xf32>
    %402 = arith.divf %400, %401 : vector<2x32xf32>
    %403 = vector.extract_strided_slice %394 {offsets = [0, 32], sizes = [2, 32], strides = [1, 1]} : vector<2x96xf32> to vector<2x32xf32>
    %404 = vector.extract_strided_slice %393 {offsets = [0, 32], sizes = [2, 32], strides = [1, 1]} : vector<2x96xf32> to vector<2x32xf32>
    %405 = arith.addf %403, %404 : vector<2x32xf32>
    %406 = arith.negf %405 : vector<2x32xf32>
    %407 = math.exp %406 : vector<2x32xf32>
    %cst_89 = arith.constant 1.000000e+00 : f32
    %408 = vector.broadcast %cst_89 : f32 to vector<2x32xf32>
    %409 = arith.addf %408, %407 : vector<2x32xf32>
    %410 = arith.divf %408, %409 : vector<2x32xf32>
    %411 = vector.extract_strided_slice %394 {offsets = [0, 64], sizes = [2, 32], strides = [1, 1]} : vector<2x96xf32> to vector<2x32xf32>
    %412 = vector.extract_strided_slice %393 {offsets = [0, 64], sizes = [2, 32], strides = [1, 1]} : vector<2x96xf32> to vector<2x32xf32>
    %413 = vector.broadcast %17 : vector<1x32xf32> to vector<2x32xf32>
    %414 = arith.addf %412, %413 : vector<2x32xf32>
    %415 = arith.mulf %402, %414 : vector<2x32xf32>
    %416 = arith.addf %411, %415 : vector<2x32xf32>
    %417 = math.tanh %416 : vector<2x32xf32>
    %cst_90 = arith.constant 1.000000e+00 : f32
    %418 = vector.broadcast %cst_90 : f32 to vector<2x32xf32>
    %419 = arith.subf %418, %410 : vector<2x32xf32>
    %420 = arith.mulf %419, %417 : vector<2x32xf32>
    %421 = arith.mulf %410, %360 : vector<2x32xf32>
    %422 = arith.addf %420, %421 : vector<2x32xf32>
    %cst_91 = arith.constant dense<0.000000e+00> : vector<2x96xf32>
    %423 = tpu.matmul %390, %16, %cst_91 {dimension_numbers = #tpu.dot_dimension_numbers<[1], [0], [0], [1], [0, 0, 1, 1], [], []>} : vector<2x32xf32>, vector<32x96xf32>, vector<2x96xf32> -> vector<2x96xf32>
    %424 = vector.extract_strided_slice %12 {offsets = [2, 0], sizes = [2, 96], strides = [1, 1]} : vector<16x96xf32> to vector<2x96xf32>
    %425 = vector.extract_strided_slice %424 {offsets = [0, 0], sizes = [2, 32], strides = [1, 1]} : vector<2x96xf32> to vector<2x32xf32>
    %426 = vector.extract_strided_slice %423 {offsets = [0, 0], sizes = [2, 32], strides = [1, 1]} : vector<2x96xf32> to vector<2x32xf32>
    %427 = arith.addf %425, %426 : vector<2x32xf32>
    %428 = arith.negf %427 : vector<2x32xf32>
    %429 = math.exp %428 : vector<2x32xf32>
    %cst_92 = arith.constant 1.000000e+00 : f32
    %430 = vector.broadcast %cst_92 : f32 to vector<2x32xf32>
    %431 = arith.addf %430, %429 : vector<2x32xf32>
    %432 = arith.divf %430, %431 : vector<2x32xf32>
    %433 = vector.extract_strided_slice %424 {offsets = [0, 32], sizes = [2, 32], strides = [1, 1]} : vector<2x96xf32> to vector<2x32xf32>
    %434 = vector.extract_strided_slice %423 {offsets = [0, 32], sizes = [2, 32], strides = [1, 1]} : vector<2x96xf32> to vector<2x32xf32>
    %435 = arith.addf %433, %434 : vector<2x32xf32>
    %436 = arith.negf %435 : vector<2x32xf32>
    %437 = math.exp %436 : vector<2x32xf32>
    %cst_93 = arith.constant 1.000000e+00 : f32
    %438 = vector.broadcast %cst_93 : f32 to vector<2x32xf32>
    %439 = arith.addf %438, %437 : vector<2x32xf32>
    %440 = arith.divf %438, %439 : vector<2x32xf32>
    %441 = vector.extract_strided_slice %424 {offsets = [0, 64], sizes = [2, 32], strides = [1, 1]} : vector<2x96xf32> to vector<2x32xf32>
    %442 = vector.extract_strided_slice %423 {offsets = [0, 64], sizes = [2, 32], strides = [1, 1]} : vector<2x96xf32> to vector<2x32xf32>
    %443 = vector.broadcast %18 : vector<1x32xf32> to vector<2x32xf32>
    %444 = arith.addf %442, %443 : vector<2x32xf32>
    %445 = arith.mulf %432, %444 : vector<2x32xf32>
    %446 = arith.addf %441, %445 : vector<2x32xf32>
    %447 = math.tanh %446 : vector<2x32xf32>
    %cst_94 = arith.constant 1.000000e+00 : f32
    %448 = vector.broadcast %cst_94 : f32 to vector<2x32xf32>
    %449 = arith.subf %448, %440 : vector<2x32xf32>
    %450 = arith.mulf %449, %447 : vector<2x32xf32>
    %451 = arith.mulf %440, %390 : vector<2x32xf32>
    %452 = arith.addf %450, %451 : vector<2x32xf32>
    %c12_95 = arith.constant 12 : index
    %c0_96 = arith.constant 0 : index
    %453 = vector.load %arg10[%c12_95, %c0_96] : memref<16x64xf32, #tpu.memory_space<vmem>>, vector<2x32xf32>
    tpu.vector_store %arg10[%c12_95, %c0_96], %422 {strides = array<i32>} : memref<16x64xf32, #tpu.memory_space<vmem>>, vector<2x32xf32>,
    %c2_97 = arith.constant 2 : index
    %c32_98 = arith.constant 32 : index
    %454 = vector.load %arg10[%c2_97, %c32_98] : memref<16x64xf32, #tpu.memory_space<vmem>>, vector<2x32xf32>
    tpu.vector_store %arg10[%c2_97, %c32_98], %452 {strides = array<i32>} : memref<16x64xf32, #tpu.memory_space<vmem>>, vector<2x32xf32>,
    %cst_99 = arith.constant dense<0.000000e+00> : vector<2x96xf32>
    %455 = tpu.matmul %422, %14, %cst_99 {dimension_numbers = #tpu.dot_dimension_numbers<[1], [0], [0], [1], [0, 0, 1, 1], [], []>} : vector<2x32xf32>, vector<32x96xf32>, vector<2x96xf32> -> vector<2x96xf32>
    %456 = vector.extract_strided_slice %6 {offsets = [14, 0], sizes = [2, 96], strides = [1, 1]} : vector<16x96xf32> to vector<2x96xf32>
    %457 = vector.extract_strided_slice %456 {offsets = [0, 0], sizes = [2, 32], strides = [1, 1]} : vector<2x96xf32> to vector<2x32xf32>
    %458 = vector.extract_strided_slice %455 {offsets = [0, 0], sizes = [2, 32], strides = [1, 1]} : vector<2x96xf32> to vector<2x32xf32>
    %459 = arith.addf %457, %458 : vector<2x32xf32>
    %460 = arith.negf %459 : vector<2x32xf32>
    %461 = math.exp %460 : vector<2x32xf32>
    %cst_100 = arith.constant 1.000000e+00 : f32
    %462 = vector.broadcast %cst_100 : f32 to vector<2x32xf32>
    %463 = arith.addf %462, %461 : vector<2x32xf32>
    %464 = arith.divf %462, %463 : vector<2x32xf32>
    %465 = vector.extract_strided_slice %456 {offsets = [0, 32], sizes = [2, 32], strides = [1, 1]} : vector<2x96xf32> to vector<2x32xf32>
    %466 = vector.extract_strided_slice %455 {offsets = [0, 32], sizes = [2, 32], strides = [1, 1]} : vector<2x96xf32> to vector<2x32xf32>
    %467 = arith.addf %465, %466 : vector<2x32xf32>
    %468 = arith.negf %467 : vector<2x32xf32>
    %469 = math.exp %468 : vector<2x32xf32>
    %cst_101 = arith.constant 1.000000e+00 : f32
    %470 = vector.broadcast %cst_101 : f32 to vector<2x32xf32>
    %471 = arith.addf %470, %469 : vector<2x32xf32>
    %472 = arith.divf %470, %471 : vector<2x32xf32>
    %473 = vector.extract_strided_slice %456 {offsets = [0, 64], sizes = [2, 32], strides = [1, 1]} : vector<2x96xf32> to vector<2x32xf32>
    %474 = vector.extract_strided_slice %455 {offsets = [0, 64], sizes = [2, 32], strides = [1, 1]} : vector<2x96xf32> to vector<2x32xf32>
    %475 = vector.broadcast %17 : vector<1x32xf32> to vector<2x32xf32>
    %476 = arith.addf %474, %475 : vector<2x32xf32>
    %477 = arith.mulf %464, %476 : vector<2x32xf32>
    %478 = arith.addf %473, %477 : vector<2x32xf32>
    %479 = math.tanh %478 : vector<2x32xf32>
    %cst_102 = arith.constant 1.000000e+00 : f32
    %480 = vector.broadcast %cst_102 : f32 to vector<2x32xf32>
    %481 = arith.subf %480, %472 : vector<2x32xf32>
    %482 = arith.mulf %481, %479 : vector<2x32xf32>
    %483 = arith.mulf %472, %422 : vector<2x32xf32>
    %484 = arith.addf %482, %483 : vector<2x32xf32>
    %cst_103 = arith.constant dense<0.000000e+00> : vector<2x96xf32>
    %485 = tpu.matmul %452, %16, %cst_103 {dimension_numbers = #tpu.dot_dimension_numbers<[1], [0], [0], [1], [0, 0, 1, 1], [], []>} : vector<2x32xf32>, vector<32x96xf32>, vector<2x96xf32> -> vector<2x96xf32>
    %486 = vector.extract_strided_slice %12 {offsets = [0, 0], sizes = [2, 96], strides = [1, 1]} : vector<16x96xf32> to vector<2x96xf32>
    %487 = vector.extract_strided_slice %486 {offsets = [0, 0], sizes = [2, 32], strides = [1, 1]} : vector<2x96xf32> to vector<2x32xf32>
    %488 = vector.extract_strided_slice %485 {offsets = [0, 0], sizes = [2, 32], strides = [1, 1]} : vector<2x96xf32> to vector<2x32xf32>
    %489 = arith.addf %487, %488 : vector<2x32xf32>
    %490 = arith.negf %489 : vector<2x32xf32>
    %491 = math.exp %490 : vector<2x32xf32>
    %cst_104 = arith.constant 1.000000e+00 : f32
    %492 = vector.broadcast %cst_104 : f32 to vector<2x32xf32>
    %493 = arith.addf %492, %491 : vector<2x32xf32>
    %494 = arith.divf %492, %493 : vector<2x32xf32>
    %495 = vector.extract_strided_slice %486 {offsets = [0, 32], sizes = [2, 32], strides = [1, 1]} : vector<2x96xf32> to vector<2x32xf32>
    %496 = vector.extract_strided_slice %485 {offsets = [0, 32], sizes = [2, 32], strides = [1, 1]} : vector<2x96xf32> to vector<2x32xf32>
    %497 = arith.addf %495, %496 : vector<2x32xf32>
    %498 = arith.negf %497 : vector<2x32xf32>
    %499 = math.exp %498 : vector<2x32xf32>
    %cst_105 = arith.constant 1.000000e+00 : f32
    %500 = vector.broadcast %cst_105 : f32 to vector<2x32xf32>
    %501 = arith.addf %500, %499 : vector<2x32xf32>
    %502 = arith.divf %500, %501 : vector<2x32xf32>
    %503 = vector.extract_strided_slice %486 {offsets = [0, 64], sizes = [2, 32], strides = [1, 1]} : vector<2x96xf32> to vector<2x32xf32>
    %504 = vector.extract_strided_slice %485 {offsets = [0, 64], sizes = [2, 32], strides = [1, 1]} : vector<2x96xf32> to vector<2x32xf32>
    %505 = vector.broadcast %18 : vector<1x32xf32> to vector<2x32xf32>
    %506 = arith.addf %504, %505 : vector<2x32xf32>
    %507 = arith.mulf %494, %506 : vector<2x32xf32>
    %508 = arith.addf %503, %507 : vector<2x32xf32>
    %509 = math.tanh %508 : vector<2x32xf32>
    %cst_106 = arith.constant 1.000000e+00 : f32
    %510 = vector.broadcast %cst_106 : f32 to vector<2x32xf32>
    %511 = arith.subf %510, %502 : vector<2x32xf32>
    %512 = arith.mulf %511, %509 : vector<2x32xf32>
    %513 = arith.mulf %502, %452 : vector<2x32xf32>
    %514 = arith.addf %512, %513 : vector<2x32xf32>
    %c14_107 = arith.constant 14 : index
    %c0_108 = arith.constant 0 : index
    %515 = vector.load %arg10[%c14_107, %c0_108] : memref<16x64xf32, #tpu.memory_space<vmem>>, vector<2x32xf32>
    tpu.vector_store %arg10[%c14_107, %c0_108], %484 {strides = array<i32>} : memref<16x64xf32, #tpu.memory_space<vmem>>, vector<2x32xf32>,
    %c0_109 = arith.constant 0 : index
    %c32_110 = arith.constant 32 : index
    %516 = vector.load %arg10[%c0_109, %c32_110] : memref<16x64xf32, #tpu.memory_space<vmem>>, vector<2x32xf32>
    tpu.vector_store %arg10[%c0_109, %c32_110], %514 {strides = array<i32>} : memref<16x64xf32, #tpu.memory_space<vmem>>, vector<2x32xf32>,
    %c0_111 = arith.constant 0 : index
    %c0_112 = arith.constant 0 : index
    %517 = vector.load %arg10[%c0_111, %c0_112] : memref<16x64xf32, #tpu.memory_space<vmem>>, vector<16x64xf32>
    %c0_113 = arith.constant 0 : index
    %c0_114 = arith.constant 0 : index
    %c0_115 = arith.constant 0 : index
    %518 = vector.load %arg5[%c0_113, %c0_114, %c0_115] : memref<2x64x96xf32, #tpu.memory_space<vmem>>, vector<1x64x96xf32>
    %519 = vector.shape_cast %518 : vector<1x64x96xf32> to vector<64x96xf32>
    %cst_116 = arith.constant dense<0.000000e+00> : vector<16x96xf32>
    %520 = tpu.matmul %517, %519, %cst_116 {dimension_numbers = #tpu.dot_dimension_numbers<[1], [0], [0], [1], [0, 0, 1, 1], [], []>} : vector<16x64xf32>, vector<64x96xf32>, vector<16x96xf32> -> vector<16x96xf32>
    %c0_117 = arith.constant 0 : index
    %c0_118 = arith.constant 0 : index
    %521 = vector.load %arg7[%c0_117, %c0_118] : memref<2x96xf32, #tpu.memory_space<vmem>>, vector<1x96xf32>
    %522 = vector.broadcast %521 : vector<1x96xf32> to vector<16x96xf32>
    %523 = arith.addf %520, %522 : vector<16x96xf32>
    %c1_119 = arith.constant 1 : index
    %c0_120 = arith.constant 0 : index
    %c0_121 = arith.constant 0 : index
    %524 = vector.load %arg5[%c1_119, %c0_120, %c0_121] : memref<2x64x96xf32, #tpu.memory_space<vmem>>, vector<1x64x96xf32>
    %525 = vector.shape_cast %524 : vector<1x64x96xf32> to vector<64x96xf32>
    %cst_122 = arith.constant dense<0.000000e+00> : vector<16x96xf32>
    %526 = tpu.matmul %517, %525, %cst_122 {dimension_numbers = #tpu.dot_dimension_numbers<[1], [0], [0], [1], [0, 0, 1, 1], [], []>} : vector<16x64xf32>, vector<64x96xf32>, vector<16x96xf32> -> vector<16x96xf32>
    %c1_123 = arith.constant 1 : index
    %c0_124 = arith.constant 0 : index
    %527 = vector.load %arg7[%c1_123, %c0_124] : memref<2x96xf32, #tpu.memory_space<vmem>>, vector<1x96xf32>
    %528 = vector.broadcast %527 : vector<1x96xf32> to vector<16x96xf32>
    %529 = arith.addf %526, %528 : vector<16x96xf32>
    %c0_125 = arith.constant 0 : index
    %c0_126 = arith.constant 0 : index
    %c0_127 = arith.constant 0 : index
    %530 = vector.load %arg6[%c0_125, %c0_126, %c0_127] : memref<2x32x96xf32, #tpu.memory_space<vmem>>, vector<1x32x96xf32>
    %531 = vector.shape_cast %530 : vector<1x32x96xf32> to vector<32x96xf32>
    %c1_128 = arith.constant 1 : index
    %c0_129 = arith.constant 0 : index
    %c0_130 = arith.constant 0 : index
    %532 = vector.load %arg6[%c1_128, %c0_129, %c0_130] : memref<2x32x96xf32, #tpu.memory_space<vmem>>, vector<1x32x96xf32>
    %533 = vector.shape_cast %532 : vector<1x32x96xf32> to vector<32x96xf32>
    %c0_131 = arith.constant 0 : index
    %c0_132 = arith.constant 0 : index
    %534 = vector.load %arg8[%c0_131, %c0_132] : memref<2x32xf32, #tpu.memory_space<vmem>>, vector<1x32xf32>
    %c1_133 = arith.constant 1 : index
    %c0_134 = arith.constant 0 : index
    %535 = vector.load %arg8[%c1_133, %c0_134] : memref<2x32xf32, #tpu.memory_space<vmem>>, vector<1x32xf32>
    %cst_135 = arith.constant 0.000000e+00 : f32
    %536 = vector.broadcast %cst_135 : f32 to vector<2x32xf32>
    %cst_136 = arith.constant 0.000000e+00 : f32
    %537 = vector.broadcast %cst_136 : f32 to vector<2x32xf32>
    %cst_137 = arith.constant dense<0.000000e+00> : vector<2x96xf32>
    %538 = tpu.matmul %536, %531, %cst_137 {dimension_numbers = #tpu.dot_dimension_numbers<[1], [0], [0], [1], [0, 0, 1, 1], [], []>} : vector<2x32xf32>, vector<32x96xf32>, vector<2x96xf32> -> vector<2x96xf32>
    %539 = vector.extract_strided_slice %523 {offsets = [0, 0], sizes = [2, 96], strides = [1, 1]} : vector<16x96xf32> to vector<2x96xf32>
    %540 = vector.extract_strided_slice %539 {offsets = [0, 0], sizes = [2, 32], strides = [1, 1]} : vector<2x96xf32> to vector<2x32xf32>
    %541 = vector.extract_strided_slice %538 {offsets = [0, 0], sizes = [2, 32], strides = [1, 1]} : vector<2x96xf32> to vector<2x32xf32>
    %542 = arith.addf %540, %541 : vector<2x32xf32>
    %543 = arith.negf %542 : vector<2x32xf32>
    %544 = math.exp %543 : vector<2x32xf32>
    %cst_138 = arith.constant 1.000000e+00 : f32
    %545 = vector.broadcast %cst_138 : f32 to vector<2x32xf32>
    %546 = arith.addf %545, %544 : vector<2x32xf32>
    %547 = arith.divf %545, %546 : vector<2x32xf32>
    %548 = vector.extract_strided_slice %539 {offsets = [0, 32], sizes = [2, 32], strides = [1, 1]} : vector<2x96xf32> to vector<2x32xf32>
    %549 = vector.extract_strided_slice %538 {offsets = [0, 32], sizes = [2, 32], strides = [1, 1]} : vector<2x96xf32> to vector<2x32xf32>
    %550 = arith.addf %548, %549 : vector<2x32xf32>
    %551 = arith.negf %550 : vector<2x32xf32>
    %552 = math.exp %551 : vector<2x32xf32>
    %cst_139 = arith.constant 1.000000e+00 : f32
    %553 = vector.broadcast %cst_139 : f32 to vector<2x32xf32>
    %554 = arith.addf %553, %552 : vector<2x32xf32>
    %555 = arith.divf %553, %554 : vector<2x32xf32>
    %556 = vector.extract_strided_slice %539 {offsets = [0, 64], sizes = [2, 32], strides = [1, 1]} : vector<2x96xf32> to vector<2x32xf32>
    %557 = vector.extract_strided_slice %538 {offsets = [0, 64], sizes = [2, 32], strides = [1, 1]} : vector<2x96xf32> to vector<2x32xf32>
    %558 = vector.broadcast %534 : vector<1x32xf32> to vector<2x32xf32>
    %559 = arith.addf %557, %558 : vector<2x32xf32>
    %560 = arith.mulf %547, %559 : vector<2x32xf32>
    %561 = arith.addf %556, %560 : vector<2x32xf32>
    %562 = math.tanh %561 : vector<2x32xf32>
    %cst_140 = arith.constant 1.000000e+00 : f32
    %563 = vector.broadcast %cst_140 : f32 to vector<2x32xf32>
    %564 = arith.subf %563, %555 : vector<2x32xf32>
    %565 = arith.mulf %564, %562 : vector<2x32xf32>
    %566 = arith.mulf %555, %536 : vector<2x32xf32>
    %567 = arith.addf %565, %566 : vector<2x32xf32>
    %cst_141 = arith.constant dense<0.000000e+00> : vector<2x96xf32>
    %568 = tpu.matmul %537, %533, %cst_141 {dimension_numbers = #tpu.dot_dimension_numbers<[1], [0], [0], [1], [0, 0, 1, 1], [], []>} : vector<2x32xf32>, vector<32x96xf32>, vector<2x96xf32> -> vector<2x96xf32>
    %569 = vector.extract_strided_slice %529 {offsets = [14, 0], sizes = [2, 96], strides = [1, 1]} : vector<16x96xf32> to vector<2x96xf32>
    %570 = vector.extract_strided_slice %569 {offsets = [0, 0], sizes = [2, 32], strides = [1, 1]} : vector<2x96xf32> to vector<2x32xf32>
    %571 = vector.extract_strided_slice %568 {offsets = [0, 0], sizes = [2, 32], strides = [1, 1]} : vector<2x96xf32> to vector<2x32xf32>
    %572 = arith.addf %570, %571 : vector<2x32xf32>
    %573 = arith.negf %572 : vector<2x32xf32>
    %574 = math.exp %573 : vector<2x32xf32>
    %cst_142 = arith.constant 1.000000e+00 : f32
    %575 = vector.broadcast %cst_142 : f32 to vector<2x32xf32>
    %576 = arith.addf %575, %574 : vector<2x32xf32>
    %577 = arith.divf %575, %576 : vector<2x32xf32>
    %578 = vector.extract_strided_slice %569 {offsets = [0, 32], sizes = [2, 32], strides = [1, 1]} : vector<2x96xf32> to vector<2x32xf32>
    %579 = vector.extract_strided_slice %568 {offsets = [0, 32], sizes = [2, 32], strides = [1, 1]} : vector<2x96xf32> to vector<2x32xf32>
    %580 = arith.addf %578, %579 : vector<2x32xf32>
    %581 = arith.negf %580 : vector<2x32xf32>
    %582 = math.exp %581 : vector<2x32xf32>
    %cst_143 = arith.constant 1.000000e+00 : f32
    %583 = vector.broadcast %cst_143 : f32 to vector<2x32xf32>
    %584 = arith.addf %583, %582 : vector<2x32xf32>
    %585 = arith.divf %583, %584 : vector<2x32xf32>
    %586 = vector.extract_strided_slice %569 {offsets = [0, 64], sizes = [2, 32], strides = [1, 1]} : vector<2x96xf32> to vector<2x32xf32>
    %587 = vector.extract_strided_slice %568 {offsets = [0, 64], sizes = [2, 32], strides = [1, 1]} : vector<2x96xf32> to vector<2x32xf32>
    %588 = vector.broadcast %535 : vector<1x32xf32> to vector<2x32xf32>
    %589 = arith.addf %587, %588 : vector<2x32xf32>
    %590 = arith.mulf %577, %589 : vector<2x32xf32>
    %591 = arith.addf %586, %590 : vector<2x32xf32>
    %592 = math.tanh %591 : vector<2x32xf32>
    %cst_144 = arith.constant 1.000000e+00 : f32
    %593 = vector.broadcast %cst_144 : f32 to vector<2x32xf32>
    %594 = arith.subf %593, %585 : vector<2x32xf32>
    %595 = arith.mulf %594, %592 : vector<2x32xf32>
    %596 = arith.mulf %585, %537 : vector<2x32xf32>
    %597 = arith.addf %595, %596 : vector<2x32xf32>
    %cst_145 = arith.constant dense<0.000000e+00> : vector<2x96xf32>
    %598 = tpu.matmul %567, %531, %cst_145 {dimension_numbers = #tpu.dot_dimension_numbers<[1], [0], [0], [1], [0, 0, 1, 1], [], []>} : vector<2x32xf32>, vector<32x96xf32>, vector<2x96xf32> -> vector<2x96xf32>
    %599 = vector.extract_strided_slice %523 {offsets = [2, 0], sizes = [2, 96], strides = [1, 1]} : vector<16x96xf32> to vector<2x96xf32>
    %600 = vector.extract_strided_slice %599 {offsets = [0, 0], sizes = [2, 32], strides = [1, 1]} : vector<2x96xf32> to vector<2x32xf32>
    %601 = vector.extract_strided_slice %598 {offsets = [0, 0], sizes = [2, 32], strides = [1, 1]} : vector<2x96xf32> to vector<2x32xf32>
    %602 = arith.addf %600, %601 : vector<2x32xf32>
    %603 = arith.negf %602 : vector<2x32xf32>
    %604 = math.exp %603 : vector<2x32xf32>
    %cst_146 = arith.constant 1.000000e+00 : f32
    %605 = vector.broadcast %cst_146 : f32 to vector<2x32xf32>
    %606 = arith.addf %605, %604 : vector<2x32xf32>
    %607 = arith.divf %605, %606 : vector<2x32xf32>
    %608 = vector.extract_strided_slice %599 {offsets = [0, 32], sizes = [2, 32], strides = [1, 1]} : vector<2x96xf32> to vector<2x32xf32>
    %609 = vector.extract_strided_slice %598 {offsets = [0, 32], sizes = [2, 32], strides = [1, 1]} : vector<2x96xf32> to vector<2x32xf32>
    %610 = arith.addf %608, %609 : vector<2x32xf32>
    %611 = arith.negf %610 : vector<2x32xf32>
    %612 = math.exp %611 : vector<2x32xf32>
    %cst_147 = arith.constant 1.000000e+00 : f32
    %613 = vector.broadcast %cst_147 : f32 to vector<2x32xf32>
    %614 = arith.addf %613, %612 : vector<2x32xf32>
    %615 = arith.divf %613, %614 : vector<2x32xf32>
    %616 = vector.extract_strided_slice %599 {offsets = [0, 64], sizes = [2, 32], strides = [1, 1]} : vector<2x96xf32> to vector<2x32xf32>
    %617 = vector.extract_strided_slice %598 {offsets = [0, 64], sizes = [2, 32], strides = [1, 1]} : vector<2x96xf32> to vector<2x32xf32>
    %618 = vector.broadcast %534 : vector<1x32xf32> to vector<2x32xf32>
    %619 = arith.addf %617, %618 : vector<2x32xf32>
    %620 = arith.mulf %607, %619 : vector<2x32xf32>
    %621 = arith.addf %616, %620 : vector<2x32xf32>
    %622 = math.tanh %621 : vector<2x32xf32>
    %cst_148 = arith.constant 1.000000e+00 : f32
    %623 = vector.broadcast %cst_148 : f32 to vector<2x32xf32>
    %624 = arith.subf %623, %615 : vector<2x32xf32>
    %625 = arith.mulf %624, %622 : vector<2x32xf32>
    %626 = arith.mulf %615, %567 : vector<2x32xf32>
    %627 = arith.addf %625, %626 : vector<2x32xf32>
    %cst_149 = arith.constant dense<0.000000e+00> : vector<2x96xf32>
    %628 = tpu.matmul %597, %533, %cst_149 {dimension_numbers = #tpu.dot_dimension_numbers<[1], [0], [0], [1], [0, 0, 1, 1], [], []>} : vector<2x32xf32>, vector<32x96xf32>, vector<2x96xf32> -> vector<2x96xf32>
    %629 = vector.extract_strided_slice %529 {offsets = [12, 0], sizes = [2, 96], strides = [1, 1]} : vector<16x96xf32> to vector<2x96xf32>
    %630 = vector.extract_strided_slice %629 {offsets = [0, 0], sizes = [2, 32], strides = [1, 1]} : vector<2x96xf32> to vector<2x32xf32>
    %631 = vector.extract_strided_slice %628 {offsets = [0, 0], sizes = [2, 32], strides = [1, 1]} : vector<2x96xf32> to vector<2x32xf32>
    %632 = arith.addf %630, %631 : vector<2x32xf32>
    %633 = arith.negf %632 : vector<2x32xf32>
    %634 = math.exp %633 : vector<2x32xf32>
    %cst_150 = arith.constant 1.000000e+00 : f32
    %635 = vector.broadcast %cst_150 : f32 to vector<2x32xf32>
    %636 = arith.addf %635, %634 : vector<2x32xf32>
    %637 = arith.divf %635, %636 : vector<2x32xf32>
    %638 = vector.extract_strided_slice %629 {offsets = [0, 32], sizes = [2, 32], strides = [1, 1]} : vector<2x96xf32> to vector<2x32xf32>
    %639 = vector.extract_strided_slice %628 {offsets = [0, 32], sizes = [2, 32], strides = [1, 1]} : vector<2x96xf32> to vector<2x32xf32>
    %640 = arith.addf %638, %639 : vector<2x32xf32>
    %641 = arith.negf %640 : vector<2x32xf32>
    %642 = math.exp %641 : vector<2x32xf32>
    %cst_151 = arith.constant 1.000000e+00 : f32
    %643 = vector.broadcast %cst_151 : f32 to vector<2x32xf32>
    %644 = arith.addf %643, %642 : vector<2x32xf32>
    %645 = arith.divf %643, %644 : vector<2x32xf32>
    %646 = vector.extract_strided_slice %629 {offsets = [0, 64], sizes = [2, 32], strides = [1, 1]} : vector<2x96xf32> to vector<2x32xf32>
    %647 = vector.extract_strided_slice %628 {offsets = [0, 64], sizes = [2, 32], strides = [1, 1]} : vector<2x96xf32> to vector<2x32xf32>
    %648 = vector.broadcast %535 : vector<1x32xf32> to vector<2x32xf32>
    %649 = arith.addf %647, %648 : vector<2x32xf32>
    %650 = arith.mulf %637, %649 : vector<2x32xf32>
    %651 = arith.addf %646, %650 : vector<2x32xf32>
    %652 = math.tanh %651 : vector<2x32xf32>
    %cst_152 = arith.constant 1.000000e+00 : f32
    %653 = vector.broadcast %cst_152 : f32 to vector<2x32xf32>
    %654 = arith.subf %653, %645 : vector<2x32xf32>
    %655 = arith.mulf %654, %652 : vector<2x32xf32>
    %656 = arith.mulf %645, %597 : vector<2x32xf32>
    %657 = arith.addf %655, %656 : vector<2x32xf32>
    %cst_153 = arith.constant dense<0.000000e+00> : vector<2x96xf32>
    %658 = tpu.matmul %627, %531, %cst_153 {dimension_numbers = #tpu.dot_dimension_numbers<[1], [0], [0], [1], [0, 0, 1, 1], [], []>} : vector<2x32xf32>, vector<32x96xf32>, vector<2x96xf32> -> vector<2x96xf32>
    %659 = vector.extract_strided_slice %523 {offsets = [4, 0], sizes = [2, 96], strides = [1, 1]} : vector<16x96xf32> to vector<2x96xf32>
    %660 = vector.extract_strided_slice %659 {offsets = [0, 0], sizes = [2, 32], strides = [1, 1]} : vector<2x96xf32> to vector<2x32xf32>
    %661 = vector.extract_strided_slice %658 {offsets = [0, 0], sizes = [2, 32], strides = [1, 1]} : vector<2x96xf32> to vector<2x32xf32>
    %662 = arith.addf %660, %661 : vector<2x32xf32>
    %663 = arith.negf %662 : vector<2x32xf32>
    %664 = math.exp %663 : vector<2x32xf32>
    %cst_154 = arith.constant 1.000000e+00 : f32
    %665 = vector.broadcast %cst_154 : f32 to vector<2x32xf32>
    %666 = arith.addf %665, %664 : vector<2x32xf32>
    %667 = arith.divf %665, %666 : vector<2x32xf32>
    %668 = vector.extract_strided_slice %659 {offsets = [0, 32], sizes = [2, 32], strides = [1, 1]} : vector<2x96xf32> to vector<2x32xf32>
    %669 = vector.extract_strided_slice %658 {offsets = [0, 32], sizes = [2, 32], strides = [1, 1]} : vector<2x96xf32> to vector<2x32xf32>
    %670 = arith.addf %668, %669 : vector<2x32xf32>
    %671 = arith.negf %670 : vector<2x32xf32>
    %672 = math.exp %671 : vector<2x32xf32>
    %cst_155 = arith.constant 1.000000e+00 : f32
    %673 = vector.broadcast %cst_155 : f32 to vector<2x32xf32>
    %674 = arith.addf %673, %672 : vector<2x32xf32>
    %675 = arith.divf %673, %674 : vector<2x32xf32>
    %676 = vector.extract_strided_slice %659 {offsets = [0, 64], sizes = [2, 32], strides = [1, 1]} : vector<2x96xf32> to vector<2x32xf32>
    %677 = vector.extract_strided_slice %658 {offsets = [0, 64], sizes = [2, 32], strides = [1, 1]} : vector<2x96xf32> to vector<2x32xf32>
    %678 = vector.broadcast %534 : vector<1x32xf32> to vector<2x32xf32>
    %679 = arith.addf %677, %678 : vector<2x32xf32>
    %680 = arith.mulf %667, %679 : vector<2x32xf32>
    %681 = arith.addf %676, %680 : vector<2x32xf32>
    %682 = math.tanh %681 : vector<2x32xf32>
    %cst_156 = arith.constant 1.000000e+00 : f32
    %683 = vector.broadcast %cst_156 : f32 to vector<2x32xf32>
    %684 = arith.subf %683, %675 : vector<2x32xf32>
    %685 = arith.mulf %684, %682 : vector<2x32xf32>
    %686 = arith.mulf %675, %627 : vector<2x32xf32>
    %687 = arith.addf %685, %686 : vector<2x32xf32>
    %cst_157 = arith.constant dense<0.000000e+00> : vector<2x96xf32>
    %688 = tpu.matmul %657, %533, %cst_157 {dimension_numbers = #tpu.dot_dimension_numbers<[1], [0], [0], [1], [0, 0, 1, 1], [], []>} : vector<2x32xf32>, vector<32x96xf32>, vector<2x96xf32> -> vector<2x96xf32>
    %689 = vector.extract_strided_slice %529 {offsets = [10, 0], sizes = [2, 96], strides = [1, 1]} : vector<16x96xf32> to vector<2x96xf32>
    %690 = vector.extract_strided_slice %689 {offsets = [0, 0], sizes = [2, 32], strides = [1, 1]} : vector<2x96xf32> to vector<2x32xf32>
    %691 = vector.extract_strided_slice %688 {offsets = [0, 0], sizes = [2, 32], strides = [1, 1]} : vector<2x96xf32> to vector<2x32xf32>
    %692 = arith.addf %690, %691 : vector<2x32xf32>
    %693 = arith.negf %692 : vector<2x32xf32>
    %694 = math.exp %693 : vector<2x32xf32>
    %cst_158 = arith.constant 1.000000e+00 : f32
    %695 = vector.broadcast %cst_158 : f32 to vector<2x32xf32>
    %696 = arith.addf %695, %694 : vector<2x32xf32>
    %697 = arith.divf %695, %696 : vector<2x32xf32>
    %698 = vector.extract_strided_slice %689 {offsets = [0, 32], sizes = [2, 32], strides = [1, 1]} : vector<2x96xf32> to vector<2x32xf32>
    %699 = vector.extract_strided_slice %688 {offsets = [0, 32], sizes = [2, 32], strides = [1, 1]} : vector<2x96xf32> to vector<2x32xf32>
    %700 = arith.addf %698, %699 : vector<2x32xf32>
    %701 = arith.negf %700 : vector<2x32xf32>
    %702 = math.exp %701 : vector<2x32xf32>
    %cst_159 = arith.constant 1.000000e+00 : f32
    %703 = vector.broadcast %cst_159 : f32 to vector<2x32xf32>
    %704 = arith.addf %703, %702 : vector<2x32xf32>
    %705 = arith.divf %703, %704 : vector<2x32xf32>
    %706 = vector.extract_strided_slice %689 {offsets = [0, 64], sizes = [2, 32], strides = [1, 1]} : vector<2x96xf32> to vector<2x32xf32>
    %707 = vector.extract_strided_slice %688 {offsets = [0, 64], sizes = [2, 32], strides = [1, 1]} : vector<2x96xf32> to vector<2x32xf32>
    %708 = vector.broadcast %535 : vector<1x32xf32> to vector<2x32xf32>
    %709 = arith.addf %707, %708 : vector<2x32xf32>
    %710 = arith.mulf %697, %709 : vector<2x32xf32>
    %711 = arith.addf %706, %710 : vector<2x32xf32>
    %712 = math.tanh %711 : vector<2x32xf32>
    %cst_160 = arith.constant 1.000000e+00 : f32
    %713 = vector.broadcast %cst_160 : f32 to vector<2x32xf32>
    %714 = arith.subf %713, %705 : vector<2x32xf32>
    %715 = arith.mulf %714, %712 : vector<2x32xf32>
    %716 = arith.mulf %705, %657 : vector<2x32xf32>
    %717 = arith.addf %715, %716 : vector<2x32xf32>
    %cst_161 = arith.constant dense<0.000000e+00> : vector<2x96xf32>
    %718 = tpu.matmul %687, %531, %cst_161 {dimension_numbers = #tpu.dot_dimension_numbers<[1], [0], [0], [1], [0, 0, 1, 1], [], []>} : vector<2x32xf32>, vector<32x96xf32>, vector<2x96xf32> -> vector<2x96xf32>
    %719 = vector.extract_strided_slice %523 {offsets = [6, 0], sizes = [2, 96], strides = [1, 1]} : vector<16x96xf32> to vector<2x96xf32>
    %720 = vector.extract_strided_slice %719 {offsets = [0, 0], sizes = [2, 32], strides = [1, 1]} : vector<2x96xf32> to vector<2x32xf32>
    %721 = vector.extract_strided_slice %718 {offsets = [0, 0], sizes = [2, 32], strides = [1, 1]} : vector<2x96xf32> to vector<2x32xf32>
    %722 = arith.addf %720, %721 : vector<2x32xf32>
    %723 = arith.negf %722 : vector<2x32xf32>
    %724 = math.exp %723 : vector<2x32xf32>
    %cst_162 = arith.constant 1.000000e+00 : f32
    %725 = vector.broadcast %cst_162 : f32 to vector<2x32xf32>
    %726 = arith.addf %725, %724 : vector<2x32xf32>
    %727 = arith.divf %725, %726 : vector<2x32xf32>
    %728 = vector.extract_strided_slice %719 {offsets = [0, 32], sizes = [2, 32], strides = [1, 1]} : vector<2x96xf32> to vector<2x32xf32>
    %729 = vector.extract_strided_slice %718 {offsets = [0, 32], sizes = [2, 32], strides = [1, 1]} : vector<2x96xf32> to vector<2x32xf32>
    %730 = arith.addf %728, %729 : vector<2x32xf32>
    %731 = arith.negf %730 : vector<2x32xf32>
    %732 = math.exp %731 : vector<2x32xf32>
    %cst_163 = arith.constant 1.000000e+00 : f32
    %733 = vector.broadcast %cst_163 : f32 to vector<2x32xf32>
    %734 = arith.addf %733, %732 : vector<2x32xf32>
    %735 = arith.divf %733, %734 : vector<2x32xf32>
    %736 = vector.extract_strided_slice %719 {offsets = [0, 64], sizes = [2, 32], strides = [1, 1]} : vector<2x96xf32> to vector<2x32xf32>
    %737 = vector.extract_strided_slice %718 {offsets = [0, 64], sizes = [2, 32], strides = [1, 1]} : vector<2x96xf32> to vector<2x32xf32>
    %738 = vector.broadcast %534 : vector<1x32xf32> to vector<2x32xf32>
    %739 = arith.addf %737, %738 : vector<2x32xf32>
    %740 = arith.mulf %727, %739 : vector<2x32xf32>
    %741 = arith.addf %736, %740 : vector<2x32xf32>
    %742 = math.tanh %741 : vector<2x32xf32>
    %cst_164 = arith.constant 1.000000e+00 : f32
    %743 = vector.broadcast %cst_164 : f32 to vector<2x32xf32>
    %744 = arith.subf %743, %735 : vector<2x32xf32>
    %745 = arith.mulf %744, %742 : vector<2x32xf32>
    %746 = arith.mulf %735, %687 : vector<2x32xf32>
    %747 = arith.addf %745, %746 : vector<2x32xf32>
    %cst_165 = arith.constant dense<0.000000e+00> : vector<2x96xf32>
    %748 = tpu.matmul %717, %533, %cst_165 {dimension_numbers = #tpu.dot_dimension_numbers<[1], [0], [0], [1], [0, 0, 1, 1], [], []>} : vector<2x32xf32>, vector<32x96xf32>, vector<2x96xf32> -> vector<2x96xf32>
    %749 = vector.extract_strided_slice %529 {offsets = [8, 0], sizes = [2, 96], strides = [1, 1]} : vector<16x96xf32> to vector<2x96xf32>
    %750 = vector.extract_strided_slice %749 {offsets = [0, 0], sizes = [2, 32], strides = [1, 1]} : vector<2x96xf32> to vector<2x32xf32>
    %751 = vector.extract_strided_slice %748 {offsets = [0, 0], sizes = [2, 32], strides = [1, 1]} : vector<2x96xf32> to vector<2x32xf32>
    %752 = arith.addf %750, %751 : vector<2x32xf32>
    %753 = arith.negf %752 : vector<2x32xf32>
    %754 = math.exp %753 : vector<2x32xf32>
    %cst_166 = arith.constant 1.000000e+00 : f32
    %755 = vector.broadcast %cst_166 : f32 to vector<2x32xf32>
    %756 = arith.addf %755, %754 : vector<2x32xf32>
    %757 = arith.divf %755, %756 : vector<2x32xf32>
    %758 = vector.extract_strided_slice %749 {offsets = [0, 32], sizes = [2, 32], strides = [1, 1]} : vector<2x96xf32> to vector<2x32xf32>
    %759 = vector.extract_strided_slice %748 {offsets = [0, 32], sizes = [2, 32], strides = [1, 1]} : vector<2x96xf32> to vector<2x32xf32>
    %760 = arith.addf %758, %759 : vector<2x32xf32>
    %761 = arith.negf %760 : vector<2x32xf32>
    %762 = math.exp %761 : vector<2x32xf32>
    %cst_167 = arith.constant 1.000000e+00 : f32
    %763 = vector.broadcast %cst_167 : f32 to vector<2x32xf32>
    %764 = arith.addf %763, %762 : vector<2x32xf32>
    %765 = arith.divf %763, %764 : vector<2x32xf32>
    %766 = vector.extract_strided_slice %749 {offsets = [0, 64], sizes = [2, 32], strides = [1, 1]} : vector<2x96xf32> to vector<2x32xf32>
    %767 = vector.extract_strided_slice %748 {offsets = [0, 64], sizes = [2, 32], strides = [1, 1]} : vector<2x96xf32> to vector<2x32xf32>
    %768 = vector.broadcast %535 : vector<1x32xf32> to vector<2x32xf32>
    %769 = arith.addf %767, %768 : vector<2x32xf32>
    %770 = arith.mulf %757, %769 : vector<2x32xf32>
    %771 = arith.addf %766, %770 : vector<2x32xf32>
    %772 = math.tanh %771 : vector<2x32xf32>
    %cst_168 = arith.constant 1.000000e+00 : f32
    %773 = vector.broadcast %cst_168 : f32 to vector<2x32xf32>
    %774 = arith.subf %773, %765 : vector<2x32xf32>
    %775 = arith.mulf %774, %772 : vector<2x32xf32>
    %776 = arith.mulf %765, %717 : vector<2x32xf32>
    %777 = arith.addf %775, %776 : vector<2x32xf32>
    %cst_169 = arith.constant dense<0.000000e+00> : vector<2x96xf32>
    %778 = tpu.matmul %747, %531, %cst_169 {dimension_numbers = #tpu.dot_dimension_numbers<[1], [0], [0], [1], [0, 0, 1, 1], [], []>} : vector<2x32xf32>, vector<32x96xf32>, vector<2x96xf32> -> vector<2x96xf32>
    %779 = vector.extract_strided_slice %523 {offsets = [8, 0], sizes = [2, 96], strides = [1, 1]} : vector<16x96xf32> to vector<2x96xf32>
    %780 = vector.extract_strided_slice %779 {offsets = [0, 0], sizes = [2, 32], strides = [1, 1]} : vector<2x96xf32> to vector<2x32xf32>
    %781 = vector.extract_strided_slice %778 {offsets = [0, 0], sizes = [2, 32], strides = [1, 1]} : vector<2x96xf32> to vector<2x32xf32>
    %782 = arith.addf %780, %781 : vector<2x32xf32>
    %783 = arith.negf %782 : vector<2x32xf32>
    %784 = math.exp %783 : vector<2x32xf32>
    %cst_170 = arith.constant 1.000000e+00 : f32
    %785 = vector.broadcast %cst_170 : f32 to vector<2x32xf32>
    %786 = arith.addf %785, %784 : vector<2x32xf32>
    %787 = arith.divf %785, %786 : vector<2x32xf32>
    %788 = vector.extract_strided_slice %779 {offsets = [0, 32], sizes = [2, 32], strides = [1, 1]} : vector<2x96xf32> to vector<2x32xf32>
    %789 = vector.extract_strided_slice %778 {offsets = [0, 32], sizes = [2, 32], strides = [1, 1]} : vector<2x96xf32> to vector<2x32xf32>
    %790 = arith.addf %788, %789 : vector<2x32xf32>
    %791 = arith.negf %790 : vector<2x32xf32>
    %792 = math.exp %791 : vector<2x32xf32>
    %cst_171 = arith.constant 1.000000e+00 : f32
    %793 = vector.broadcast %cst_171 : f32 to vector<2x32xf32>
    %794 = arith.addf %793, %792 : vector<2x32xf32>
    %795 = arith.divf %793, %794 : vector<2x32xf32>
    %796 = vector.extract_strided_slice %779 {offsets = [0, 64], sizes = [2, 32], strides = [1, 1]} : vector<2x96xf32> to vector<2x32xf32>
    %797 = vector.extract_strided_slice %778 {offsets = [0, 64], sizes = [2, 32], strides = [1, 1]} : vector<2x96xf32> to vector<2x32xf32>
    %798 = vector.broadcast %534 : vector<1x32xf32> to vector<2x32xf32>
    %799 = arith.addf %797, %798 : vector<2x32xf32>
    %800 = arith.mulf %787, %799 : vector<2x32xf32>
    %801 = arith.addf %796, %800 : vector<2x32xf32>
    %802 = math.tanh %801 : vector<2x32xf32>
    %cst_172 = arith.constant 1.000000e+00 : f32
    %803 = vector.broadcast %cst_172 : f32 to vector<2x32xf32>
    %804 = arith.subf %803, %795 : vector<2x32xf32>
    %805 = arith.mulf %804, %802 : vector<2x32xf32>
    %806 = arith.mulf %795, %747 : vector<2x32xf32>
    %807 = arith.addf %805, %806 : vector<2x32xf32>
    %cst_173 = arith.constant dense<0.000000e+00> : vector<2x96xf32>
    %808 = tpu.matmul %777, %533, %cst_173 {dimension_numbers = #tpu.dot_dimension_numbers<[1], [0], [0], [1], [0, 0, 1, 1], [], []>} : vector<2x32xf32>, vector<32x96xf32>, vector<2x96xf32> -> vector<2x96xf32>
    %809 = vector.extract_strided_slice %529 {offsets = [6, 0], sizes = [2, 96], strides = [1, 1]} : vector<16x96xf32> to vector<2x96xf32>
    %810 = vector.extract_strided_slice %809 {offsets = [0, 0], sizes = [2, 32], strides = [1, 1]} : vector<2x96xf32> to vector<2x32xf32>
    %811 = vector.extract_strided_slice %808 {offsets = [0, 0], sizes = [2, 32], strides = [1, 1]} : vector<2x96xf32> to vector<2x32xf32>
    %812 = arith.addf %810, %811 : vector<2x32xf32>
    %813 = arith.negf %812 : vector<2x32xf32>
    %814 = math.exp %813 : vector<2x32xf32>
    %cst_174 = arith.constant 1.000000e+00 : f32
    %815 = vector.broadcast %cst_174 : f32 to vector<2x32xf32>
    %816 = arith.addf %815, %814 : vector<2x32xf32>
    %817 = arith.divf %815, %816 : vector<2x32xf32>
    %818 = vector.extract_strided_slice %809 {offsets = [0, 32], sizes = [2, 32], strides = [1, 1]} : vector<2x96xf32> to vector<2x32xf32>
    %819 = vector.extract_strided_slice %808 {offsets = [0, 32], sizes = [2, 32], strides = [1, 1]} : vector<2x96xf32> to vector<2x32xf32>
    %820 = arith.addf %818, %819 : vector<2x32xf32>
    %821 = arith.negf %820 : vector<2x32xf32>
    %822 = math.exp %821 : vector<2x32xf32>
    %cst_175 = arith.constant 1.000000e+00 : f32
    %823 = vector.broadcast %cst_175 : f32 to vector<2x32xf32>
    %824 = arith.addf %823, %822 : vector<2x32xf32>
    %825 = arith.divf %823, %824 : vector<2x32xf32>
    %826 = vector.extract_strided_slice %809 {offsets = [0, 64], sizes = [2, 32], strides = [1, 1]} : vector<2x96xf32> to vector<2x32xf32>
    %827 = vector.extract_strided_slice %808 {offsets = [0, 64], sizes = [2, 32], strides = [1, 1]} : vector<2x96xf32> to vector<2x32xf32>
    %828 = vector.broadcast %535 : vector<1x32xf32> to vector<2x32xf32>
    %829 = arith.addf %827, %828 : vector<2x32xf32>
    %830 = arith.mulf %817, %829 : vector<2x32xf32>
    %831 = arith.addf %826, %830 : vector<2x32xf32>
    %832 = math.tanh %831 : vector<2x32xf32>
    %cst_176 = arith.constant 1.000000e+00 : f32
    %833 = vector.broadcast %cst_176 : f32 to vector<2x32xf32>
    %834 = arith.subf %833, %825 : vector<2x32xf32>
    %835 = arith.mulf %834, %832 : vector<2x32xf32>
    %836 = arith.mulf %825, %777 : vector<2x32xf32>
    %837 = arith.addf %835, %836 : vector<2x32xf32>
    %cst_177 = arith.constant dense<0.000000e+00> : vector<2x96xf32>
    %838 = tpu.matmul %807, %531, %cst_177 {dimension_numbers = #tpu.dot_dimension_numbers<[1], [0], [0], [1], [0, 0, 1, 1], [], []>} : vector<2x32xf32>, vector<32x96xf32>, vector<2x96xf32> -> vector<2x96xf32>
    %839 = vector.extract_strided_slice %523 {offsets = [10, 0], sizes = [2, 96], strides = [1, 1]} : vector<16x96xf32> to vector<2x96xf32>
    %840 = vector.extract_strided_slice %839 {offsets = [0, 0], sizes = [2, 32], strides = [1, 1]} : vector<2x96xf32> to vector<2x32xf32>
    %841 = vector.extract_strided_slice %838 {offsets = [0, 0], sizes = [2, 32], strides = [1, 1]} : vector<2x96xf32> to vector<2x32xf32>
    %842 = arith.addf %840, %841 : vector<2x32xf32>
    %843 = arith.negf %842 : vector<2x32xf32>
    %844 = math.exp %843 : vector<2x32xf32>
    %cst_178 = arith.constant 1.000000e+00 : f32
    %845 = vector.broadcast %cst_178 : f32 to vector<2x32xf32>
    %846 = arith.addf %845, %844 : vector<2x32xf32>
    %847 = arith.divf %845, %846 : vector<2x32xf32>
    %848 = vector.extract_strided_slice %839 {offsets = [0, 32], sizes = [2, 32], strides = [1, 1]} : vector<2x96xf32> to vector<2x32xf32>
    %849 = vector.extract_strided_slice %838 {offsets = [0, 32], sizes = [2, 32], strides = [1, 1]} : vector<2x96xf32> to vector<2x32xf32>
    %850 = arith.addf %848, %849 : vector<2x32xf32>
    %851 = arith.negf %850 : vector<2x32xf32>
    %852 = math.exp %851 : vector<2x32xf32>
    %cst_179 = arith.constant 1.000000e+00 : f32
    %853 = vector.broadcast %cst_179 : f32 to vector<2x32xf32>
    %854 = arith.addf %853, %852 : vector<2x32xf32>
    %855 = arith.divf %853, %854 : vector<2x32xf32>
    %856 = vector.extract_strided_slice %839 {offsets = [0, 64], sizes = [2, 32], strides = [1, 1]} : vector<2x96xf32> to vector<2x32xf32>
    %857 = vector.extract_strided_slice %838 {offsets = [0, 64], sizes = [2, 32], strides = [1, 1]} : vector<2x96xf32> to vector<2x32xf32>
    %858 = vector.broadcast %534 : vector<1x32xf32> to vector<2x32xf32>
    %859 = arith.addf %857, %858 : vector<2x32xf32>
    %860 = arith.mulf %847, %859 : vector<2x32xf32>
    %861 = arith.addf %856, %860 : vector<2x32xf32>
    %862 = math.tanh %861 : vector<2x32xf32>
    %cst_180 = arith.constant 1.000000e+00 : f32
    %863 = vector.broadcast %cst_180 : f32 to vector<2x32xf32>
    %864 = arith.subf %863, %855 : vector<2x32xf32>
    %865 = arith.mulf %864, %862 : vector<2x32xf32>
    %866 = arith.mulf %855, %807 : vector<2x32xf32>
    %867 = arith.addf %865, %866 : vector<2x32xf32>
    %cst_181 = arith.constant dense<0.000000e+00> : vector<2x96xf32>
    %868 = tpu.matmul %837, %533, %cst_181 {dimension_numbers = #tpu.dot_dimension_numbers<[1], [0], [0], [1], [0, 0, 1, 1], [], []>} : vector<2x32xf32>, vector<32x96xf32>, vector<2x96xf32> -> vector<2x96xf32>
    %869 = vector.extract_strided_slice %529 {offsets = [4, 0], sizes = [2, 96], strides = [1, 1]} : vector<16x96xf32> to vector<2x96xf32>
    %870 = vector.extract_strided_slice %869 {offsets = [0, 0], sizes = [2, 32], strides = [1, 1]} : vector<2x96xf32> to vector<2x32xf32>
    %871 = vector.extract_strided_slice %868 {offsets = [0, 0], sizes = [2, 32], strides = [1, 1]} : vector<2x96xf32> to vector<2x32xf32>
    %872 = arith.addf %870, %871 : vector<2x32xf32>
    %873 = arith.negf %872 : vector<2x32xf32>
    %874 = math.exp %873 : vector<2x32xf32>
    %cst_182 = arith.constant 1.000000e+00 : f32
    %875 = vector.broadcast %cst_182 : f32 to vector<2x32xf32>
    %876 = arith.addf %875, %874 : vector<2x32xf32>
    %877 = arith.divf %875, %876 : vector<2x32xf32>
    %878 = vector.extract_strided_slice %869 {offsets = [0, 32], sizes = [2, 32], strides = [1, 1]} : vector<2x96xf32> to vector<2x32xf32>
    %879 = vector.extract_strided_slice %868 {offsets = [0, 32], sizes = [2, 32], strides = [1, 1]} : vector<2x96xf32> to vector<2x32xf32>
    %880 = arith.addf %878, %879 : vector<2x32xf32>
    %881 = arith.negf %880 : vector<2x32xf32>
    %882 = math.exp %881 : vector<2x32xf32>
    %cst_183 = arith.constant 1.000000e+00 : f32
    %883 = vector.broadcast %cst_183 : f32 to vector<2x32xf32>
    %884 = arith.addf %883, %882 : vector<2x32xf32>
    %885 = arith.divf %883, %884 : vector<2x32xf32>
    %886 = vector.extract_strided_slice %869 {offsets = [0, 64], sizes = [2, 32], strides = [1, 1]} : vector<2x96xf32> to vector<2x32xf32>
    %887 = vector.extract_strided_slice %868 {offsets = [0, 64], sizes = [2, 32], strides = [1, 1]} : vector<2x96xf32> to vector<2x32xf32>
    %888 = vector.broadcast %535 : vector<1x32xf32> to vector<2x32xf32>
    %889 = arith.addf %887, %888 : vector<2x32xf32>
    %890 = arith.mulf %877, %889 : vector<2x32xf32>
    %891 = arith.addf %886, %890 : vector<2x32xf32>
    %892 = math.tanh %891 : vector<2x32xf32>
    %cst_184 = arith.constant 1.000000e+00 : f32
    %893 = vector.broadcast %cst_184 : f32 to vector<2x32xf32>
    %894 = arith.subf %893, %885 : vector<2x32xf32>
    %895 = arith.mulf %894, %892 : vector<2x32xf32>
    %896 = arith.mulf %885, %837 : vector<2x32xf32>
    %897 = arith.addf %895, %896 : vector<2x32xf32>
    %cst_185 = arith.constant dense<0.000000e+00> : vector<2x96xf32>
    %898 = tpu.matmul %867, %531, %cst_185 {dimension_numbers = #tpu.dot_dimension_numbers<[1], [0], [0], [1], [0, 0, 1, 1], [], []>} : vector<2x32xf32>, vector<32x96xf32>, vector<2x96xf32> -> vector<2x96xf32>
    %899 = vector.extract_strided_slice %523 {offsets = [12, 0], sizes = [2, 96], strides = [1, 1]} : vector<16x96xf32> to vector<2x96xf32>
    %900 = vector.extract_strided_slice %899 {offsets = [0, 0], sizes = [2, 32], strides = [1, 1]} : vector<2x96xf32> to vector<2x32xf32>
    %901 = vector.extract_strided_slice %898 {offsets = [0, 0], sizes = [2, 32], strides = [1, 1]} : vector<2x96xf32> to vector<2x32xf32>
    %902 = arith.addf %900, %901 : vector<2x32xf32>
    %903 = arith.negf %902 : vector<2x32xf32>
    %904 = math.exp %903 : vector<2x32xf32>
    %cst_186 = arith.constant 1.000000e+00 : f32
    %905 = vector.broadcast %cst_186 : f32 to vector<2x32xf32>
    %906 = arith.addf %905, %904 : vector<2x32xf32>
    %907 = arith.divf %905, %906 : vector<2x32xf32>
    %908 = vector.extract_strided_slice %899 {offsets = [0, 32], sizes = [2, 32], strides = [1, 1]} : vector<2x96xf32> to vector<2x32xf32>
    %909 = vector.extract_strided_slice %898 {offsets = [0, 32], sizes = [2, 32], strides = [1, 1]} : vector<2x96xf32> to vector<2x32xf32>
    %910 = arith.addf %908, %909 : vector<2x32xf32>
    %911 = arith.negf %910 : vector<2x32xf32>
    %912 = math.exp %911 : vector<2x32xf32>
    %cst_187 = arith.constant 1.000000e+00 : f32
    %913 = vector.broadcast %cst_187 : f32 to vector<2x32xf32>
    %914 = arith.addf %913, %912 : vector<2x32xf32>
    %915 = arith.divf %913, %914 : vector<2x32xf32>
    %916 = vector.extract_strided_slice %899 {offsets = [0, 64], sizes = [2, 32], strides = [1, 1]} : vector<2x96xf32> to vector<2x32xf32>
    %917 = vector.extract_strided_slice %898 {offsets = [0, 64], sizes = [2, 32], strides = [1, 1]} : vector<2x96xf32> to vector<2x32xf32>
    %918 = vector.broadcast %534 : vector<1x32xf32> to vector<2x32xf32>
    %919 = arith.addf %917, %918 : vector<2x32xf32>
    %920 = arith.mulf %907, %919 : vector<2x32xf32>
    %921 = arith.addf %916, %920 : vector<2x32xf32>
    %922 = math.tanh %921 : vector<2x32xf32>
    %cst_188 = arith.constant 1.000000e+00 : f32
    %923 = vector.broadcast %cst_188 : f32 to vector<2x32xf32>
    %924 = arith.subf %923, %915 : vector<2x32xf32>
    %925 = arith.mulf %924, %922 : vector<2x32xf32>
    %926 = arith.mulf %915, %867 : vector<2x32xf32>
    %927 = arith.addf %925, %926 : vector<2x32xf32>
    %cst_189 = arith.constant dense<0.000000e+00> : vector<2x96xf32>
    %928 = tpu.matmul %897, %533, %cst_189 {dimension_numbers = #tpu.dot_dimension_numbers<[1], [0], [0], [1], [0, 0, 1, 1], [], []>} : vector<2x32xf32>, vector<32x96xf32>, vector<2x96xf32> -> vector<2x96xf32>
    %929 = vector.extract_strided_slice %529 {offsets = [2, 0], sizes = [2, 96], strides = [1, 1]} : vector<16x96xf32> to vector<2x96xf32>
    %930 = vector.extract_strided_slice %929 {offsets = [0, 0], sizes = [2, 32], strides = [1, 1]} : vector<2x96xf32> to vector<2x32xf32>
    %931 = vector.extract_strided_slice %928 {offsets = [0, 0], sizes = [2, 32], strides = [1, 1]} : vector<2x96xf32> to vector<2x32xf32>
    %932 = arith.addf %930, %931 : vector<2x32xf32>
    %933 = arith.negf %932 : vector<2x32xf32>
    %934 = math.exp %933 : vector<2x32xf32>
    %cst_190 = arith.constant 1.000000e+00 : f32
    %935 = vector.broadcast %cst_190 : f32 to vector<2x32xf32>
    %936 = arith.addf %935, %934 : vector<2x32xf32>
    %937 = arith.divf %935, %936 : vector<2x32xf32>
    %938 = vector.extract_strided_slice %929 {offsets = [0, 32], sizes = [2, 32], strides = [1, 1]} : vector<2x96xf32> to vector<2x32xf32>
    %939 = vector.extract_strided_slice %928 {offsets = [0, 32], sizes = [2, 32], strides = [1, 1]} : vector<2x96xf32> to vector<2x32xf32>
    %940 = arith.addf %938, %939 : vector<2x32xf32>
    %941 = arith.negf %940 : vector<2x32xf32>
    %942 = math.exp %941 : vector<2x32xf32>
    %cst_191 = arith.constant 1.000000e+00 : f32
    %943 = vector.broadcast %cst_191 : f32 to vector<2x32xf32>
    %944 = arith.addf %943, %942 : vector<2x32xf32>
    %945 = arith.divf %943, %944 : vector<2x32xf32>
    %946 = vector.extract_strided_slice %929 {offsets = [0, 64], sizes = [2, 32], strides = [1, 1]} : vector<2x96xf32> to vector<2x32xf32>
    %947 = vector.extract_strided_slice %928 {offsets = [0, 64], sizes = [2, 32], strides = [1, 1]} : vector<2x96xf32> to vector<2x32xf32>
    %948 = vector.broadcast %535 : vector<1x32xf32> to vector<2x32xf32>
    %949 = arith.addf %947, %948 : vector<2x32xf32>
    %950 = arith.mulf %937, %949 : vector<2x32xf32>
    %951 = arith.addf %946, %950 : vector<2x32xf32>
    %952 = math.tanh %951 : vector<2x32xf32>
    %cst_192 = arith.constant 1.000000e+00 : f32
    %953 = vector.broadcast %cst_192 : f32 to vector<2x32xf32>
    %954 = arith.subf %953, %945 : vector<2x32xf32>
    %955 = arith.mulf %954, %952 : vector<2x32xf32>
    %956 = arith.mulf %945, %897 : vector<2x32xf32>
    %957 = arith.addf %955, %956 : vector<2x32xf32>
    %cst_193 = arith.constant dense<0.000000e+00> : vector<2x96xf32>
    %958 = tpu.matmul %927, %531, %cst_193 {dimension_numbers = #tpu.dot_dimension_numbers<[1], [0], [0], [1], [0, 0, 1, 1], [], []>} : vector<2x32xf32>, vector<32x96xf32>, vector<2x96xf32> -> vector<2x96xf32>
    %959 = vector.extract_strided_slice %523 {offsets = [14, 0], sizes = [2, 96], strides = [1, 1]} : vector<16x96xf32> to vector<2x96xf32>
    %960 = vector.extract_strided_slice %959 {offsets = [0, 0], sizes = [2, 32], strides = [1, 1]} : vector<2x96xf32> to vector<2x32xf32>
    %961 = vector.extract_strided_slice %958 {offsets = [0, 0], sizes = [2, 32], strides = [1, 1]} : vector<2x96xf32> to vector<2x32xf32>
    %962 = arith.addf %960, %961 : vector<2x32xf32>
    %963 = arith.negf %962 : vector<2x32xf32>
    %964 = math.exp %963 : vector<2x32xf32>
    %cst_194 = arith.constant 1.000000e+00 : f32
    %965 = vector.broadcast %cst_194 : f32 to vector<2x32xf32>
    %966 = arith.addf %965, %964 : vector<2x32xf32>
    %967 = arith.divf %965, %966 : vector<2x32xf32>
    %968 = vector.extract_strided_slice %959 {offsets = [0, 32], sizes = [2, 32], strides = [1, 1]} : vector<2x96xf32> to vector<2x32xf32>
    %969 = vector.extract_strided_slice %958 {offsets = [0, 32], sizes = [2, 32], strides = [1, 1]} : vector<2x96xf32> to vector<2x32xf32>
    %970 = arith.addf %968, %969 : vector<2x32xf32>
    %971 = arith.negf %970 : vector<2x32xf32>
    %972 = math.exp %971 : vector<2x32xf32>
    %cst_195 = arith.constant 1.000000e+00 : f32
    %973 = vector.broadcast %cst_195 : f32 to vector<2x32xf32>
    %974 = arith.addf %973, %972 : vector<2x32xf32>
    %975 = arith.divf %973, %974 : vector<2x32xf32>
    %976 = vector.extract_strided_slice %959 {offsets = [0, 64], sizes = [2, 32], strides = [1, 1]} : vector<2x96xf32> to vector<2x32xf32>
    %977 = vector.extract_strided_slice %958 {offsets = [0, 64], sizes = [2, 32], strides = [1, 1]} : vector<2x96xf32> to vector<2x32xf32>
    %978 = vector.broadcast %534 : vector<1x32xf32> to vector<2x32xf32>
    %979 = arith.addf %977, %978 : vector<2x32xf32>
    %980 = arith.mulf %967, %979 : vector<2x32xf32>
    %981 = arith.addf %976, %980 : vector<2x32xf32>
    %982 = math.tanh %981 : vector<2x32xf32>
    %cst_196 = arith.constant 1.000000e+00 : f32
    %983 = vector.broadcast %cst_196 : f32 to vector<2x32xf32>
    %984 = arith.subf %983, %975 : vector<2x32xf32>
    %985 = arith.mulf %984, %982 : vector<2x32xf32>
    %986 = arith.mulf %975, %927 : vector<2x32xf32>
    %987 = arith.addf %985, %986 : vector<2x32xf32>
    %cst_197 = arith.constant dense<0.000000e+00> : vector<2x96xf32>
    %988 = tpu.matmul %957, %533, %cst_197 {dimension_numbers = #tpu.dot_dimension_numbers<[1], [0], [0], [1], [0, 0, 1, 1], [], []>} : vector<2x32xf32>, vector<32x96xf32>, vector<2x96xf32> -> vector<2x96xf32>
    %989 = vector.extract_strided_slice %529 {offsets = [0, 0], sizes = [2, 96], strides = [1, 1]} : vector<16x96xf32> to vector<2x96xf32>
    %990 = vector.extract_strided_slice %989 {offsets = [0, 0], sizes = [2, 32], strides = [1, 1]} : vector<2x96xf32> to vector<2x32xf32>
    %991 = vector.extract_strided_slice %988 {offsets = [0, 0], sizes = [2, 32], strides = [1, 1]} : vector<2x96xf32> to vector<2x32xf32>
    %992 = arith.addf %990, %991 : vector<2x32xf32>
    %993 = arith.negf %992 : vector<2x32xf32>
    %994 = math.exp %993 : vector<2x32xf32>
    %cst_198 = arith.constant 1.000000e+00 : f32
    %995 = vector.broadcast %cst_198 : f32 to vector<2x32xf32>
    %996 = arith.addf %995, %994 : vector<2x32xf32>
    %997 = arith.divf %995, %996 : vector<2x32xf32>
    %998 = vector.extract_strided_slice %989 {offsets = [0, 32], sizes = [2, 32], strides = [1, 1]} : vector<2x96xf32> to vector<2x32xf32>
    %999 = vector.extract_strided_slice %988 {offsets = [0, 32], sizes = [2, 32], strides = [1, 1]} : vector<2x96xf32> to vector<2x32xf32>
    %1000 = arith.addf %998, %999 : vector<2x32xf32>
    %1001 = arith.negf %1000 : vector<2x32xf32>
    %1002 = math.exp %1001 : vector<2x32xf32>
    %cst_199 = arith.constant 1.000000e+00 : f32
    %1003 = vector.broadcast %cst_199 : f32 to vector<2x32xf32>
    %1004 = arith.addf %1003, %1002 : vector<2x32xf32>
    %1005 = arith.divf %1003, %1004 : vector<2x32xf32>
    %1006 = vector.extract_strided_slice %989 {offsets = [0, 64], sizes = [2, 32], strides = [1, 1]} : vector<2x96xf32> to vector<2x32xf32>
    %1007 = vector.extract_strided_slice %988 {offsets = [0, 64], sizes = [2, 32], strides = [1, 1]} : vector<2x96xf32> to vector<2x32xf32>
    %1008 = vector.broadcast %535 : vector<1x32xf32> to vector<2x32xf32>
    %1009 = arith.addf %1007, %1008 : vector<2x32xf32>
    %1010 = arith.mulf %997, %1009 : vector<2x32xf32>
    %1011 = arith.addf %1006, %1010 : vector<2x32xf32>
    %1012 = math.tanh %1011 : vector<2x32xf32>
    %cst_200 = arith.constant 1.000000e+00 : f32
    %1013 = vector.broadcast %cst_200 : f32 to vector<2x32xf32>
    %1014 = arith.subf %1013, %1005 : vector<2x32xf32>
    %1015 = arith.mulf %1014, %1012 : vector<2x32xf32>
    %1016 = arith.mulf %1005, %957 : vector<2x32xf32>
    %1017 = arith.addf %1015, %1016 : vector<2x32xf32>
    %c0_201 = arith.constant 0 : index
    %c0_202 = arith.constant 0 : index
    %1018 = vector.load %arg9[%c0_201, %c0_202] : memref<2x64xf32, #tpu.memory_space<vmem>>, vector<2x32xf32>
    tpu.vector_store %arg9[%c0_201, %c0_202], %987 {strides = array<i32>} : memref<2x64xf32, #tpu.memory_space<vmem>>, vector<2x32xf32>,
    %c0_203 = arith.constant 0 : index
    %c32_204 = arith.constant 32 : index
    %1019 = vector.load %arg9[%c0_203, %c32_204] : memref<2x64xf32, #tpu.memory_space<vmem>>, vector<2x32xf32>
    tpu.vector_store %arg9[%c0_203, %c32_204], %1017 {strides = array<i32>} : memref<2x64xf32, #tpu.memory_space<vmem>>, vector<2x32xf32>,
    return
  }
}

</mosaic_0001>

<llo_original>
// kernel: tpu_custom_call.1
$region0: #{tpu_custom_call.1}
  #allocation0 [shape = 'u32[]', space=smem, size = 0x4, offset = 0x4, fixed_abs, tag = 'smem constant byte address 0x4 - core index']
  #allocation1 [shape = 'u32[72,128]{1,0:T(1,128)}', space=vmem, size = 0x9000, scoped, tag = 'internal scratch']
  #allocation2 [shape = 'f32[16,64]{1,0:T(8,128)}', space=vmem, size = 0x2000, scoped, tag = 'scratch operand']
  %s0 = inlined_call_operand.vmem [shape: f32[16,5], index: 0, kind: input, shape index: {}]
  %s1 = inlined_call_operand.vmem [shape: f32[2,5,96], index: 1, kind: input, shape index: {}]
  %s2 = inlined_call_operand.hbm [shape: f32[2,32,96], index: 2, kind: input, shape index: {}]
  %s3 = inlined_call_operand.vmem [shape: f32[2,96], index: 3, kind: input, shape index: {}]
  %s4 = inlined_call_operand.vmem [shape: f32[2,32], index: 4, kind: input, shape index: {}]
  %s5 = inlined_call_operand.hbm [shape: f32[2,64,96], index: 5, kind: input, shape index: {}]
  %s6 = inlined_call_operand.hbm [shape: f32[2,32,96], index: 6, kind: input, shape index: {}]
  %s7 = inlined_call_operand.vmem [shape: f32[2,96], index: 7, kind: input, shape index: {}]
  %s8 = inlined_call_operand.vmem [shape: f32[2,32], index: 8, kind: input, shape index: {}]
  %s9 = inlined_call_operand.hbm [shape: f32[2,64], index: 9, kind: output, shape index: {}]
  %s10 = sld [smem:[#allocation0]]
  $region58: #{tpu_custom_call.1} parent=0
    _
  %s12 = ssub.s32 1, %s10
  %s13 = scalar_select 0, %s12, %s10
  $region1: #{tpu_custom_call.1} parent=0
    #allocation3 [shape = 'u8[32768]{0}', space=vmem, size = 0x8000, scoped, tag = 'input window, operand 2, single buffered']
    #allocation4 [shape = 's32[1]{0}', space=sflag, size = 0x4, scoped, tag = 'scoped memory for tpu_custom_call.1']
    #allocation5 [shape = 's32[1]{0}', space=sflag, size = 0x4, scoped, tag = 'scoped memory for tpu_custom_call.1']
    #allocation6 [shape = 'u8[65536]{0}', space=vmem, size = 0x10000, scoped, tag = 'input window, operand 5, single buffered']
    #allocation7 [shape = 's32[1]{0}', space=sflag, size = 0x4, scoped, tag = 'scoped memory for tpu_custom_call.1']
    #allocation8 [shape = 'u8[32768]{0}', space=vmem, size = 0x8000, scoped, tag = 'input window, operand 6, single buffered']
    #allocation9 [shape = 'u8[1024]{0}', space=vmem, size = 0x400, scoped, tag = 'output window, operand 0, single buffered']
    %14 = vsyncpa [#allocation4], 0
    %15 = vsyncpa [#allocation7], 0
    %16 = vsyncpa [#allocation5], 0
    // Predicated region
    $region2: #{tpu_custom_call.1} parent=1 // pred_check
      _
    $region3: #{tpu_custom_call.1} parent=1 // pred_check_branch
      %18 = sbr.rel (0) target = $region5
    $region4: #{tpu_custom_call.1} parent=1 // pred_region
      _
    $region5: #{tpu_custom_call.1} parent=1 // pred_fallthru
      _
    // Predicated region
    $region6: #{tpu_custom_call.1} parent=1 // pred_check
      _
    $region7: #{tpu_custom_call.1} parent=1 // pred_check_branch
      %20 = sbr.rel (0) target = $region9
    $region8: #{tpu_custom_call.1} parent=1 // pred_region
      _
    $region9: #{tpu_custom_call.1} parent=1 // pred_fallthru
      _
    // Predicated region
    $region10: #{tpu_custom_call.1} parent=1 // pred_check
      _
    $region11: #{tpu_custom_call.1} parent=1 // pred_check_branch
      %22 = sbr.rel (0) target = $region13
    $region12: #{tpu_custom_call.1} parent=1 // pred_region
      %24 = vsyncadd [#allocation4], 0
      %s25 = sshll.u32 %s2, 4
      %s26 = int_to_ptr.hbm [resolvable:$true] %s25
      %s27 = sshll.u32 [#allocation3], 4
      %s28 = int_to_ptr.vmem [resolvable:$true] %s27
      %33 = dma.hbm_to_vmem [thread:$0]  %s26, 1024, %s28, [#allocation4], 128, 128, 8
    $region13: #{tpu_custom_call.1} parent=1 // pred_fallthru
      _
    // Predicated region
    $region14: #{tpu_custom_call.1} parent=1 // pred_check
      _
    $region15: #{tpu_custom_call.1} parent=1 // pred_check_branch
      %35 = sbr.rel (0) target = $region17
    $region16: #{tpu_custom_call.1} parent=1 // pred_region
      _
    $region17: #{tpu_custom_call.1} parent=1 // pred_fallthru
      _
    // Predicated region
    $region18: #{tpu_custom_call.1} parent=1 // pred_check
      _
    $region19: #{tpu_custom_call.1} parent=1 // pred_check_branch
      %37 = sbr.rel (0) target = $region21
    $region20: #{tpu_custom_call.1} parent=1 // pred_region
      _
    $region21: #{tpu_custom_call.1} parent=1 // pred_fallthru
      _
    // Predicated region
    $region22: #{tpu_custom_call.1} parent=1 // pred_check
      _
    $region23: #{tpu_custom_call.1} parent=1 // pred_check_branch
      %39 = sbr.rel (0) target = $region25
    $region24: #{tpu_custom_call.1} parent=1 // pred_region
      %41 = vsyncadd [#allocation7], 0
      %s42 = sshll.u32 %s5, 4
      %s43 = int_to_ptr.hbm [resolvable:$true] %s42
      %s44 = sshll.u32 [#allocation6], 4
      %s45 = int_to_ptr.vmem [resolvable:$true] %s44
      %50 = dma.hbm_to_vmem [thread:$0]  %s43, 2048, %s45, [#allocation7], 128, 128, 8
    $region25: #{tpu_custom_call.1} parent=1 // pred_fallthru
      _
    // Predicated region
    $region26: #{tpu_custom_call.1} parent=1 // pred_check
      _
    $region27: #{tpu_custom_call.1} parent=1 // pred_check_branch
      %52 = sbr.rel (0) target = $region29
    $region28: #{tpu_custom_call.1} parent=1 // pred_region
      %54 = vsyncadd [#allocation7], 0
      %s55 = sshll.u32 %s6, 4
      %s56 = int_to_ptr.hbm [resolvable:$true] %s55
      %s57 = sshll.u32 [#allocation8], 4
      %s58 = int_to_ptr.vmem [resolvable:$true] %s57
      %63 = dma.hbm_to_vmem [thread:$0]  %s56, 1024, %s58, [#allocation7], 128, 128, 8
    $region29: #{tpu_custom_call.1} parent=1 // pred_fallthru
      _
    // Predicated region
    $region30: #{tpu_custom_call.1} parent=1 // pred_check
      _
    $region31: #{tpu_custom_call.1} parent=1 // pred_check_branch
      %65 = sbr.rel (0) target = $region33
    $region32: #{tpu_custom_call.1} parent=1 // pred_region
      _
    $region33: #{tpu_custom_call.1} parent=1 // pred_fallthru
      _
    // Predicated region
    $region34: #{tpu_custom_call.1} parent=1 // pred_check
      _
    $region35: #{tpu_custom_call.1} parent=1 // pred_check_branch
      %67 = sbr.rel (0) target = $region37
    $region36: #{tpu_custom_call.1} parent=1 // pred_region
      _
    $region37: #{tpu_custom_call.1} parent=1 // pred_fallthru
      _
    // Predicated region
    $region38: #{tpu_custom_call.1} parent=1 // pred_check
      _
    $region39: #{tpu_custom_call.1} parent=1 // pred_check_branch
      %69 = sbr.rel (0) target = $region41
    $region40: #{tpu_custom_call.1} parent=1 // pred_region
      %71 = dma.done [#allocation4], 1024
    $region41: #{tpu_custom_call.1} parent=1 // pred_fallthru
      _
    // Predicated region
    $region42: #{tpu_custom_call.1} parent=1 // pred_check
      _
    $region43: #{tpu_custom_call.1} parent=1 // pred_check_branch
      %73 = sbr.rel (0) target = $region45
    $region44: #{tpu_custom_call.1} parent=1 // pred_region
      %75 = dma.done [#allocation7], 2048
    $region45: #{tpu_custom_call.1} parent=1 // pred_fallthru
      _
    // Predicated region
    $region46: #{tpu_custom_call.1} parent=1 // pred_check
      _
    $region47: #{tpu_custom_call.1} parent=1 // pred_check_branch
      %77 = sbr.rel (0) target = $region49
    $region48: #{tpu_custom_call.1} parent=1 // pred_region
      %79 = dma.done [#allocation7], 1024
    $region49: #{tpu_custom_call.1} parent=1 // pred_fallthru
      _
    %v80 = vld [vmem:[%s0] sm:$0xff]
    %v81 = vld [vmem:[%s0 + $0x8] sm:$0xff]
    %v82 = vld [vmem:[%s1] sm:$0x1f]
    %v83 = vld [vmem:[%s3] sm:$0x1]
    %v84 = vperm.slane %v83, 0
    %vm85 = vcmask 39936
    %v87 = vsel %vm85, %v80, 0
    %v90 = vsel %vm85, %v81, 0
    %vm92 = vcmask 1044480
    %v94 = vsel %vm92, %v82, 0
    %96 = vmatpush.msra.mxu0 0.0
    %97 = vmatpush.msra.mxu0 0.0
    %98 = vmatpush.msra.mxu0 0.0
    %99 = vmatpush.msra.mxu0 0.0
    %100 = vmatpush.msra.mxu0 0.0
    %101 = vmatpush.msra.mxu0 0.0
    %102 = vmatpush.msra.mxu0 0.0
    %103 = vmatpush.msra.mxu0 0.0
    %104 = vmatpush.msra.mxu0 0.0
    %105 = vmatpush.msra.mxu0 0.0
    %106 = vmatpush.msra.mxu0 0.0
    %107 = vmatpush.msra.mxu0 0.0
    %108 = vmatpush.msra.mxu0 0.0
    %109 = vmatpush.msra.mxu0 0.0
    %110 = vmatpush.msra.mxu0 0.0
    %111 = vmatpush.msra.mxu0 %v94
    %112 = vmatmul.f32.gmra.mxu0 %v87
    %v113 = vpop.f32.mrf.mxu0
    %v114 = vadd.f32 %v84, %v113
    %115 = vmatmul.f32.gmra.mxu0 %v90
    %v116 = vpop.f32.mrf.mxu0
    %v117 = vadd.f32 %v84, %v116
    %118 = vdwg.mxu0
    %s119 = scalar_lea.vmem %s1, 8
    %v120 = vld [vmem:[%s119] sm:$0x1f]
    %v121 = vld [vmem:[%s3 + $0x1] sm:$0x1]
    %v122 = vperm.slane %v121, 0
    %v124 = vsel %vm92, %v120, 0
    %126 = vmatpush.msra.mxu0 0.0
    %127 = vmatpush.msra.mxu0 0.0
    %128 = vmatpush.msra.mxu0 0.0
    %129 = vmatpush.msra.mxu0 0.0
    %130 = vmatpush.msra.mxu0 0.0
    %131 = vmatpush.msra.mxu0 0.0
    %132 = vmatpush.msra.mxu0 0.0
    %133 = vmatpush.msra.mxu0 0.0
    %134 = vmatpush.msra.mxu0 0.0
    %135 = vmatpush.msra.mxu0 0.0
    %136 = vmatpush.msra.mxu0 0.0
    %137 = vmatpush.msra.mxu0 0.0
    %138 = vmatpush.msra.mxu0 0.0
    %139 = vmatpush.msra.mxu0 0.0
    %140 = vmatpush.msra.mxu0 0.0
    %141 = vmatpush.msra.mxu0 %v124
    %142 = vmatmul.f32.gmra.mxu0 %v87
    %v143 = vpop.f32.mrf.mxu0
    %v144 = vadd.f32 %v122, %v143
    %145 = vmatmul.f32.gmra.mxu0 %v90
    %v146 = vpop.f32.mrf.mxu0
    %v147 = vadd.f32 %v122, %v146
    %148 = vdwg.mxu0
    %v149 = vld [vmem:[#allocation3] sm:$0xff]
    %v150 = vld [vmem:[#allocation3 + $0x8] sm:$0xff]
    %v151 = vld [vmem:[#allocation3 + $0x10] sm:$0xff]
    %v152 = vld [vmem:[#allocation3 + $0x18] sm:$0xff]
    %s153 = scalar_lea.vmem [#allocation3], 32
    %v154 = vld [vmem:[%s153] sm:$0xff]
    %v155 = vld [vmem:[%s153 + $0x8] sm:$0xff]
    %v156 = vld [vmem:[%s153 + $0x10] sm:$0xff]
    %v157 = vld [vmem:[%s153 + $0x18] sm:$0xff]
    %v158 = vld [vmem:[%s4] sm:$0x1]
    %v159 = vld [vmem:[%s4 + $0x1] sm:$0x1]
    %vm160 = vcmask 261120
    %v162 = vsel %vm160, 0.0, 0
    %164 = vmatpush.msra.mxu0 0.0
    %165 = vmatpush.msra.mxu0 0.0
    %166 = vmatpush.msra.mxu0 0.0
    %167 = vmatpush.msra.mxu0 0.0
    %168 = vmatpush.msra.mxu0 0.0
    %169 = vmatpush.msra.mxu0 0.0
    %170 = vmatpush.msra.mxu0 0.0
    %171 = vmatpush.msra.mxu0 0.0
    %172 = vmatpush.msra.mxu0 0.0
    %173 = vmatpush.msra.mxu0 0.0
    %174 = vmatpush.msra.mxu0 0.0
    %175 = vmatpush.msra.mxu0 0.0
    %176 = vmatpush.msra.mxu0 %v152
    %177 = vmatpush.msra.mxu0 %v151
    %178 = vmatpush.msra.mxu0 %v150
    %179 = vmatpush.msra.mxu0 %v149
    %180 = vmatmul.f32.gmra.mxu0 %v162
    %v181 = vpop.f32.mrf.mxu0
    %v182 = vadd.f32 0.0, %v181
    %183 = vdwg.mxu0
    %v184 = vadd.f32 %v114, %v182
    %v185 = vxor.u32 %v184, 2147483648
    %v186 = vmul.f32 %v185, 1.442695
    %v187 = vpow.pop %v186
    %v188 = vadd.f32 %v187, 1.0
    %v189 = vrcp.pop %v188
    %v190 = vmul.f32 %v188, %v189
    %v191 = vsub.f32 1.0, %v190
    %v192 = vmul.f32 %v189, %v191
    %v193 = vadd.f32 %v189, %v192
    %vm194 = vweird.f32 %v188
    %vm195 = vweird.f32 %v189
    %vm196 = vmor %vm194, %vm195
    %v197 = vsel %vm196, %v189, %v193
    %v198 = vand.u32 2147483647, %v188
    %vm199 = vcmp.eq.f32.partialorder %v198, 8.507059e+37
    %v200 = vand.u32 %v188, 2147483648
    %v201 = vor.u32 1.1754944e-38, %v200
    %v202 = vsel %vm199, %v201, %v197
    %v203 = vmul.f32 1.0, %v202
    %v204 = vperm.slane %v158, 0
    %206 = vrot.lane.b32.xlu0 %v204, 64
    %v207 = vpop.permute.xlu0 %206
    %v209 = vadd.f32 %v182, %v207
    %211 = vrot.lane.b32.xlu0 %v209, 64
    %v212 = vpop.permute.xlu0 %211
    %v214 = vmul.f32 %v203, %v212
    %216 = vrot.lane.b32.xlu0 %v214, 64
    %v217 = vpop.permute.xlu0 %216
    %v219 = vadd.f32 %v114, %v217
    %v220 = vtanh.pop %v219
    %v221 = vsub.f32 1.0, %v203
    %223 = vrot.lane.b32.xlu0 %v220, 96
    %v224 = vpop.permute.xlu0 %223
    %v226 = vmul.f32 %v221, %v224
    %v227 = vmul.f32 %v203, 0.0
    %v228 = vadd.f32 %v226, %v227
    %229 = vmatpush.msra.mxu0 0.0
    %230 = vmatpush.msra.mxu0 0.0
    %231 = vmatpush.msra.mxu0 0.0
    %232 = vmatpush.msra.mxu0 0.0
    %233 = vmatpush.msra.mxu0 0.0
    %234 = vmatpush.msra.mxu0 0.0
    %235 = vmatpush.msra.mxu0 0.0
    %236 = vmatpush.msra.mxu0 0.0
    %237 = vmatpush.msra.mxu0 0.0
    %238 = vmatpush.msra.mxu0 0.0
    %239 = vmatpush.msra.mxu0 0.0
    %240 = vmatpush.msra.mxu0 0.0
    %241 = vmatpush.msra.mxu0 %v157
    %242 = vmatpush.msra.mxu0 %v156
    %243 = vmatpush.msra.mxu0 %v155
    %244 = vmatpush.msra.mxu0 %v154
    %245 = vmatmul.f32.gmra.mxu0 %v162
    %v246 = vpop.f32.mrf.mxu0
    %v247 = vadd.f32 0.0, %v246
    %248 = vdwg.mxu0
    %v250 = vrot.slane %v247, 2
    %v252 = vadd.f32 %v147, %v250
    %v253 = vxor.u32 %v252, 2147483648
    %v254 = vmul.f32 %v253, 1.442695
    %v255 = vpow.pop %v254
    %v256 = vadd.f32 %v255, 1.0
    %v257 = vrcp.pop %v256
    %v258 = vmul.f32 %v256, %v257
    %v259 = vsub.f32 1.0, %v258
    %v260 = vmul.f32 %v257, %v259
    %v261 = vadd.f32 %v257, %v260
    %vm262 = vweird.f32 %v256
    %vm263 = vweird.f32 %v257
    %vm264 = vmor %vm262, %vm263
    %v265 = vsel %vm264, %v257, %v261
    %v266 = vand.u32 2147483647, %v256
    %vm267 = vcmp.eq.f32.partialorder %v266, 8.507059e+37
    %v268 = vand.u32 %v256, 2147483648
    %v269 = vor.u32 1.1754944e-38, %v268
    %v270 = vsel %vm267, %v269, %v265
    %v271 = vmul.f32 1.0, %v270
    %v272 = vperm.slane %v159, 0
    %274 = vrot.lane.b32.xlu0 %v272, 64
    %v275 = vpop.permute.xlu0 %274
    %v277 = vadd.f32 %v247, %v275
    %v279 = vrot.slane %v277, 2
    %280 = vrot.lane.b32.xlu0 %v279, 64
    %v281 = vpop.permute.xlu0 %280
    %v283 = vmul.f32 %v271, %v281
    %285 = vrot.lane.b32.xlu0 %v283, 64
    %v286 = vpop.permute.xlu0 %285
    %v288 = vadd.f32 %v147, %v286
    %v289 = vtanh.pop %v288
    %v290 = vsub.f32 1.0, %v271
    %292 = vrot.lane.b32.xlu0 %v289, 96
    %v293 = vpop.permute.xlu0 %292
    %v295 = vmul.f32 %v290, %v293
    %v296 = vmul.f32 %v271, 0.0
    %v297 = vadd.f32 %v295, %v296
    %299 = vrot.lane.b32.xlu0 %v228, 96
    %v300 = vpop.permute.xlu0 %299
    %vm302 = vcmask 254976
    %303 = vst.msk [vmem:[#allocation2] sm:$0x3] %vm302, %v300
    %vm304 = vcmask 523526
    %305 = vst.msk [vmem:[#allocation2 + $0x8] sm:$0xc0] %vm304, %v297
    %v306 = vsel %vm160, %v300, 0
    %308 = vmatpush.msra.mxu0 0.0
    %309 = vmatpush.msra.mxu0 0.0
    %310 = vmatpush.msra.mxu0 0.0
    %311 = vmatpush.msra.mxu0 0.0
    %312 = vmatpush.msra.mxu0 0.0
    %313 = vmatpush.msra.mxu0 0.0
    %314 = vmatpush.msra.mxu0 0.0
    %315 = vmatpush.msra.mxu0 0.0
    %316 = vmatpush.msra.mxu0 0.0
    %317 = vmatpush.msra.mxu0 0.0
    %318 = vmatpush.msra.mxu0 0.0
    %319 = vmatpush.msra.mxu0 0.0
    %320 = vmatpush.msra.mxu0 %v152
    %321 = vmatpush.msra.mxu0 %v151
    %322 = vmatpush.msra.mxu0 %v150
    %323 = vmatpush.msra.mxu0 %v149
    %324 = vmatmul.f32.gmra.mxu0 %v306
    %v325 = vpop.f32.mrf.mxu0
    %v326 = vadd.f32 0.0, %v325
    %327 = vdwg.mxu0
    %v329 = vrot.slane %v326, 6
    %v331 = vadd.f32 %v114, %v329
    %v332 = vxor.u32 %v331, 2147483648
    %v333 = vmul.f32 %v332, 1.442695
    %v334 = vpow.pop %v333
    %v335 = vadd.f32 %v334, 1.0
    %v336 = vrcp.pop %v335
    %v337 = vmul.f32 %v335, %v336
    %v338 = vsub.f32 1.0, %v337
    %v339 = vmul.f32 %v336, %v338
    %v340 = vadd.f32 %v336, %v339
    %vm341 = vweird.f32 %v335
    %vm342 = vweird.f32 %v336
    %vm343 = vmor %vm341, %vm342
    %v344 = vsel %vm343, %v336, %v340
    %v345 = vand.u32 2147483647, %v335
    %vm346 = vcmp.eq.f32.partialorder %v345, 8.507059e+37
    %v347 = vand.u32 %v335, 2147483648
    %v348 = vor.u32 1.1754944e-38, %v347
    %v349 = vsel %vm346, %v348, %v344
    %v350 = vmul.f32 1.0, %v349
    %v351 = vadd.f32 %v326, %v207
    %v353 = vrot.slane %v351, 6
    %354 = vrot.lane.b32.xlu0 %v353, 64
    %v355 = vpop.permute.xlu0 %354
    %v357 = vmul.f32 %v350, %v355
    %359 = vrot.lane.b32.xlu0 %v357, 64
    %v360 = vpop.permute.xlu0 %359
    %v362 = vadd.f32 %v114, %v360
    %v363 = vtanh.pop %v362
    %v364 = vsub.f32 1.0, %v350
    %366 = vrot.lane.b32.xlu0 %v363, 96
    %v367 = vpop.permute.xlu0 %366
    %v369 = vmul.f32 %v364, %v367
    %v370 = vrot.slane %v228, 6
    %v372 = vmul.f32 %v350, %v370
    %v373 = vadd.f32 %v369, %v372
    %v375 = vrot.slane %v297, 6
    %376 = vrot.lane.b32.xlu0 %v375, 96
    %v377 = vpop.permute.xlu0 %376
    %v378 = vsel %vm160, %v377, 0
    %380 = vmatpush.msra.mxu0 0.0
    %381 = vmatpush.msra.mxu0 0.0
    %382 = vmatpush.msra.mxu0 0.0
    %383 = vmatpush.msra.mxu0 0.0
    %384 = vmatpush.msra.mxu0 0.0
    %385 = vmatpush.msra.mxu0 0.0
    %386 = vmatpush.msra.mxu0 0.0
    %387 = vmatpush.msra.mxu0 0.0
    %388 = vmatpush.msra.mxu0 0.0
    %389 = vmatpush.msra.mxu0 0.0
    %390 = vmatpush.msra.mxu0 0.0
    %391 = vmatpush.msra.mxu0 0.0
    %392 = vmatpush.msra.mxu0 %v157
    %393 = vmatpush.msra.mxu0 %v156
    %394 = vmatpush.msra.mxu0 %v155
    %395 = vmatpush.msra.mxu0 %v154
    %396 = vmatmul.f32.gmra.mxu0 %v378
    %v397 = vpop.f32.mrf.mxu0
    %v398 = vadd.f32 0.0, %v397
    %399 = vdwg.mxu0
    %v401 = vrot.slane %v398, 4
    %v403 = vadd.f32 %v147, %v401
    %v404 = vxor.u32 %v403, 2147483648
    %v405 = vmul.f32 %v404, 1.442695
    %v406 = vpow.pop %v405
    %v407 = vadd.f32 %v406, 1.0
    %v408 = vrcp.pop %v407
    %v409 = vmul.f32 %v407, %v408
    %v410 = vsub.f32 1.0, %v409
    %v411 = vmul.f32 %v408, %v410
    %v412 = vadd.f32 %v408, %v411
    %vm413 = vweird.f32 %v407
    %vm414 = vweird.f32 %v408
    %vm415 = vmor %vm413, %vm414
    %v416 = vsel %vm415, %v408, %v412
    %v417 = vand.u32 2147483647, %v407
    %vm418 = vcmp.eq.f32.partialorder %v417, 8.507059e+37
    %v419 = vand.u32 %v407, 2147483648
    %v420 = vor.u32 1.1754944e-38, %v419
    %v421 = vsel %vm418, %v420, %v416
    %v422 = vmul.f32 1.0, %v421
    %v423 = vadd.f32 %v398, %v275
    %v425 = vrot.slane %v423, 4
    %426 = vrot.lane.b32.xlu0 %v425, 64
    %v427 = vpop.permute.xlu0 %426
    %v429 = vmul.f32 %v422, %v427
    %431 = vrot.lane.b32.xlu0 %v429, 64
    %v432 = vpop.permute.xlu0 %431
    %v434 = vadd.f32 %v147, %v432
    %v435 = vtanh.pop %v434
    %v436 = vsub.f32 1.0, %v422
    %438 = vrot.lane.b32.xlu0 %v435, 96
    %v439 = vpop.permute.xlu0 %438
    %v441 = vmul.f32 %v436, %v439
    %v442 = vrot.slane %v297, 2
    %v444 = vmul.f32 %v422, %v442
    %v445 = vadd.f32 %v441, %v444
    %447 = vrot.lane.b32.xlu0 %v373, 96
    %v448 = vpop.permute.xlu0 %447
    %vm450 = vcmask 257026
    %451 = vst.msk [vmem:[#allocation2] sm:$0xc] %vm450, %v448
    %vm452 = vcmask 521476
    %453 = vst.msk [vmem:[#allocation2 + $0x8] sm:$0x30] %vm452, %v445
    %v454 = vrot.slane %v373, 2
    %455 = vrot.lane.b32.xlu0 %v454, 96
    %v456 = vpop.permute.xlu0 %455
    %v457 = vsel %vm160, %v456, 0
    %459 = vmatpush.msra.mxu0 0.0
    %460 = vmatpush.msra.mxu0 0.0
    %461 = vmatpush.msra.mxu0 0.0
    %462 = vmatpush.msra.mxu0 0.0
    %463 = vmatpush.msra.mxu0 0.0
    %464 = vmatpush.msra.mxu0 0.0
    %465 = vmatpush.msra.mxu0 0.0
    %466 = vmatpush.msra.mxu0 0.0
    %467 = vmatpush.msra.mxu0 0.0
    %468 = vmatpush.msra.mxu0 0.0
    %469 = vmatpush.msra.mxu0 0.0
    %470 = vmatpush.msra.mxu0 0.0
    %471 = vmatpush.msra.mxu0 %v152
    %472 = vmatpush.msra.mxu0 %v151
    %473 = vmatpush.msra.mxu0 %v150
    %474 = vmatpush.msra.mxu0 %v149
    %475 = vmatmul.f32.gmra.mxu0 %v457
    %v476 = vpop.f32.mrf.mxu0
    %v477 = vadd.f32 0.0, %v476
    %478 = vdwg.mxu0
    %v480 = vrot.slane %v477, 4
    %v482 = vadd.f32 %v114, %v480
    %v483 = vxor.u32 %v482, 2147483648
    %v484 = vmul.f32 %v483, 1.442695
    %v485 = vpow.pop %v484
    %v486 = vadd.f32 %v485, 1.0
    %v487 = vrcp.pop %v486
    %v488 = vmul.f32 %v486, %v487
    %v489 = vsub.f32 1.0, %v488
    %v490 = vmul.f32 %v487, %v489
    %v491 = vadd.f32 %v487, %v490
    %vm492 = vweird.f32 %v486
    %vm493 = vweird.f32 %v487
    %vm494 = vmor %vm492, %vm493
    %v495 = vsel %vm494, %v487, %v491
    %v496 = vand.u32 2147483647, %v486
    %vm497 = vcmp.eq.f32.partialorder %v496, 8.507059e+37
    %v498 = vand.u32 %v486, 2147483648
    %v499 = vor.u32 1.1754944e-38, %v498
    %v500 = vsel %vm497, %v499, %v495
    %v501 = vmul.f32 1.0, %v500
    %v502 = vadd.f32 %v477, %v207
    %v504 = vrot.slane %v502, 4
    %505 = vrot.lane.b32.xlu0 %v504, 64
    %v506 = vpop.permute.xlu0 %505
    %v508 = vmul.f32 %v501, %v506
    %510 = vrot.lane.b32.xlu0 %v508, 64
    %v511 = vpop.permute.xlu0 %510
    %v513 = vadd.f32 %v114, %v511
    %v514 = vtanh.pop %v513
    %v515 = vsub.f32 1.0, %v501
    %517 = vrot.lane.b32.xlu0 %v514, 96
    %v518 = vpop.permute.xlu0 %517
    %v520 = vmul.f32 %v515, %v518
    %v521 = vrot.slane %v373, 6
    %v523 = vmul.f32 %v501, %v521
    %v524 = vadd.f32 %v520, %v523
    %v526 = vrot.slane %v445, 4
    %527 = vrot.lane.b32.xlu0 %v526, 96
    %v528 = vpop.permute.xlu0 %527
    %v529 = vsel %vm160, %v528, 0
    %531 = vmatpush.msra.mxu0 0.0
    %532 = vmatpush.msra.mxu0 0.0
    %533 = vmatpush.msra.mxu0 0.0
    %534 = vmatpush.msra.mxu0 0.0
    %535 = vmatpush.msra.mxu0 0.0
    %536 = vmatpush.msra.mxu0 0.0
    %537 = vmatpush.msra.mxu0 0.0
    %538 = vmatpush.msra.mxu0 0.0
    %539 = vmatpush.msra.mxu0 0.0
    %540 = vmatpush.msra.mxu0 0.0
    %541 = vmatpush.msra.mxu0 0.0
    %542 = vmatpush.msra.mxu0 0.0
    %543 = vmatpush.msra.mxu0 %v157
    %544 = vmatpush.msra.mxu0 %v156
    %545 = vmatpush.msra.mxu0 %v155
    %546 = vmatpush.msra.mxu0 %v154
    %547 = vmatmul.f32.gmra.mxu0 %v529
    %v548 = vpop.f32.mrf.mxu0
    %v549 = vadd.f32 0.0, %v548
    %550 = vdwg.mxu0
    %v552 = vrot.slane %v549, 6
    %v554 = vadd.f32 %v147, %v552
    %v555 = vxor.u32 %v554, 2147483648
    %v556 = vmul.f32 %v555, 1.442695
    %v557 = vpow.pop %v556
    %v558 = vadd.f32 %v557, 1.0
    %v559 = vrcp.pop %v558
    %v560 = vmul.f32 %v558, %v559
    %v561 = vsub.f32 1.0, %v560
    %v562 = vmul.f32 %v559, %v561
    %v563 = vadd.f32 %v559, %v562
    %vm564 = vweird.f32 %v558
    %vm565 = vweird.f32 %v559
    %vm566 = vmor %vm564, %vm565
    %v567 = vsel %vm566, %v559, %v563
    %v568 = vand.u32 2147483647, %v558
    %vm569 = vcmp.eq.f32.partialorder %v568, 8.507059e+37
    %v570 = vand.u32 %v558, 2147483648
    %v571 = vor.u32 1.1754944e-38, %v570
    %v572 = vsel %vm569, %v571, %v567
    %v573 = vmul.f32 1.0, %v572
    %v574 = vadd.f32 %v549, %v275
    %v576 = vrot.slane %v574, 6
    %577 = vrot.lane.b32.xlu0 %v576, 64
    %v578 = vpop.permute.xlu0 %577
    %v580 = vmul.f32 %v573, %v578
    %582 = vrot.lane.b32.xlu0 %v580, 64
    %v583 = vpop.permute.xlu0 %582
    %v585 = vadd.f32 %v147, %v583
    %v586 = vtanh.pop %v585
    %v587 = vsub.f32 1.0, %v573
    %589 = vrot.lane.b32.xlu0 %v586, 96
    %v590 = vpop.permute.xlu0 %589
    %v592 = vmul.f32 %v587, %v590
    %v593 = vrot.slane %v445, 2
    %v595 = vmul.f32 %v573, %v593
    %v596 = vadd.f32 %v592, %v595
    %598 = vrot.lane.b32.xlu0 %v524, 96
    %v599 = vpop.permute.xlu0 %598
    %vm601 = vcmask 259076
    %602 = vst.msk [vmem:[#allocation2] sm:$0x30] %vm601, %v599
    %vm603 = vcmask 519426
    %604 = vst.msk [vmem:[#allocation2 + $0x8] sm:$0xc] %vm603, %v596
    %v605 = vrot.slane %v524, 4
    %606 = vrot.lane.b32.xlu0 %v605, 96
    %v607 = vpop.permute.xlu0 %606
    %v608 = vsel %vm160, %v607, 0
    %610 = vmatpush.msra.mxu0 0.0
    %611 = vmatpush.msra.mxu0 0.0
    %612 = vmatpush.msra.mxu0 0.0
    %613 = vmatpush.msra.mxu0 0.0
    %614 = vmatpush.msra.mxu0 0.0
    %615 = vmatpush.msra.mxu0 0.0
    %616 = vmatpush.msra.mxu0 0.0
    %617 = vmatpush.msra.mxu0 0.0
    %618 = vmatpush.msra.mxu0 0.0
    %619 = vmatpush.msra.mxu0 0.0
    %620 = vmatpush.msra.mxu0 0.0
    %621 = vmatpush.msra.mxu0 0.0
    %622 = vmatpush.msra.mxu0 %v152
    %623 = vmatpush.msra.mxu0 %v151
    %624 = vmatpush.msra.mxu0 %v150
    %625 = vmatpush.msra.mxu0 %v149
    %626 = vmatmul.f32.gmra.mxu0 %v608
    %v627 = vpop.f32.mrf.mxu0
    %v628 = vadd.f32 0.0, %v627
    %629 = vdwg.mxu0
    %v631 = vrot.slane %v628, 2
    %v633 = vadd.f32 %v114, %v631
    %v634 = vxor.u32 %v633, 2147483648
    %v635 = vmul.f32 %v634, 1.442695
    %v636 = vpow.pop %v635
    %v637 = vadd.f32 %v636, 1.0
    %v638 = vrcp.pop %v637
    %v639 = vmul.f32 %v637, %v638
    %v640 = vsub.f32 1.0, %v639
    %v641 = vmul.f32 %v638, %v640
    %v642 = vadd.f32 %v638, %v641
    %vm643 = vweird.f32 %v637
    %vm644 = vweird.f32 %v638
    %vm645 = vmor %vm643, %vm644
    %v646 = vsel %vm645, %v638, %v642
    %v647 = vand.u32 2147483647, %v637
    %vm648 = vcmp.eq.f32.partialorder %v647, 8.507059e+37
    %v649 = vand.u32 %v637, 2147483648
    %v650 = vor.u32 1.1754944e-38, %v649
    %v651 = vsel %vm648, %v650, %v646
    %v652 = vmul.f32 1.0, %v651
    %v653 = vadd.f32 %v628, %v207
    %v655 = vrot.slane %v653, 2
    %656 = vrot.lane.b32.xlu0 %v655, 64
    %v657 = vpop.permute.xlu0 %656
    %v659 = vmul.f32 %v652, %v657
    %661 = vrot.lane.b32.xlu0 %v659, 64
    %v662 = vpop.permute.xlu0 %661
    %v664 = vadd.f32 %v114, %v662
    %v665 = vtanh.pop %v664
    %v666 = vsub.f32 1.0, %v652
    %668 = vrot.lane.b32.xlu0 %v665, 96
    %v669 = vpop.permute.xlu0 %668
    %v671 = vmul.f32 %v666, %v669
    %v672 = vrot.slane %v524, 6
    %v674 = vmul.f32 %v652, %v672
    %v675 = vadd.f32 %v671, %v674
    %v677 = vrot.slane %v596, 2
    %678 = vrot.lane.b32.xlu0 %v677, 96
    %v679 = vpop.permute.xlu0 %678
    %v680 = vsel %vm160, %v679, 0
    %682 = vmatpush.msra.mxu0 0.0
    %683 = vmatpush.msra.mxu0 0.0
    %684 = vmatpush.msra.mxu0 0.0
    %685 = vmatpush.msra.mxu0 0.0
    %686 = vmatpush.msra.mxu0 0.0
    %687 = vmatpush.msra.mxu0 0.0
    %688 = vmatpush.msra.mxu0 0.0
    %689 = vmatpush.msra.mxu0 0.0
    %690 = vmatpush.msra.mxu0 0.0
    %691 = vmatpush.msra.mxu0 0.0
    %692 = vmatpush.msra.mxu0 0.0
    %693 = vmatpush.msra.mxu0 0.0
    %694 = vmatpush.msra.mxu0 %v157
    %695 = vmatpush.msra.mxu0 %v156
    %696 = vmatpush.msra.mxu0 %v155
    %697 = vmatpush.msra.mxu0 %v154
    %698 = vmatmul.f32.gmra.mxu0 %v680
    %v699 = vpop.f32.mrf.mxu0
    %v700 = vadd.f32 0.0, %v699
    %701 = vdwg.mxu0
    %v702 = vadd.f32 %v147, %v700
    %v703 = vxor.u32 %v702, 2147483648
    %v704 = vmul.f32 %v703, 1.442695
    %v705 = vpow.pop %v704
    %v706 = vadd.f32 %v705, 1.0
    %v707 = vrcp.pop %v706
    %v708 = vmul.f32 %v706, %v707
    %v709 = vsub.f32 1.0, %v708
    %v710 = vmul.f32 %v707, %v709
    %v711 = vadd.f32 %v707, %v710
    %vm712 = vweird.f32 %v706
    %vm713 = vweird.f32 %v707
    %vm714 = vmor %vm712, %vm713
    %v715 = vsel %vm714, %v707, %v711
    %v716 = vand.u32 2147483647, %v706
    %vm717 = vcmp.eq.f32.partialorder %v716, 8.507059e+37
    %v718 = vand.u32 %v706, 2147483648
    %v719 = vor.u32 1.1754944e-38, %v718
    %v720 = vsel %vm717, %v719, %v715
    %v721 = vmul.f32 1.0, %v720
    %v722 = vadd.f32 %v700, %v275
    %724 = vrot.lane.b32.xlu0 %v722, 64
    %v725 = vpop.permute.xlu0 %724
    %v727 = vmul.f32 %v721, %v725
    %729 = vrot.lane.b32.xlu0 %v727, 64
    %v730 = vpop.permute.xlu0 %729
    %v732 = vadd.f32 %v147, %v730
    %v733 = vtanh.pop %v732
    %v734 = vsub.f32 1.0, %v721
    %736 = vrot.lane.b32.xlu0 %v733, 96
    %v737 = vpop.permute.xlu0 %736
    %v739 = vmul.f32 %v734, %v737
    %v741 = vmul.f32 %v721, %v677
    %v742 = vadd.f32 %v739, %v741
    %744 = vrot.lane.b32.xlu0 %v675, 96
    %v745 = vpop.permute.xlu0 %744
    %vm747 = vcmask 261126
    %748 = vst.msk [vmem:[#allocation2] sm:$0xc0] %vm747, %v745
    %vm749 = vcmask 517376
    %750 = vst.msk [vmem:[#allocation2 + $0x8] sm:$0x3] %vm749, %v742
    %v751 = vrot.slane %v675, 6
    %752 = vrot.lane.b32.xlu0 %v751, 96
    %v753 = vpop.permute.xlu0 %752
    %v754 = vsel %vm160, %v753, 0
    %756 = vmatpush.msra.mxu0 0.0
    %757 = vmatpush.msra.mxu0 0.0
    %758 = vmatpush.msra.mxu0 0.0
    %759 = vmatpush.msra.mxu0 0.0
    %760 = vmatpush.msra.mxu0 0.0
    %761 = vmatpush.msra.mxu0 0.0
    %762 = vmatpush.msra.mxu0 0.0
    %763 = vmatpush.msra.mxu0 0.0
    %764 = vmatpush.msra.mxu0 0.0
    %765 = vmatpush.msra.mxu0 0.0
    %766 = vmatpush.msra.mxu0 0.0
    %767 = vmatpush.msra.mxu0 0.0
    %768 = vmatpush.msra.mxu0 %v152
    %769 = vmatpush.msra.mxu0 %v151
    %770 = vmatpush.msra.mxu0 %v150
    %771 = vmatpush.msra.mxu0 %v149
    %772 = vmatmul.f32.gmra.mxu0 %v754
    %v773 = vpop.f32.mrf.mxu0
    %v774 = vadd.f32 0.0, %v773
    %775 = vdwg.mxu0
    %v776 = vadd.f32 %v117, %v774
    %v777 = vxor.u32 %v776, 2147483648
    %v778 = vmul.f32 %v777, 1.442695
    %v779 = vpow.pop %v778
    %v780 = vadd.f32 %v779, 1.0
    %v781 = vrcp.pop %v780
    %v782 = vmul.f32 %v780, %v781
    %v783 = vsub.f32 1.0, %v782
    %v784 = vmul.f32 %v781, %v783
    %v785 = vadd.f32 %v781, %v784
    %vm786 = vweird.f32 %v780
    %vm787 = vweird.f32 %v781
    %vm788 = vmor %vm786, %vm787
    %v789 = vsel %vm788, %v781, %v785
    %v790 = vand.u32 2147483647, %v780
    %vm791 = vcmp.eq.f32.partialorder %v790, 8.507059e+37
    %v792 = vand.u32 %v780, 2147483648
    %v793 = vor.u32 1.1754944e-38, %v792
    %v794 = vsel %vm791, %v793, %v789
    %v795 = vmul.f32 1.0, %v794
    %v796 = vadd.f32 %v774, %v207
    %798 = vrot.lane.b32.xlu0 %v796, 64
    %v799 = vpop.permute.xlu0 %798
    %v801 = vmul.f32 %v795, %v799
    %803 = vrot.lane.b32.xlu0 %v801, 64
    %v804 = vpop.permute.xlu0 %803
    %v806 = vadd.f32 %v117, %v804
    %v807 = vtanh.pop %v806
    %v808 = vsub.f32 1.0, %v795
    %810 = vrot.lane.b32.xlu0 %v807, 96
    %v811 = vpop.permute.xlu0 %810
    %v813 = vmul.f32 %v808, %v811
    %v815 = vmul.f32 %v795, %v751
    %v816 = vadd.f32 %v813, %v815
    %818 = vrot.lane.b32.xlu0 %v742, 96
    %v819 = vpop.permute.xlu0 %818
    %v820 = vsel %vm160, %v819, 0
    %822 = vmatpush.msra.mxu0 0.0
    %823 = vmatpush.msra.mxu0 0.0
    %824 = vmatpush.msra.mxu0 0.0
    %825 = vmatpush.msra.mxu0 0.0
    %826 = vmatpush.msra.mxu0 0.0
    %827 = vmatpush.msra.mxu0 0.0
    %828 = vmatpush.msra.mxu0 0.0
    %829 = vmatpush.msra.mxu0 0.0
    %830 = vmatpush.msra.mxu0 0.0
    %831 = vmatpush.msra.mxu0 0.0
    %832 = vmatpush.msra.mxu0 0.0
    %833 = vmatpush.msra.mxu0 0.0
    %834 = vmatpush.msra.mxu0 %v157
    %835 = vmatpush.msra.mxu0 %v156
    %836 = vmatpush.msra.mxu0 %v155
    %837 = vmatpush.msra.mxu0 %v154
    %838 = vmatmul.f32.gmra.mxu0 %v820
    %v839 = vpop.f32.mrf.mxu0
    %v840 = vadd.f32 0.0, %v839
    %841 = vdwg.mxu0
    %v843 = vrot.slane %v840, 2
    %v845 = vadd.f32 %v144, %v843
    %v846 = vxor.u32 %v845, 2147483648
    %v847 = vmul.f32 %v846, 1.442695
    %v848 = vpow.pop %v847
    %v849 = vadd.f32 %v848, 1.0
    %v850 = vrcp.pop %v849
    %v851 = vmul.f32 %v849, %v850
    %v852 = vsub.f32 1.0, %v851
    %v853 = vmul.f32 %v850, %v852
    %v854 = vadd.f32 %v850, %v853
    %vm855 = vweird.f32 %v849
    %vm856 = vweird.f32 %v850
    %vm857 = vmor %vm855, %vm856
    %v858 = vsel %vm857, %v850, %v854
    %v859 = vand.u32 2147483647, %v849
    %vm860 = vcmp.eq.f32.partialorder %v859, 8.507059e+37
    %v861 = vand.u32 %v849, 2147483648
    %v862 = vor.u32 1.1754944e-38, %v861
    %v863 = vsel %vm860, %v862, %v858
    %v864 = vmul.f32 1.0, %v863
    %v865 = vadd.f32 %v840, %v275
    %v867 = vrot.slane %v865, 2
    %868 = vrot.lane.b32.xlu0 %v867, 64
    %v869 = vpop.permute.xlu0 %868
    %v871 = vmul.f32 %v864, %v869
    %873 = vrot.lane.b32.xlu0 %v871, 64
    %v874 = vpop.permute.xlu0 %873
    %v876 = vadd.f32 %v144, %v874
    %v877 = vtanh.pop %v876
    %v878 = vsub.f32 1.0, %v864
    %880 = vrot.lane.b32.xlu0 %v877, 96
    %v881 = vpop.permute.xlu0 %880
    %v883 = vmul.f32 %v878, %v881
    %v884 = vrot.slane %v742, 2
    %v886 = vmul.f32 %v864, %v884
    %v887 = vadd.f32 %v883, %v886
    %889 = vrot.lane.b32.xlu0 %v816, 96
    %v890 = vpop.permute.xlu0 %889
    %892 = vst.msk [vmem:[#allocation2 + $0x8] sm:$0x3] %vm302, %v890
    %893 = vst.msk [vmem:[#allocation2] sm:$0xc0] %vm304, %v887
    %v894 = vsel %vm160, %v890, 0
    %896 = vmatpush.msra.mxu0 0.0
    %897 = vmatpush.msra.mxu0 0.0
    %898 = vmatpush.msra.mxu0 0.0
    %899 = vmatpush.msra.mxu0 0.0
    %900 = vmatpush.msra.mxu0 0.0
    %901 = vmatpush.msra.mxu0 0.0
    %902 = vmatpush.msra.mxu0 0.0
    %903 = vmatpush.msra.mxu0 0.0
    %904 = vmatpush.msra.mxu0 0.0
    %905 = vmatpush.msra.mxu0 0.0
    %906 = vmatpush.msra.mxu0 0.0
    %907 = vmatpush.msra.mxu0 0.0
    %908 = vmatpush.msra.mxu0 %v152
    %909 = vmatpush.msra.mxu0 %v151
    %910 = vmatpush.msra.mxu0 %v150
    %911 = vmatpush.msra.mxu0 %v149
    %912 = vmatmul.f32.gmra.mxu0 %v894
    %v913 = vpop.f32.mrf.mxu0
    %v914 = vadd.f32 0.0, %v913
    %915 = vdwg.mxu0
    %v917 = vrot.slane %v914, 6
    %v919 = vadd.f32 %v117, %v917
    %v920 = vxor.u32 %v919, 2147483648
    %v921 = vmul.f32 %v920, 1.442695
    %v922 = vpow.pop %v921
    %v923 = vadd.f32 %v922, 1.0
    %v924 = vrcp.pop %v923
    %v925 = vmul.f32 %v923, %v924
    %v926 = vsub.f32 1.0, %v925
    %v927 = vmul.f32 %v924, %v926
    %v928 = vadd.f32 %v924, %v927
    %vm929 = vweird.f32 %v923
    %vm930 = vweird.f32 %v924
    %vm931 = vmor %vm929, %vm930
    %v932 = vsel %vm931, %v924, %v928
    %v933 = vand.u32 2147483647, %v923
    %vm934 = vcmp.eq.f32.partialorder %v933, 8.507059e+37
    %v935 = vand.u32 %v923, 2147483648
    %v936 = vor.u32 1.1754944e-38, %v935
    %v937 = vsel %vm934, %v936, %v932
    %v938 = vmul.f32 1.0, %v937
    %v939 = vadd.f32 %v914, %v207
    %v941 = vrot.slane %v939, 6
    %942 = vrot.lane.b32.xlu0 %v941, 64
    %v943 = vpop.permute.xlu0 %942
    %v945 = vmul.f32 %v938, %v943
    %947 = vrot.lane.b32.xlu0 %v945, 64
    %v948 = vpop.permute.xlu0 %947
    %v950 = vadd.f32 %v117, %v948
    %v951 = vtanh.pop %v950
    %v952 = vsub.f32 1.0, %v938
    %954 = vrot.lane.b32.xlu0 %v951, 96
    %v955 = vpop.permute.xlu0 %954
    %v957 = vmul.f32 %v952, %v955
    %v958 = vrot.slane %v816, 6
    %v960 = vmul.f32 %v938, %v958
    %v961 = vadd.f32 %v957, %v960
    %v963 = vrot.slane %v887, 6
    %964 = vrot.lane.b32.xlu0 %v963, 96
    %v965 = vpop.permute.xlu0 %964
    %v966 = vsel %vm160, %v965, 0
    %968 = vmatpush.msra.mxu0 0.0
    %969 = vmatpush.msra.mxu0 0.0
    %970 = vmatpush.msra.mxu0 0.0
    %971 = vmatpush.msra.mxu0 0.0
    %972 = vmatpush.msra.mxu0 0.0
    %973 = vmatpush.msra.mxu0 0.0
    %974 = vmatpush.msra.mxu0 0.0
    %975 = vmatpush.msra.mxu0 0.0
    %976 = vmatpush.msra.mxu0 0.0
    %977 = vmatpush.msra.mxu0 0.0
    %978 = vmatpush.msra.mxu0 0.0
    %979 = vmatpush.msra.mxu0 0.0
    %980 = vmatpush.msra.mxu0 %v157
    %981 = vmatpush.msra.mxu0 %v156
    %982 = vmatpush.msra.mxu0 %v155
    %983 = vmatpush.msra.mxu0 %v154
    %984 = vmatmul.f32.gmra.mxu0 %v966
    %v985 = vpop.f32.mrf.mxu0
    %v986 = vadd.f32 0.0, %v985
    %987 = vdwg.mxu0
    %v989 = vrot.slane %v986, 4
    %v991 = vadd.f32 %v144, %v989
    %v992 = vxor.u32 %v991, 2147483648
    %v993 = vmul.f32 %v992, 1.442695
    %v994 = vpow.pop %v993
    %v995 = vadd.f32 %v994, 1.0
    %v996 = vrcp.pop %v995
    %v997 = vmul.f32 %v995, %v996
    %v998 = vsub.f32 1.0, %v997
    %v999 = vmul.f32 %v996, %v998
    %v1000 = vadd.f32 %v996, %v999
    %vm1001 = vweird.f32 %v995
    %vm1002 = vweird.f32 %v996
    %vm1003 = vmor %vm1001, %vm1002
    %v1004 = vsel %vm1003, %v996, %v1000
    %v1005 = vand.u32 2147483647, %v995
    %vm1006 = vcmp.eq.f32.partialorder %v1005, 8.507059e+37
    %v1007 = vand.u32 %v995, 2147483648
    %v1008 = vor.u32 1.1754944e-38, %v1007
    %v1009 = vsel %vm1006, %v1008, %v1004
    %v1010 = vmul.f32 1.0, %v1009
    %v1011 = vadd.f32 %v986, %v275
    %v1013 = vrot.slane %v1011, 4
    %1014 = vrot.lane.b32.xlu0 %v1013, 64
    %v1015 = vpop.permute.xlu0 %1014
    %v1017 = vmul.f32 %v1010, %v1015
    %1019 = vrot.lane.b32.xlu0 %v1017, 64
    %v1020 = vpop.permute.xlu0 %1019
    %v1022 = vadd.f32 %v144, %v1020
    %v1023 = vtanh.pop %v1022
    %v1024 = vsub.f32 1.0, %v1010
    %1026 = vrot.lane.b32.xlu0 %v1023, 96
    %v1027 = vpop.permute.xlu0 %1026
    %v1029 = vmul.f32 %v1024, %v1027
    %v1030 = vrot.slane %v887, 2
    %v1032 = vmul.f32 %v1010, %v1030
    %v1033 = vadd.f32 %v1029, %v1032
    %1035 = vrot.lane.b32.xlu0 %v961, 96
    %v1036 = vpop.permute.xlu0 %1035
    %1038 = vst.msk [vmem:[#allocation2 + $0x8] sm:$0xc] %vm450, %v1036
    %1039 = vst.msk [vmem:[#allocation2] sm:$0x30] %vm452, %v1033
    %v1040 = vrot.slane %v961, 2
    %1041 = vrot.lane.b32.xlu0 %v1040, 96
    %v1042 = vpop.permute.xlu0 %1041
    %v1043 = vsel %vm160, %v1042, 0
    %1045 = vmatpush.msra.mxu0 0.0
    %1046 = vmatpush.msra.mxu0 0.0
    %1047 = vmatpush.msra.mxu0 0.0
    %1048 = vmatpush.msra.mxu0 0.0
    %1049 = vmatpush.msra.mxu0 0.0
    %1050 = vmatpush.msra.mxu0 0.0
    %1051 = vmatpush.msra.mxu0 0.0
    %1052 = vmatpush.msra.mxu0 0.0
    %1053 = vmatpush.msra.mxu0 0.0
    %1054 = vmatpush.msra.mxu0 0.0
    %1055 = vmatpush.msra.mxu0 0.0
    %1056 = vmatpush.msra.mxu0 0.0
    %1057 = vmatpush.msra.mxu0 %v152
    %1058 = vmatpush.msra.mxu0 %v151
    %1059 = vmatpush.msra.mxu0 %v150
    %1060 = vmatpush.msra.mxu0 %v149
    %1061 = vmatmul.f32.gmra.mxu0 %v1043
    %v1062 = vpop.f32.mrf.mxu0
    %v1063 = vadd.f32 0.0, %v1062
    %1064 = vdwg.mxu0
    %v1066 = vrot.slane %v1063, 4
    %v1068 = vadd.f32 %v117, %v1066
    %v1069 = vxor.u32 %v1068, 2147483648
    %v1070 = vmul.f32 %v1069, 1.442695
    %v1071 = vpow.pop %v1070
    %v1072 = vadd.f32 %v1071, 1.0
    %v1073 = vrcp.pop %v1072
    %v1074 = vmul.f32 %v1072, %v1073
    %v1075 = vsub.f32 1.0, %v1074
    %v1076 = vmul.f32 %v1073, %v1075
    %v1077 = vadd.f32 %v1073, %v1076
    %vm1078 = vweird.f32 %v1072
    %vm1079 = vweird.f32 %v1073
    %vm1080 = vmor %vm1078, %vm1079
    %v1081 = vsel %vm1080, %v1073, %v1077
    %v1082 = vand.u32 2147483647, %v1072
    %vm1083 = vcmp.eq.f32.partialorder %v1082, 8.507059e+37
    %v1084 = vand.u32 %v1072, 2147483648
    %v1085 = vor.u32 1.1754944e-38, %v1084
    %v1086 = vsel %vm1083, %v1085, %v1081
    %v1087 = vmul.f32 1.0, %v1086
    %v1088 = vadd.f32 %v1063, %v207
    %v1090 = vrot.slane %v1088, 4
    %1091 = vrot.lane.b32.xlu0 %v1090, 64
    %v1092 = vpop.permute.xlu0 %1091
    %v1094 = vmul.f32 %v1087, %v1092
    %1096 = vrot.lane.b32.xlu0 %v1094, 64
    %v1097 = vpop.permute.xlu0 %1096
    %v1099 = vadd.f32 %v117, %v1097
    %v1100 = vtanh.pop %v1099
    %v1101 = vsub.f32 1.0, %v1087
    %1103 = vrot.lane.b32.xlu0 %v1100, 96
    %v1104 = vpop.permute.xlu0 %1103
    %v1106 = vmul.f32 %v1101, %v1104
    %v1107 = vrot.slane %v961, 6
    %v1109 = vmul.f32 %v1087, %v1107
    %v1110 = vadd.f32 %v1106, %v1109
    %v1112 = vrot.slane %v1033, 4
    %1113 = vrot.lane.b32.xlu0 %v1112, 96
    %v1114 = vpop.permute.xlu0 %1113
    %v1115 = vsel %vm160, %v1114, 0
    %1117 = vmatpush.msra.mxu0 0.0
    %1118 = vmatpush.msra.mxu0 0.0
    %1119 = vmatpush.msra.mxu0 0.0
    %1120 = vmatpush.msra.mxu0 0.0
    %1121 = vmatpush.msra.mxu0 0.0
    %1122 = vmatpush.msra.mxu0 0.0
    %1123 = vmatpush.msra.mxu0 0.0
    %1124 = vmatpush.msra.mxu0 0.0
    %1125 = vmatpush.msra.mxu0 0.0
    %1126 = vmatpush.msra.mxu0 0.0
    %1127 = vmatpush.msra.mxu0 0.0
    %1128 = vmatpush.msra.mxu0 0.0
    %1129 = vmatpush.msra.mxu0 %v157
    %1130 = vmatpush.msra.mxu0 %v156
    %1131 = vmatpush.msra.mxu0 %v155
    %1132 = vmatpush.msra.mxu0 %v154
    %1133 = vmatmul.f32.gmra.mxu0 %v1115
    %v1134 = vpop.f32.mrf.mxu0
    %v1135 = vadd.f32 0.0, %v1134
    %1136 = vdwg.mxu0
    %v1138 = vrot.slane %v1135, 6
    %v1140 = vadd.f32 %v144, %v1138
    %v1141 = vxor.u32 %v1140, 2147483648
    %v1142 = vmul.f32 %v1141, 1.442695
    %v1143 = vpow.pop %v1142
    %v1144 = vadd.f32 %v1143, 1.0
    %v1145 = vrcp.pop %v1144
    %v1146 = vmul.f32 %v1144, %v1145
    %v1147 = vsub.f32 1.0, %v1146
    %v1148 = vmul.f32 %v1145, %v1147
    %v1149 = vadd.f32 %v1145, %v1148
    %vm1150 = vweird.f32 %v1144
    %vm1151 = vweird.f32 %v1145
    %vm1152 = vmor %vm1150, %vm1151
    %v1153 = vsel %vm1152, %v1145, %v1149
    %v1154 = vand.u32 2147483647, %v1144
    %vm1155 = vcmp.eq.f32.partialorder %v1154, 8.507059e+37
    %v1156 = vand.u32 %v1144, 2147483648
    %v1157 = vor.u32 1.1754944e-38, %v1156
    %v1158 = vsel %vm1155, %v1157, %v1153
    %v1159 = vmul.f32 1.0, %v1158
    %v1160 = vadd.f32 %v1135, %v275
    %v1162 = vrot.slane %v1160, 6
    %1163 = vrot.lane.b32.xlu0 %v1162, 64
    %v1164 = vpop.permute.xlu0 %1163
    %v1166 = vmul.f32 %v1159, %v1164
    %1168 = vrot.lane.b32.xlu0 %v1166, 64
    %v1169 = vpop.permute.xlu0 %1168
    %v1171 = vadd.f32 %v144, %v1169
    %v1172 = vtanh.pop %v1171
    %v1173 = vsub.f32 1.0, %v1159
    %1175 = vrot.lane.b32.xlu0 %v1172, 96
    %v1176 = vpop.permute.xlu0 %1175
    %v1178 = vmul.f32 %v1173, %v1176
    %v1179 = vrot.slane %v1033, 2
    %v1181 = vmul.f32 %v1159, %v1179
    %v1182 = vadd.f32 %v1178, %v1181
    %1184 = vrot.lane.b32.xlu0 %v1110, 96
    %v1185 = vpop.permute.xlu0 %1184
    %1187 = vst.msk [vmem:[#allocation2 + $0x8] sm:$0x30] %vm601, %v1185
    %1188 = vst.msk [vmem:[#allocation2] sm:$0xc] %vm603, %v1182
    %v1189 = vrot.slane %v1110, 4
    %1190 = vrot.lane.b32.xlu0 %v1189, 96
    %v1191 = vpop.permute.xlu0 %1190
    %v1192 = vsel %vm160, %v1191, 0
    %1194 = vmatpush.msra.mxu0 0.0
    %1195 = vmatpush.msra.mxu0 0.0
    %1196 = vmatpush.msra.mxu0 0.0
    %1197 = vmatpush.msra.mxu0 0.0
    %1198 = vmatpush.msra.mxu0 0.0
    %1199 = vmatpush.msra.mxu0 0.0
    %1200 = vmatpush.msra.mxu0 0.0
    %1201 = vmatpush.msra.mxu0 0.0
    %1202 = vmatpush.msra.mxu0 0.0
    %1203 = vmatpush.msra.mxu0 0.0
    %1204 = vmatpush.msra.mxu0 0.0
    %1205 = vmatpush.msra.mxu0 0.0
    %1206 = vmatpush.msra.mxu0 %v152
    %1207 = vmatpush.msra.mxu0 %v151
    %1208 = vmatpush.msra.mxu0 %v150
    %1209 = vmatpush.msra.mxu0 %v149
    %1210 = vmatmul.f32.gmra.mxu0 %v1192
    %v1211 = vpop.f32.mrf.mxu0
    %v1212 = vadd.f32 0.0, %v1211
    %1213 = vdwg.mxu0
    %v1215 = vrot.slane %v1212, 2
    %v1217 = vadd.f32 %v117, %v1215
    %v1218 = vxor.u32 %v1217, 2147483648
    %v1219 = vmul.f32 %v1218, 1.442695
    %v1220 = vpow.pop %v1219
    %v1221 = vadd.f32 %v1220, 1.0
    %v1222 = vrcp.pop %v1221
    %v1223 = vmul.f32 %v1221, %v1222
    %v1224 = vsub.f32 1.0, %v1223
    %v1225 = vmul.f32 %v1222, %v1224
    %v1226 = vadd.f32 %v1222, %v1225
    %vm1227 = vweird.f32 %v1221
    %vm1228 = vweird.f32 %v1222
    %vm1229 = vmor %vm1227, %vm1228
    %v1230 = vsel %vm1229, %v1222, %v1226
    %v1231 = vand.u32 2147483647, %v1221
    %vm1232 = vcmp.eq.f32.partialorder %v1231, 8.507059e+37
    %v1233 = vand.u32 %v1221, 2147483648
    %v1234 = vor.u32 1.1754944e-38, %v1233
    %v1235 = vsel %vm1232, %v1234, %v1230
    %v1236 = vmul.f32 1.0, %v1235
    %v1237 = vadd.f32 %v1212, %v207
    %v1239 = vrot.slane %v1237, 2
    %1240 = vrot.lane.b32.xlu0 %v1239, 64
    %v1241 = vpop.permute.xlu0 %1240
    %v1243 = vmul.f32 %v1236, %v1241
    %1245 = vrot.lane.b32.xlu0 %v1243, 64
    %v1246 = vpop.permute.xlu0 %1245
    %v1248 = vadd.f32 %v117, %v1246
    %v1249 = vtanh.pop %v1248
    %v1250 = vsub.f32 1.0, %v1236
    %1252 = vrot.lane.b32.xlu0 %v1249, 96
    %v1253 = vpop.permute.xlu0 %1252
    %v1255 = vmul.f32 %v1250, %v1253
    %v1256 = vrot.slane %v1110, 6
    %v1258 = vmul.f32 %v1236, %v1256
    %v1259 = vadd.f32 %v1255, %v1258
    %v1261 = vrot.slane %v1182, 2
    %1262 = vrot.lane.b32.xlu0 %v1261, 96
    %v1263 = vpop.permute.xlu0 %1262
    %v1264 = vsel %vm160, %v1263, 0
    %1266 = vmatpush.msra.mxu0 0.0
    %1267 = vmatpush.msra.mxu0 0.0
    %1268 = vmatpush.msra.mxu0 0.0
    %1269 = vmatpush.msra.mxu0 0.0
    %1270 = vmatpush.msra.mxu0 0.0
    %1271 = vmatpush.msra.mxu0 0.0
    %1272 = vmatpush.msra.mxu0 0.0
    %1273 = vmatpush.msra.mxu0 0.0
    %1274 = vmatpush.msra.mxu0 0.0
    %1275 = vmatpush.msra.mxu0 0.0
    %1276 = vmatpush.msra.mxu0 0.0
    %1277 = vmatpush.msra.mxu0 0.0
    %1278 = vmatpush.msra.mxu0 %v157
    %1279 = vmatpush.msra.mxu0 %v156
    %1280 = vmatpush.msra.mxu0 %v155
    %1281 = vmatpush.msra.mxu0 %v154
    %1282 = vmatmul.f32.gmra.mxu0 %v1264
    %v1283 = vpop.f32.mrf.mxu0
    %v1284 = vadd.f32 0.0, %v1283
    %1285 = vdwg.mxu0
    %v1286 = vadd.f32 %v144, %v1284
    %v1287 = vxor.u32 %v1286, 2147483648
    %v1288 = vmul.f32 %v1287, 1.442695
    %v1289 = vpow.pop %v1288
    %v1290 = vadd.f32 %v1289, 1.0
    %v1291 = vrcp.pop %v1290
    %v1292 = vmul.f32 %v1290, %v1291
    %v1293 = vsub.f32 1.0, %v1292
    %v1294 = vmul.f32 %v1291, %v1293
    %v1295 = vadd.f32 %v1291, %v1294
    %vm1296 = vweird.f32 %v1290
    %vm1297 = vweird.f32 %v1291
    %vm1298 = vmor %vm1296, %vm1297
    %v1299 = vsel %vm1298, %v1291, %v1295
    %v1300 = vand.u32 2147483647, %v1290
    %vm1301 = vcmp.eq.f32.partialorder %v1300, 8.507059e+37
    %v1302 = vand.u32 %v1290, 2147483648
    %v1303 = vor.u32 1.1754944e-38, %v1302
    %v1304 = vsel %vm1301, %v1303, %v1299
    %v1305 = vmul.f32 1.0, %v1304
    %v1306 = vadd.f32 %v1284, %v275
    %1308 = vrot.lane.b32.xlu0 %v1306, 64
    %v1309 = vpop.permute.xlu0 %1308
    %v1311 = vmul.f32 %v1305, %v1309
    %1313 = vrot.lane.b32.xlu0 %v1311, 64
    %v1314 = vpop.permute.xlu0 %1313
    %v1316 = vadd.f32 %v144, %v1314
    %v1317 = vtanh.pop %v1316
    %v1318 = vsub.f32 1.0, %v1305
    %1320 = vrot.lane.b32.xlu0 %v1317, 96
    %v1321 = vpop.permute.xlu0 %1320
    %v1323 = vmul.f32 %v1318, %v1321
    %v1325 = vmul.f32 %v1305, %v1261
    %v1326 = vadd.f32 %v1323, %v1325
    %1328 = vrot.lane.b32.xlu0 %v1259, 96
    %v1329 = vpop.permute.xlu0 %1328
    %1331 = vst.msk [vmem:[#allocation2 + $0x8] sm:$0xc0] %vm747, %v1329
    %1332 = vst.msk [vmem:[#allocation2] sm:$0x3] %vm749, %v1326
    %v1333 = vld [vmem:[#allocation2] sm:$0xff]
    %v1334 = vld [vmem:[#allocation2 + $0x8] sm:$0xff]
    %v1335 = vld [vmem:[#allocation6] sm:$0xff]
    %v1336 = vld [vmem:[#allocation6 + $0x8] sm:$0xff]
    %v1337 = vld [vmem:[#allocation6 + $0x10] sm:$0xff]
    %v1338 = vld [vmem:[#allocation6 + $0x18] sm:$0xff]
    %v1339 = vld [vmem:[#allocation6 + $0x20] sm:$0xff]
    %v1340 = vld [vmem:[#allocation6 + $0x28] sm:$0xff]
    %v1341 = vld [vmem:[#allocation6 + $0x30] sm:$0xff]
    %v1342 = vld [vmem:[#allocation6 + $0x38] sm:$0xff]
    %v1343 = vld [vmem:[%s7] sm:$0x1]
    %v1344 = vperm.slane %v1343, 0
    %vm1345 = vcmask 523264
    %v1347 = vsel %vm1345, %v1333, 0
    %v1350 = vsel %vm1345, %v1334, 0
    %1352 = vmatpush.msra.mxu0 0.0
    %1353 = vmatpush.msra.mxu0 0.0
    %1354 = vmatpush.msra.mxu0 0.0
    %1355 = vmatpush.msra.mxu0 0.0
    %1356 = vmatpush.msra.mxu0 0.0
    %1357 = vmatpush.msra.mxu0 0.0
    %1358 = vmatpush.msra.mxu0 0.0
    %1359 = vmatpush.msra.mxu0 0.0
    %1360 = vmatpush.msra.mxu0 %v1342
    %1361 = vmatpush.msra.mxu0 %v1341
    %1362 = vmatpush.msra.mxu0 %v1340
    %1363 = vmatpush.msra.mxu0 %v1339
    %1364 = vmatpush.msra.mxu0 %v1338
    %1365 = vmatpush.msra.mxu0 %v1337
    %1366 = vmatpush.msra.mxu0 %v1336
    %1367 = vmatpush.msra.mxu0 %v1335
    %1368 = vmatmul.f32.gmra.mxu0 %v1347
    %v1369 = vpop.f32.mrf.mxu0
    %v1370 = vadd.f32 %v1344, %v1369
    %1371 = vmatmul.f32.gmra.mxu0 %v1350
    %v1372 = vpop.f32.mrf.mxu0
    %v1373 = vadd.f32 %v1344, %v1372
    %1374 = vdwg.mxu0
    %s1375 = scalar_lea.vmem [#allocation6], 64
    %v1376 = vld [vmem:[%s1375] sm:$0xff]
    %v1377 = vld [vmem:[%s1375 + $0x8] sm:$0xff]
    %v1378 = vld [vmem:[%s1375 + $0x10] sm:$0xff]
    %v1379 = vld [vmem:[%s1375 + $0x18] sm:$0xff]
    %v1380 = vld [vmem:[%s1375 + $0x20] sm:$0xff]
    %v1381 = vld [vmem:[%s1375 + $0x28] sm:$0xff]
    %v1382 = vld [vmem:[%s1375 + $0x30] sm:$0xff]
    %v1383 = vld [vmem:[%s1375 + $0x38] sm:$0xff]
    %v1384 = vld [vmem:[%s7 + $0x1] sm:$0x1]
    %v1385 = vperm.slane %v1384, 0
    %1386 = vmatpush.msra.mxu0 0.0
    %1387 = vmatpush.msra.mxu0 0.0
    %1388 = vmatpush.msra.mxu0 0.0
    %1389 = vmatpush.msra.mxu0 0.0
    %1390 = vmatpush.msra.mxu0 0.0
    %1391 = vmatpush.msra.mxu0 0.0
    %1392 = vmatpush.msra.mxu0 0.0
    %1393 = vmatpush.msra.mxu0 0.0
    %1394 = vmatpush.msra.mxu0 %v1383
    %1395 = vmatpush.msra.mxu0 %v1382
    %1396 = vmatpush.msra.mxu0 %v1381
    %1397 = vmatpush.msra.mxu0 %v1380
    %1398 = vmatpush.msra.mxu0 %v1379
    %1399 = vmatpush.msra.mxu0 %v1378
    %1400 = vmatpush.msra.mxu0 %v1377
    %1401 = vmatpush.msra.mxu0 %v1376
    %1402 = vmatmul.f32.gmra.mxu0 %v1347
    %v1403 = vpop.f32.mrf.mxu0
    %v1404 = vadd.f32 %v1385, %v1403
    %1405 = vmatmul.f32.gmra.mxu0 %v1350
    %v1406 = vpop.f32.mrf.mxu0
    %v1407 = vadd.f32 %v1385, %v1406
    %1408 = vdwg.mxu0
    %v1409 = vld [vmem:[#allocation8] sm:$0xff]
    %v1410 = vld [vmem:[#allocation8 + $0x8] sm:$0xff]
    %v1411 = vld [vmem:[#allocation8 + $0x10] sm:$0xff]
    %v1412 = vld [vmem:[#allocation8 + $0x18] sm:$0xff]
    %s1413 = scalar_lea.vmem [#allocation8], 32
    %v1414 = vld [vmem:[%s1413] sm:$0xff]
    %v1415 = vld [vmem:[%s1413 + $0x8] sm:$0xff]
    %v1416 = vld [vmem:[%s1413 + $0x10] sm:$0xff]
    %v1417 = vld [vmem:[%s1413 + $0x18] sm:$0xff]
    %v1418 = vld [vmem:[%s8] sm:$0x1]
    %v1419 = vld [vmem:[%s8 + $0x1] sm:$0x1]
    %1420 = vmatpush.msra.mxu0 0.0
    %1421 = vmatpush.msra.mxu0 0.0
    %1422 = vmatpush.msra.mxu0 0.0
    %1423 = vmatpush.msra.mxu0 0.0
    %1424 = vmatpush.msra.mxu0 0.0
    %1425 = vmatpush.msra.mxu0 0.0
    %1426 = vmatpush.msra.mxu0 0.0
    %1427 = vmatpush.msra.mxu0 0.0
    %1428 = vmatpush.msra.mxu0 0.0
    %1429 = vmatpush.msra.mxu0 0.0
    %1430 = vmatpush.msra.mxu0 0.0
    %1431 = vmatpush.msra.mxu0 0.0
    %1432 = vmatpush.msra.mxu0 %v1412
    %1433 = vmatpush.msra.mxu0 %v1411
    %1434 = vmatpush.msra.mxu0 %v1410
    %1435 = vmatpush.msra.mxu0 %v1409
    %1436 = vmatmul.f32.gmra.mxu0 %v162
    %v1437 = vpop.f32.mrf.mxu0
    %v1438 = vadd.f32 0.0, %v1437
    %1439 = vdwg.mxu0
    %v1440 = vadd.f32 %v1370, %v1438
    %v1441 = vxor.u32 %v1440, 2147483648
    %v1442 = vmul.f32 %v1441, 1.442695
    %v1443 = vpow.pop %v1442
    %v1444 = vadd.f32 %v1443, 1.0
    %v1445 = vrcp.pop %v1444
    %v1446 = vmul.f32 %v1444, %v1445
    %v1447 = vsub.f32 1.0, %v1446
    %v1448 = vmul.f32 %v1445, %v1447
    %v1449 = vadd.f32 %v1445, %v1448
    %vm1450 = vweird.f32 %v1444
    %vm1451 = vweird.f32 %v1445
    %vm1452 = vmor %vm1450, %vm1451
    %v1453 = vsel %vm1452, %v1445, %v1449
    %v1454 = vand.u32 2147483647, %v1444
    %vm1455 = vcmp.eq.f32.partialorder %v1454, 8.507059e+37
    %v1456 = vand.u32 %v1444, 2147483648
    %v1457 = vor.u32 1.1754944e-38, %v1456
    %v1458 = vsel %vm1455, %v1457, %v1453
    %v1459 = vmul.f32 1.0, %v1458
    %v1460 = vperm.slane %v1418, 0
    %1462 = vrot.lane.b32.xlu0 %v1460, 64
    %v1463 = vpop.permute.xlu0 %1462
    %v1465 = vadd.f32 %v1438, %v1463
    %1467 = vrot.lane.b32.xlu0 %v1465, 64
    %v1468 = vpop.permute.xlu0 %1467
    %v1470 = vmul.f32 %v1459, %v1468
    %1472 = vrot.lane.b32.xlu0 %v1470, 64
    %v1473 = vpop.permute.xlu0 %1472
    %v1475 = vadd.f32 %v1370, %v1473
    %v1476 = vtanh.pop %v1475
    %v1477 = vsub.f32 1.0, %v1459
    %1479 = vrot.lane.b32.xlu0 %v1476, 96
    %v1480 = vpop.permute.xlu0 %1479
    %v1482 = vmul.f32 %v1477, %v1480
    %v1483 = vmul.f32 %v1459, 0.0
    %v1484 = vadd.f32 %v1482, %v1483
    %1485 = vmatpush.msra.mxu0 0.0
    %1486 = vmatpush.msra.mxu0 0.0
    %1487 = vmatpush.msra.mxu0 0.0
    %1488 = vmatpush.msra.mxu0 0.0
    %1489 = vmatpush.msra.mxu0 0.0
    %1490 = vmatpush.msra.mxu0 0.0
    %1491 = vmatpush.msra.mxu0 0.0
    %1492 = vmatpush.msra.mxu0 0.0
    %1493 = vmatpush.msra.mxu0 0.0
    %1494 = vmatpush.msra.mxu0 0.0
    %1495 = vmatpush.msra.mxu0 0.0
    %1496 = vmatpush.msra.mxu0 0.0
    %1497 = vmatpush.msra.mxu0 %v1417
    %1498 = vmatpush.msra.mxu0 %v1416
    %1499 = vmatpush.msra.mxu0 %v1415
    %1500 = vmatpush.msra.mxu0 %v1414
    %1501 = vmatmul.f32.gmra.mxu0 %v162
    %v1502 = vpop.f32.mrf.mxu0
    %v1503 = vadd.f32 0.0, %v1502
    %1504 = vdwg.mxu0
    %v1506 = vrot.slane %v1503, 2
    %v1508 = vadd.f32 %v1407, %v1506
    %v1509 = vxor.u32 %v1508, 2147483648
    %v1510 = vmul.f32 %v1509, 1.442695
    %v1511 = vpow.pop %v1510
    %v1512 = vadd.f32 %v1511, 1.0
    %v1513 = vrcp.pop %v1512
    %v1514 = vmul.f32 %v1512, %v1513
    %v1515 = vsub.f32 1.0, %v1514
    %v1516 = vmul.f32 %v1513, %v1515
    %v1517 = vadd.f32 %v1513, %v1516
    %vm1518 = vweird.f32 %v1512
    %vm1519 = vweird.f32 %v1513
    %vm1520 = vmor %vm1518, %vm1519
    %v1521 = vsel %vm1520, %v1513, %v1517
    %v1522 = vand.u32 2147483647, %v1512
    %vm1523 = vcmp.eq.f32.partialorder %v1522, 8.507059e+37
    %v1524 = vand.u32 %v1512, 2147483648
    %v1525 = vor.u32 1.1754944e-38, %v1524
    %v1526 = vsel %vm1523, %v1525, %v1521
    %v1527 = vmul.f32 1.0, %v1526
    %v1528 = vperm.slane %v1419, 0
    %1530 = vrot.lane.b32.xlu0 %v1528, 64
    %v1531 = vpop.permute.xlu0 %1530
    %v1533 = vadd.f32 %v1503, %v1531
    %v1535 = vrot.slane %v1533, 2
    %1536 = vrot.lane.b32.xlu0 %v1535, 64
    %v1537 = vpop.permute.xlu0 %1536
    %v1539 = vmul.f32 %v1527, %v1537
    %1541 = vrot.lane.b32.xlu0 %v1539, 64
    %v1542 = vpop.permute.xlu0 %1541
    %v1544 = vadd.f32 %v1407, %v1542
    %v1545 = vtanh.pop %v1544
    %v1546 = vsub.f32 1.0, %v1527
    %1548 = vrot.lane.b32.xlu0 %v1545, 96
    %v1549 = vpop.permute.xlu0 %1548
    %v1551 = vmul.f32 %v1546, %v1549
    %v1552 = vmul.f32 %v1527, 0.0
    %v1553 = vadd.f32 %v1551, %v1552
    %1555 = vrot.lane.b32.xlu0 %v1484, 96
    %v1556 = vpop.permute.xlu0 %1555
    %v1557 = vsel %vm160, %v1556, 0
    %1559 = vmatpush.msra.mxu0 0.0
    %1560 = vmatpush.msra.mxu0 0.0
    %1561 = vmatpush.msra.mxu0 0.0
    %1562 = vmatpush.msra.mxu0 0.0
    %1563 = vmatpush.msra.mxu0 0.0
    %1564 = vmatpush.msra.mxu0 0.0
    %1565 = vmatpush.msra.mxu0 0.0
    %1566 = vmatpush.msra.mxu0 0.0
    %1567 = vmatpush.msra.mxu0 0.0
    %1568 = vmatpush.msra.mxu0 0.0
    %1569 = vmatpush.msra.mxu0 0.0
    %1570 = vmatpush.msra.mxu0 0.0
    %1571 = vmatpush.msra.mxu0 %v1412
    %1572 = vmatpush.msra.mxu0 %v1411
    %1573 = vmatpush.msra.mxu0 %v1410
    %1574 = vmatpush.msra.mxu0 %v1409
    %1575 = vmatmul.f32.gmra.mxu0 %v1557
    %v1576 = vpop.f32.mrf.mxu0
    %v1577 = vadd.f32 0.0, %v1576
    %1578 = vdwg.mxu0
    %v1580 = vrot.slane %v1577, 6
    %v1582 = vadd.f32 %v1370, %v1580
    %v1583 = vxor.u32 %v1582, 2147483648
    %v1584 = vmul.f32 %v1583, 1.442695
    %v1585 = vpow.pop %v1584
    %v1586 = vadd.f32 %v1585, 1.0
    %v1587 = vrcp.pop %v1586
    %v1588 = vmul.f32 %v1586, %v1587
    %v1589 = vsub.f32 1.0, %v1588
    %v1590 = vmul.f32 %v1587, %v1589
    %v1591 = vadd.f32 %v1587, %v1590
    %vm1592 = vweird.f32 %v1586
    %vm1593 = vweird.f32 %v1587
    %vm1594 = vmor %vm1592, %vm1593
    %v1595 = vsel %vm1594, %v1587, %v1591
    %v1596 = vand.u32 2147483647, %v1586
    %vm1597 = vcmp.eq.f32.partialorder %v1596, 8.507059e+37
    %v1598 = vand.u32 %v1586, 2147483648
    %v1599 = vor.u32 1.1754944e-38, %v1598
    %v1600 = vsel %vm1597, %v1599, %v1595
    %v1601 = vmul.f32 1.0, %v1600
    %v1602 = vadd.f32 %v1577, %v1463
    %v1604 = vrot.slane %v1602, 6
    %1605 = vrot.lane.b32.xlu0 %v1604, 64
    %v1606 = vpop.permute.xlu0 %1605
    %v1608 = vmul.f32 %v1601, %v1606
    %1610 = vrot.lane.b32.xlu0 %v1608, 64
    %v1611 = vpop.permute.xlu0 %1610
    %v1613 = vadd.f32 %v1370, %v1611
    %v1614 = vtanh.pop %v1613
    %v1615 = vsub.f32 1.0, %v1601
    %1617 = vrot.lane.b32.xlu0 %v1614, 96
    %v1618 = vpop.permute.xlu0 %1617
    %v1620 = vmul.f32 %v1615, %v1618
    %v1621 = vrot.slane %v1484, 6
    %v1623 = vmul.f32 %v1601, %v1621
    %v1624 = vadd.f32 %v1620, %v1623
    %v1626 = vrot.slane %v1553, 6
    %1627 = vrot.lane.b32.xlu0 %v1626, 96
    %v1628 = vpop.permute.xlu0 %1627
    %v1629 = vsel %vm160, %v1628, 0
    %1631 = vmatpush.msra.mxu0 0.0
    %1632 = vmatpush.msra.mxu0 0.0
    %1633 = vmatpush.msra.mxu0 0.0
    %1634 = vmatpush.msra.mxu0 0.0
    %1635 = vmatpush.msra.mxu0 0.0
    %1636 = vmatpush.msra.mxu0 0.0
    %1637 = vmatpush.msra.mxu0 0.0
    %1638 = vmatpush.msra.mxu0 0.0
    %1639 = vmatpush.msra.mxu0 0.0
    %1640 = vmatpush.msra.mxu0 0.0
    %1641 = vmatpush.msra.mxu0 0.0
    %1642 = vmatpush.msra.mxu0 0.0
    %1643 = vmatpush.msra.mxu0 %v1417
    %1644 = vmatpush.msra.mxu0 %v1416
    %1645 = vmatpush.msra.mxu0 %v1415
    %1646 = vmatpush.msra.mxu0 %v1414
    %1647 = vmatmul.f32.gmra.mxu0 %v1629
    %v1648 = vpop.f32.mrf.mxu0
    %v1649 = vadd.f32 0.0, %v1648
    %1650 = vdwg.mxu0
    %v1652 = vrot.slane %v1649, 4
    %v1654 = vadd.f32 %v1407, %v1652
    %v1655 = vxor.u32 %v1654, 2147483648
    %v1656 = vmul.f32 %v1655, 1.442695
    %v1657 = vpow.pop %v1656
    %v1658 = vadd.f32 %v1657, 1.0
    %v1659 = vrcp.pop %v1658
    %v1660 = vmul.f32 %v1658, %v1659
    %v1661 = vsub.f32 1.0, %v1660
    %v1662 = vmul.f32 %v1659, %v1661
    %v1663 = vadd.f32 %v1659, %v1662
    %vm1664 = vweird.f32 %v1658
    %vm1665 = vweird.f32 %v1659
    %vm1666 = vmor %vm1664, %vm1665
    %v1667 = vsel %vm1666, %v1659, %v1663
    %v1668 = vand.u32 2147483647, %v1658
    %vm1669 = vcmp.eq.f32.partialorder %v1668, 8.507059e+37
    %v1670 = vand.u32 %v1658, 2147483648
    %v1671 = vor.u32 1.1754944e-38, %v1670
    %v1672 = vsel %vm1669, %v1671, %v1667
    %v1673 = vmul.f32 1.0, %v1672
    %v1674 = vadd.f32 %v1649, %v1531
    %v1676 = vrot.slane %v1674, 4
    %1677 = vrot.lane.b32.xlu0 %v1676, 64
    %v1678 = vpop.permute.xlu0 %1677
    %v1680 = vmul.f32 %v1673, %v1678
    %1682 = vrot.lane.b32.xlu0 %v1680, 64
    %v1683 = vpop.permute.xlu0 %1682
    %v1685 = vadd.f32 %v1407, %v1683
    %v1686 = vtanh.pop %v1685
    %v1687 = vsub.f32 1.0, %v1673
    %1689 = vrot.lane.b32.xlu0 %v1686, 96
    %v1690 = vpop.permute.xlu0 %1689
    %v1692 = vmul.f32 %v1687, %v1690
    %v1693 = vrot.slane %v1553, 2
    %v1695 = vmul.f32 %v1673, %v1693
    %v1696 = vadd.f32 %v1692, %v1695
    %v1698 = vrot.slane %v1624, 2
    %1699 = vrot.lane.b32.xlu0 %v1698, 96
    %v1700 = vpop.permute.xlu0 %1699
    %v1701 = vsel %vm160, %v1700, 0
    %1703 = vmatpush.msra.mxu0 0.0
    %1704 = vmatpush.msra.mxu0 0.0
    %1705 = vmatpush.msra.mxu0 0.0
    %1706 = vmatpush.msra.mxu0 0.0
    %1707 = vmatpush.msra.mxu0 0.0
    %1708 = vmatpush.msra.mxu0 0.0
    %1709 = vmatpush.msra.mxu0 0.0
    %1710 = vmatpush.msra.mxu0 0.0
    %1711 = vmatpush.msra.mxu0 0.0
    %1712 = vmatpush.msra.mxu0 0.0
    %1713 = vmatpush.msra.mxu0 0.0
    %1714 = vmatpush.msra.mxu0 0.0
    %1715 = vmatpush.msra.mxu0 %v1412
    %1716 = vmatpush.msra.mxu0 %v1411
    %1717 = vmatpush.msra.mxu0 %v1410
    %1718 = vmatpush.msra.mxu0 %v1409
    %1719 = vmatmul.f32.gmra.mxu0 %v1701
    %v1720 = vpop.f32.mrf.mxu0
    %v1721 = vadd.f32 0.0, %v1720
    %1722 = vdwg.mxu0
    %v1724 = vrot.slane %v1721, 4
    %v1726 = vadd.f32 %v1370, %v1724
    %v1727 = vxor.u32 %v1726, 2147483648
    %v1728 = vmul.f32 %v1727, 1.442695
    %v1729 = vpow.pop %v1728
    %v1730 = vadd.f32 %v1729, 1.0
    %v1731 = vrcp.pop %v1730
    %v1732 = vmul.f32 %v1730, %v1731
    %v1733 = vsub.f32 1.0, %v1732
    %v1734 = vmul.f32 %v1731, %v1733
    %v1735 = vadd.f32 %v1731, %v1734
    %vm1736 = vweird.f32 %v1730
    %vm1737 = vweird.f32 %v1731
    %vm1738 = vmor %vm1736, %vm1737
    %v1739 = vsel %vm1738, %v1731, %v1735
    %v1740 = vand.u32 2147483647, %v1730
    %vm1741 = vcmp.eq.f32.partialorder %v1740, 8.507059e+37
    %v1742 = vand.u32 %v1730, 2147483648
    %v1743 = vor.u32 1.1754944e-38, %v1742
    %v1744 = vsel %vm1741, %v1743, %v1739
    %v1745 = vmul.f32 1.0, %v1744
    %v1746 = vadd.f32 %v1721, %v1463
    %v1748 = vrot.slane %v1746, 4
    %1749 = vrot.lane.b32.xlu0 %v1748, 64
    %v1750 = vpop.permute.xlu0 %1749
    %v1752 = vmul.f32 %v1745, %v1750
    %1754 = vrot.lane.b32.xlu0 %v1752, 64
    %v1755 = vpop.permute.xlu0 %1754
    %v1757 = vadd.f32 %v1370, %v1755
    %v1758 = vtanh.pop %v1757
    %v1759 = vsub.f32 1.0, %v1745
    %1761 = vrot.lane.b32.xlu0 %v1758, 96
    %v1762 = vpop.permute.xlu0 %1761
    %v1764 = vmul.f32 %v1759, %v1762
    %v1765 = vrot.slane %v1624, 6
    %v1767 = vmul.f32 %v1745, %v1765
    %v1768 = vadd.f32 %v1764, %v1767
    %v1770 = vrot.slane %v1696, 4
    %1771 = vrot.lane.b32.xlu0 %v1770, 96
    %v1772 = vpop.permute.xlu0 %1771
    %v1773 = vsel %vm160, %v1772, 0
    %1775 = vmatpush.msra.mxu0 0.0
    %1776 = vmatpush.msra.mxu0 0.0
    %1777 = vmatpush.msra.mxu0 0.0
    %1778 = vmatpush.msra.mxu0 0.0
    %1779 = vmatpush.msra.mxu0 0.0
    %1780 = vmatpush.msra.mxu0 0.0
    %1781 = vmatpush.msra.mxu0 0.0
    %1782 = vmatpush.msra.mxu0 0.0
    %1783 = vmatpush.msra.mxu0 0.0
    %1784 = vmatpush.msra.mxu0 0.0
    %1785 = vmatpush.msra.mxu0 0.0
    %1786 = vmatpush.msra.mxu0 0.0
    %1787 = vmatpush.msra.mxu0 %v1417
    %1788 = vmatpush.msra.mxu0 %v1416
    %1789 = vmatpush.msra.mxu0 %v1415
    %1790 = vmatpush.msra.mxu0 %v1414
    %1791 = vmatmul.f32.gmra.mxu0 %v1773
    %v1792 = vpop.f32.mrf.mxu0
    %v1793 = vadd.f32 0.0, %v1792
    %1794 = vdwg.mxu0
    %v1796 = vrot.slane %v1793, 6
    %v1798 = vadd.f32 %v1407, %v1796
    %v1799 = vxor.u32 %v1798, 2147483648
    %v1800 = vmul.f32 %v1799, 1.442695
    %v1801 = vpow.pop %v1800
    %v1802 = vadd.f32 %v1801, 1.0
    %v1803 = vrcp.pop %v1802
    %v1804 = vmul.f32 %v1802, %v1803
    %v1805 = vsub.f32 1.0, %v1804
    %v1806 = vmul.f32 %v1803, %v1805
    %v1807 = vadd.f32 %v1803, %v1806
    %vm1808 = vweird.f32 %v1802
    %vm1809 = vweird.f32 %v1803
    %vm1810 = vmor %vm1808, %vm1809
    %v1811 = vsel %vm1810, %v1803, %v1807
    %v1812 = vand.u32 2147483647, %v1802
    %vm1813 = vcmp.eq.f32.partialorder %v1812, 8.507059e+37
    %v1814 = vand.u32 %v1802, 2147483648
    %v1815 = vor.u32 1.1754944e-38, %v1814
    %v1816 = vsel %vm1813, %v1815, %v1811
    %v1817 = vmul.f32 1.0, %v1816
    %v1818 = vadd.f32 %v1793, %v1531
    %v1820 = vrot.slane %v1818, 6
    %1821 = vrot.lane.b32.xlu0 %v1820, 64
    %v1822 = vpop.permute.xlu0 %1821
    %v1824 = vmul.f32 %v1817, %v1822
    %1826 = vrot.lane.b32.xlu0 %v1824, 64
    %v1827 = vpop.permute.xlu0 %1826
    %v1829 = vadd.f32 %v1407, %v1827
    %v1830 = vtanh.pop %v1829
    %v1831 = vsub.f32 1.0, %v1817
    %1833 = vrot.lane.b32.xlu0 %v1830, 96
    %v1834 = vpop.permute.xlu0 %1833
    %v1836 = vmul.f32 %v1831, %v1834
    %v1837 = vrot.slane %v1696, 2
    %v1839 = vmul.f32 %v1817, %v1837
    %v1840 = vadd.f32 %v1836, %v1839
    %v1842 = vrot.slane %v1768, 4
    %1843 = vrot.lane.b32.xlu0 %v1842, 96
    %v1844 = vpop.permute.xlu0 %1843
    %v1845 = vsel %vm160, %v1844, 0
    %1847 = vmatpush.msra.mxu0 0.0
    %1848 = vmatpush.msra.mxu0 0.0
    %1849 = vmatpush.msra.mxu0 0.0
    %1850 = vmatpush.msra.mxu0 0.0
    %1851 = vmatpush.msra.mxu0 0.0
    %1852 = vmatpush.msra.mxu0 0.0
    %1853 = vmatpush.msra.mxu0 0.0
    %1854 = vmatpush.msra.mxu0 0.0
    %1855 = vmatpush.msra.mxu0 0.0
    %1856 = vmatpush.msra.mxu0 0.0
    %1857 = vmatpush.msra.mxu0 0.0
    %1858 = vmatpush.msra.mxu0 0.0
    %1859 = vmatpush.msra.mxu0 %v1412
    %1860 = vmatpush.msra.mxu0 %v1411
    %1861 = vmatpush.msra.mxu0 %v1410
    %1862 = vmatpush.msra.mxu0 %v1409
    %1863 = vmatmul.f32.gmra.mxu0 %v1845
    %v1864 = vpop.f32.mrf.mxu0
    %v1865 = vadd.f32 0.0, %v1864
    %1866 = vdwg.mxu0
    %v1868 = vrot.slane %v1865, 2
    %v1870 = vadd.f32 %v1370, %v1868
    %v1871 = vxor.u32 %v1870, 2147483648
    %v1872 = vmul.f32 %v1871, 1.442695
    %v1873 = vpow.pop %v1872
    %v1874 = vadd.f32 %v1873, 1.0
    %v1875 = vrcp.pop %v1874
    %v1876 = vmul.f32 %v1874, %v1875
    %v1877 = vsub.f32 1.0, %v1876
    %v1878 = vmul.f32 %v1875, %v1877
    %v1879 = vadd.f32 %v1875, %v1878
    %vm1880 = vweird.f32 %v1874
    %vm1881 = vweird.f32 %v1875
    %vm1882 = vmor %vm1880, %vm1881
    %v1883 = vsel %vm1882, %v1875, %v1879
    %v1884 = vand.u32 2147483647, %v1874
    %vm1885 = vcmp.eq.f32.partialorder %v1884, 8.507059e+37
    %v1886 = vand.u32 %v1874, 2147483648
    %v1887 = vor.u32 1.1754944e-38, %v1886
    %v1888 = vsel %vm1885, %v1887, %v1883
    %v1889 = vmul.f32 1.0, %v1888
    %v1890 = vadd.f32 %v1865, %v1463
    %v1892 = vrot.slane %v1890, 2
    %1893 = vrot.lane.b32.xlu0 %v1892, 64
    %v1894 = vpop.permute.xlu0 %1893
    %v1896 = vmul.f32 %v1889, %v1894
    %1898 = vrot.lane.b32.xlu0 %v1896, 64
    %v1899 = vpop.permute.xlu0 %1898
    %v1901 = vadd.f32 %v1370, %v1899
    %v1902 = vtanh.pop %v1901
    %v1903 = vsub.f32 1.0, %v1889
    %1905 = vrot.lane.b32.xlu0 %v1902, 96
    %v1906 = vpop.permute.xlu0 %1905
    %v1908 = vmul.f32 %v1903, %v1906
    %v1909 = vrot.slane %v1768, 6
    %v1911 = vmul.f32 %v1889, %v1909
    %v1912 = vadd.f32 %v1908, %v1911
    %v1914 = vrot.slane %v1840, 2
    %1915 = vrot.lane.b32.xlu0 %v1914, 96
    %v1916 = vpop.permute.xlu0 %1915
    %v1917 = vsel %vm160, %v1916, 0
    %1919 = vmatpush.msra.mxu0 0.0
    %1920 = vmatpush.msra.mxu0 0.0
    %1921 = vmatpush.msra.mxu0 0.0
    %1922 = vmatpush.msra.mxu0 0.0
    %1923 = vmatpush.msra.mxu0 0.0
    %1924 = vmatpush.msra.mxu0 0.0
    %1925 = vmatpush.msra.mxu0 0.0
    %1926 = vmatpush.msra.mxu0 0.0
    %1927 = vmatpush.msra.mxu0 0.0
    %1928 = vmatpush.msra.mxu0 0.0
    %1929 = vmatpush.msra.mxu0 0.0
    %1930 = vmatpush.msra.mxu0 0.0
    %1931 = vmatpush.msra.mxu0 %v1417
    %1932 = vmatpush.msra.mxu0 %v1416
    %1933 = vmatpush.msra.mxu0 %v1415
    %1934 = vmatpush.msra.mxu0 %v1414
    %1935 = vmatmul.f32.gmra.mxu0 %v1917
    %v1936 = vpop.f32.mrf.mxu0
    %v1937 = vadd.f32 0.0, %v1936
    %1938 = vdwg.mxu0
    %v1939 = vadd.f32 %v1407, %v1937
    %v1940 = vxor.u32 %v1939, 2147483648
    %v1941 = vmul.f32 %v1940, 1.442695
    %v1942 = vpow.pop %v1941
    %v1943 = vadd.f32 %v1942, 1.0
    %v1944 = vrcp.pop %v1943
    %v1945 = vmul.f32 %v1943, %v1944
    %v1946 = vsub.f32 1.0, %v1945
    %v1947 = vmul.f32 %v1944, %v1946
    %v1948 = vadd.f32 %v1944, %v1947
    %vm1949 = vweird.f32 %v1943
    %vm1950 = vweird.f32 %v1944
    %vm1951 = vmor %vm1949, %vm1950
    %v1952 = vsel %vm1951, %v1944, %v1948
    %v1953 = vand.u32 2147483647, %v1943
    %vm1954 = vcmp.eq.f32.partialorder %v1953, 8.507059e+37
    %v1955 = vand.u32 %v1943, 2147483648
    %v1956 = vor.u32 1.1754944e-38, %v1955
    %v1957 = vsel %vm1954, %v1956, %v1952
    %v1958 = vmul.f32 1.0, %v1957
    %v1959 = vadd.f32 %v1937, %v1531
    %1961 = vrot.lane.b32.xlu0 %v1959, 64
    %v1962 = vpop.permute.xlu0 %1961
    %v1964 = vmul.f32 %v1958, %v1962
    %1966 = vrot.lane.b32.xlu0 %v1964, 64
    %v1967 = vpop.permute.xlu0 %1966
    %v1969 = vadd.f32 %v1407, %v1967
    %v1970 = vtanh.pop %v1969
    %v1971 = vsub.f32 1.0, %v1958
    %1973 = vrot.lane.b32.xlu0 %v1970, 96
    %v1974 = vpop.permute.xlu0 %1973
    %v1976 = vmul.f32 %v1971, %v1974
    %v1978 = vmul.f32 %v1958, %v1914
    %v1979 = vadd.f32 %v1976, %v1978
    %v1981 = vrot.slane %v1912, 6
    %1982 = vrot.lane.b32.xlu0 %v1981, 96
    %v1983 = vpop.permute.xlu0 %1982
    %v1984 = vsel %vm160, %v1983, 0
    %1986 = vmatpush.msra.mxu0 0.0
    %1987 = vmatpush.msra.mxu0 0.0
    %1988 = vmatpush.msra.mxu0 0.0
    %1989 = vmatpush.msra.mxu0 0.0
    %1990 = vmatpush.msra.mxu0 0.0
    %1991 = vmatpush.msra.mxu0 0.0
    %1992 = vmatpush.msra.mxu0 0.0
    %1993 = vmatpush.msra.mxu0 0.0
    %1994 = vmatpush.msra.mxu0 0.0
    %1995 = vmatpush.msra.mxu0 0.0
    %1996 = vmatpush.msra.mxu0 0.0
    %1997 = vmatpush.msra.mxu0 0.0
    %1998 = vmatpush.msra.mxu0 %v1412
    %1999 = vmatpush.msra.mxu0 %v1411
    %2000 = vmatpush.msra.mxu0 %v1410
    %2001 = vmatpush.msra.mxu0 %v1409
    %2002 = vmatmul.f32.gmra.mxu0 %v1984
    %v2003 = vpop.f32.mrf.mxu0
    %v2004 = vadd.f32 0.0, %v2003
    %2005 = vdwg.mxu0
    %v2006 = vadd.f32 %v1373, %v2004
    %v2007 = vxor.u32 %v2006, 2147483648
    %v2008 = vmul.f32 %v2007, 1.442695
    %v2009 = vpow.pop %v2008
    %v2010 = vadd.f32 %v2009, 1.0
    %v2011 = vrcp.pop %v2010
    %v2012 = vmul.f32 %v2010, %v2011
    %v2013 = vsub.f32 1.0, %v2012
    %v2014 = vmul.f32 %v2011, %v2013
    %v2015 = vadd.f32 %v2011, %v2014
    %vm2016 = vweird.f32 %v2010
    %vm2017 = vweird.f32 %v2011
    %vm2018 = vmor %vm2016, %vm2017
    %v2019 = vsel %vm2018, %v2011, %v2015
    %v2020 = vand.u32 2147483647, %v2010
    %vm2021 = vcmp.eq.f32.partialorder %v2020, 8.507059e+37
    %v2022 = vand.u32 %v2010, 2147483648
    %v2023 = vor.u32 1.1754944e-38, %v2022
    %v2024 = vsel %vm2021, %v2023, %v2019
    %v2025 = vmul.f32 1.0, %v2024
    %v2026 = vadd.f32 %v2004, %v1463
    %2028 = vrot.lane.b32.xlu0 %v2026, 64
    %v2029 = vpop.permute.xlu0 %2028
    %v2031 = vmul.f32 %v2025, %v2029
    %2033 = vrot.lane.b32.xlu0 %v2031, 64
    %v2034 = vpop.permute.xlu0 %2033
    %v2036 = vadd.f32 %v1373, %v2034
    %v2037 = vtanh.pop %v2036
    %v2038 = vsub.f32 1.0, %v2025
    %2040 = vrot.lane.b32.xlu0 %v2037, 96
    %v2041 = vpop.permute.xlu0 %2040
    %v2043 = vmul.f32 %v2038, %v2041
    %v2045 = vmul.f32 %v2025, %v1981
    %v2046 = vadd.f32 %v2043, %v2045
    %2048 = vrot.lane.b32.xlu0 %v1979, 96
    %v2049 = vpop.permute.xlu0 %2048
    %v2050 = vsel %vm160, %v2049, 0
    %2052 = vmatpush.msra.mxu0 0.0
    %2053 = vmatpush.msra.mxu0 0.0
    %2054 = vmatpush.msra.mxu0 0.0
    %2055 = vmatpush.msra.mxu0 0.0
    %2056 = vmatpush.msra.mxu0 0.0
    %2057 = vmatpush.msra.mxu0 0.0
    %2058 = vmatpush.msra.mxu0 0.0
    %2059 = vmatpush.msra.mxu0 0.0
    %2060 = vmatpush.msra.mxu0 0.0
    %2061 = vmatpush.msra.mxu0 0.0
    %2062 = vmatpush.msra.mxu0 0.0
    %2063 = vmatpush.msra.mxu0 0.0
    %2064 = vmatpush.msra.mxu0 %v1417
    %2065 = vmatpush.msra.mxu0 %v1416
    %2066 = vmatpush.msra.mxu0 %v1415
    %2067 = vmatpush.msra.mxu0 %v1414
    %2068 = vmatmul.f32.gmra.mxu0 %v2050
    %v2069 = vpop.f32.mrf.mxu0
    %v2070 = vadd.f32 0.0, %v2069
    %2071 = vdwg.mxu0
    %v2073 = vrot.slane %v2070, 2
    %v2075 = vadd.f32 %v1404, %v2073
    %v2076 = vxor.u32 %v2075, 2147483648
    %v2077 = vmul.f32 %v2076, 1.442695
    %v2078 = vpow.pop %v2077
    %v2079 = vadd.f32 %v2078, 1.0
    %v2080 = vrcp.pop %v2079
    %v2081 = vmul.f32 %v2079, %v2080
    %v2082 = vsub.f32 1.0, %v2081
    %v2083 = vmul.f32 %v2080, %v2082
    %v2084 = vadd.f32 %v2080, %v2083
    %vm2085 = vweird.f32 %v2079
    %vm2086 = vweird.f32 %v2080
    %vm2087 = vmor %vm2085, %vm2086
    %v2088 = vsel %vm2087, %v2080, %v2084
    %v2089 = vand.u32 2147483647, %v2079
    %vm2090 = vcmp.eq.f32.partialorder %v2089, 8.507059e+37
    %v2091 = vand.u32 %v2079, 2147483648
    %v2092 = vor.u32 1.1754944e-38, %v2091
    %v2093 = vsel %vm2090, %v2092, %v2088
    %v2094 = vmul.f32 1.0, %v2093
    %v2095 = vadd.f32 %v2070, %v1531
    %v2097 = vrot.slane %v2095, 2
    %2098 = vrot.lane.b32.xlu0 %v2097, 64
    %v2099 = vpop.permute.xlu0 %2098
    %v2101 = vmul.f32 %v2094, %v2099
    %2103 = vrot.lane.b32.xlu0 %v2101, 64
    %v2104 = vpop.permute.xlu0 %2103
    %v2106 = vadd.f32 %v1404, %v2104
    %v2107 = vtanh.pop %v2106
    %v2108 = vsub.f32 1.0, %v2094
    %2110 = vrot.lane.b32.xlu0 %v2107, 96
    %v2111 = vpop.permute.xlu0 %2110
    %v2113 = vmul.f32 %v2108, %v2111
    %v2114 = vrot.slane %v1979, 2
    %v2116 = vmul.f32 %v2094, %v2114
    %v2117 = vadd.f32 %v2113, %v2116
    %2119 = vrot.lane.b32.xlu0 %v2046, 96
    %v2120 = vpop.permute.xlu0 %2119
    %v2121 = vsel %vm160, %v2120, 0
    %2123 = vmatpush.msra.mxu0 0.0
    %2124 = vmatpush.msra.mxu0 0.0
    %2125 = vmatpush.msra.mxu0 0.0
    %2126 = vmatpush.msra.mxu0 0.0
    %2127 = vmatpush.msra.mxu0 0.0
    %2128 = vmatpush.msra.mxu0 0.0
    %2129 = vmatpush.msra.mxu0 0.0
    %2130 = vmatpush.msra.mxu0 0.0
    %2131 = vmatpush.msra.mxu0 0.0
    %2132 = vmatpush.msra.mxu0 0.0
    %2133 = vmatpush.msra.mxu0 0.0
    %2134 = vmatpush.msra.mxu0 0.0
    %2135 = vmatpush.msra.mxu0 %v1412
    %2136 = vmatpush.msra.mxu0 %v1411
    %2137 = vmatpush.msra.mxu0 %v1410
    %2138 = vmatpush.msra.mxu0 %v1409
    %2139 = vmatmul.f32.gmra.mxu0 %v2121
    %v2140 = vpop.f32.mrf.mxu0
    %v2141 = vadd.f32 0.0, %v2140
    %2142 = vdwg.mxu0
    %v2144 = vrot.slane %v2141, 6
    %v2146 = vadd.f32 %v1373, %v2144
    %v2147 = vxor.u32 %v2146, 2147483648
    %v2148 = vmul.f32 %v2147, 1.442695
    %v2149 = vpow.pop %v2148
    %v2150 = vadd.f32 %v2149, 1.0
    %v2151 = vrcp.pop %v2150
    %v2152 = vmul.f32 %v2150, %v2151
    %v2153 = vsub.f32 1.0, %v2152
    %v2154 = vmul.f32 %v2151, %v2153
    %v2155 = vadd.f32 %v2151, %v2154
    %vm2156 = vweird.f32 %v2150
    %vm2157 = vweird.f32 %v2151
    %vm2158 = vmor %vm2156, %vm2157
    %v2159 = vsel %vm2158, %v2151, %v2155
    %v2160 = vand.u32 2147483647, %v2150
    %vm2161 = vcmp.eq.f32.partialorder %v2160, 8.507059e+37
    %v2162 = vand.u32 %v2150, 2147483648
    %v2163 = vor.u32 1.1754944e-38, %v2162
    %v2164 = vsel %vm2161, %v2163, %v2159
    %v2165 = vmul.f32 1.0, %v2164
    %v2166 = vadd.f32 %v2141, %v1463
    %v2168 = vrot.slane %v2166, 6
    %2169 = vrot.lane.b32.xlu0 %v2168, 64
    %v2170 = vpop.permute.xlu0 %2169
    %v2172 = vmul.f32 %v2165, %v2170
    %2174 = vrot.lane.b32.xlu0 %v2172, 64
    %v2175 = vpop.permute.xlu0 %2174
    %v2177 = vadd.f32 %v1373, %v2175
    %v2178 = vtanh.pop %v2177
    %v2179 = vsub.f32 1.0, %v2165
    %2181 = vrot.lane.b32.xlu0 %v2178, 96
    %v2182 = vpop.permute.xlu0 %2181
    %v2184 = vmul.f32 %v2179, %v2182
    %v2185 = vrot.slane %v2046, 6
    %v2187 = vmul.f32 %v2165, %v2185
    %v2188 = vadd.f32 %v2184, %v2187
    %v2190 = vrot.slane %v2117, 6
    %2191 = vrot.lane.b32.xlu0 %v2190, 96
    %v2192 = vpop.permute.xlu0 %2191
    %v2193 = vsel %vm160, %v2192, 0
    %2195 = vmatpush.msra.mxu0 0.0
    %2196 = vmatpush.msra.mxu0 0.0
    %2197 = vmatpush.msra.mxu0 0.0
    %2198 = vmatpush.msra.mxu0 0.0
    %2199 = vmatpush.msra.mxu0 0.0
    %2200 = vmatpush.msra.mxu0 0.0
    %2201 = vmatpush.msra.mxu0 0.0
    %2202 = vmatpush.msra.mxu0 0.0
    %2203 = vmatpush.msra.mxu0 0.0
    %2204 = vmatpush.msra.mxu0 0.0
    %2205 = vmatpush.msra.mxu0 0.0
    %2206 = vmatpush.msra.mxu0 0.0
    %2207 = vmatpush.msra.mxu0 %v1417
    %2208 = vmatpush.msra.mxu0 %v1416
    %2209 = vmatpush.msra.mxu0 %v1415
    %2210 = vmatpush.msra.mxu0 %v1414
    %2211 = vmatmul.f32.gmra.mxu0 %v2193
    %v2212 = vpop.f32.mrf.mxu0
    %v2213 = vadd.f32 0.0, %v2212
    %2214 = vdwg.mxu0
    %v2216 = vrot.slane %v2213, 4
    %v2218 = vadd.f32 %v1404, %v2216
    %v2219 = vxor.u32 %v2218, 2147483648
    %v2220 = vmul.f32 %v2219, 1.442695
    %v2221 = vpow.pop %v2220
    %v2222 = vadd.f32 %v2221, 1.0
    %v2223 = vrcp.pop %v2222
    %v2224 = vmul.f32 %v2222, %v2223
    %v2225 = vsub.f32 1.0, %v2224
    %v2226 = vmul.f32 %v2223, %v2225
    %v2227 = vadd.f32 %v2223, %v2226
    %vm2228 = vweird.f32 %v2222
    %vm2229 = vweird.f32 %v2223
    %vm2230 = vmor %vm2228, %vm2229
    %v2231 = vsel %vm2230, %v2223, %v2227
    %v2232 = vand.u32 2147483647, %v2222
    %vm2233 = vcmp.eq.f32.partialorder %v2232, 8.507059e+37
    %v2234 = vand.u32 %v2222, 2147483648
    %v2235 = vor.u32 1.1754944e-38, %v2234
    %v2236 = vsel %vm2233, %v2235, %v2231
    %v2237 = vmul.f32 1.0, %v2236
    %v2238 = vadd.f32 %v2213, %v1531
    %v2240 = vrot.slane %v2238, 4
    %2241 = vrot.lane.b32.xlu0 %v2240, 64
    %v2242 = vpop.permute.xlu0 %2241
    %v2244 = vmul.f32 %v2237, %v2242
    %2246 = vrot.lane.b32.xlu0 %v2244, 64
    %v2247 = vpop.permute.xlu0 %2246
    %v2249 = vadd.f32 %v1404, %v2247
    %v2250 = vtanh.pop %v2249
    %v2251 = vsub.f32 1.0, %v2237
    %2253 = vrot.lane.b32.xlu0 %v2250, 96
    %v2254 = vpop.permute.xlu0 %2253
    %v2256 = vmul.f32 %v2251, %v2254
    %v2257 = vrot.slane %v2117, 2
    %v2259 = vmul.f32 %v2237, %v2257
    %v2260 = vadd.f32 %v2256, %v2259
    %v2262 = vrot.slane %v2188, 2
    %2263 = vrot.lane.b32.xlu0 %v2262, 96
    %v2264 = vpop.permute.xlu0 %2263
    %v2265 = vsel %vm160, %v2264, 0
    %2267 = vmatpush.msra.mxu0 0.0
    %2268 = vmatpush.msra.mxu0 0.0
    %2269 = vmatpush.msra.mxu0 0.0
    %2270 = vmatpush.msra.mxu0 0.0
    %2271 = vmatpush.msra.mxu0 0.0
    %2272 = vmatpush.msra.mxu0 0.0
    %2273 = vmatpush.msra.mxu0 0.0
    %2274 = vmatpush.msra.mxu0 0.0
    %2275 = vmatpush.msra.mxu0 0.0
    %2276 = vmatpush.msra.mxu0 0.0
    %2277 = vmatpush.msra.mxu0 0.0
    %2278 = vmatpush.msra.mxu0 0.0
    %2279 = vmatpush.msra.mxu0 %v1412
    %2280 = vmatpush.msra.mxu0 %v1411
    %2281 = vmatpush.msra.mxu0 %v1410
    %2282 = vmatpush.msra.mxu0 %v1409
    %2283 = vmatmul.f32.gmra.mxu0 %v2265
    %v2284 = vpop.f32.mrf.mxu0
    %v2285 = vadd.f32 0.0, %v2284
    %2286 = vdwg.mxu0
    %v2288 = vrot.slane %v2285, 4
    %v2290 = vadd.f32 %v1373, %v2288
    %v2291 = vxor.u32 %v2290, 2147483648
    %v2292 = vmul.f32 %v2291, 1.442695
    %v2293 = vpow.pop %v2292
    %v2294 = vadd.f32 %v2293, 1.0
    %v2295 = vrcp.pop %v2294
    %v2296 = vmul.f32 %v2294, %v2295
    %v2297 = vsub.f32 1.0, %v2296
    %v2298 = vmul.f32 %v2295, %v2297
    %v2299 = vadd.f32 %v2295, %v2298
    %vm2300 = vweird.f32 %v2294
    %vm2301 = vweird.f32 %v2295
    %vm2302 = vmor %vm2300, %vm2301
    %v2303 = vsel %vm2302, %v2295, %v2299
    %v2304 = vand.u32 2147483647, %v2294
    %vm2305 = vcmp.eq.f32.partialorder %v2304, 8.507059e+37
    %v2306 = vand.u32 %v2294, 2147483648
    %v2307 = vor.u32 1.1754944e-38, %v2306
    %v2308 = vsel %vm2305, %v2307, %v2303
    %v2309 = vmul.f32 1.0, %v2308
    %v2310 = vadd.f32 %v2285, %v1463
    %v2312 = vrot.slane %v2310, 4
    %2313 = vrot.lane.b32.xlu0 %v2312, 64
    %v2314 = vpop.permute.xlu0 %2313
    %v2316 = vmul.f32 %v2309, %v2314
    %2318 = vrot.lane.b32.xlu0 %v2316, 64
    %v2319 = vpop.permute.xlu0 %2318
    %v2321 = vadd.f32 %v1373, %v2319
    %v2322 = vtanh.pop %v2321
    %v2323 = vsub.f32 1.0, %v2309
    %2325 = vrot.lane.b32.xlu0 %v2322, 96
    %v2326 = vpop.permute.xlu0 %2325
    %v2328 = vmul.f32 %v2323, %v2326
    %v2329 = vrot.slane %v2188, 6
    %v2331 = vmul.f32 %v2309, %v2329
    %v2332 = vadd.f32 %v2328, %v2331
    %v2334 = vrot.slane %v2260, 4
    %2335 = vrot.lane.b32.xlu0 %v2334, 96
    %v2336 = vpop.permute.xlu0 %2335
    %v2337 = vsel %vm160, %v2336, 0
    %2339 = vmatpush.msra.mxu0 0.0
    %2340 = vmatpush.msra.mxu0 0.0
    %2341 = vmatpush.msra.mxu0 0.0
    %2342 = vmatpush.msra.mxu0 0.0
    %2343 = vmatpush.msra.mxu0 0.0
    %2344 = vmatpush.msra.mxu0 0.0
    %2345 = vmatpush.msra.mxu0 0.0
    %2346 = vmatpush.msra.mxu0 0.0
    %2347 = vmatpush.msra.mxu0 0.0
    %2348 = vmatpush.msra.mxu0 0.0
    %2349 = vmatpush.msra.mxu0 0.0
    %2350 = vmatpush.msra.mxu0 0.0
    %2351 = vmatpush.msra.mxu0 %v1417
    %2352 = vmatpush.msra.mxu0 %v1416
    %2353 = vmatpush.msra.mxu0 %v1415
    %2354 = vmatpush.msra.mxu0 %v1414
    %2355 = vmatmul.f32.gmra.mxu0 %v2337
    %v2356 = vpop.f32.mrf.mxu0
    %v2357 = vadd.f32 0.0, %v2356
    %2358 = vdwg.mxu0
    %v2360 = vrot.slane %v2357, 6
    %v2362 = vadd.f32 %v1404, %v2360
    %v2363 = vxor.u32 %v2362, 2147483648
    %v2364 = vmul.f32 %v2363, 1.442695
    %v2365 = vpow.pop %v2364
    %v2366 = vadd.f32 %v2365, 1.0
    %v2367 = vrcp.pop %v2366
    %v2368 = vmul.f32 %v2366, %v2367
    %v2369 = vsub.f32 1.0, %v2368
    %v2370 = vmul.f32 %v2367, %v2369
    %v2371 = vadd.f32 %v2367, %v2370
    %vm2372 = vweird.f32 %v2366
    %vm2373 = vweird.f32 %v2367
    %vm2374 = vmor %vm2372, %vm2373
    %v2375 = vsel %vm2374, %v2367, %v2371
    %v2376 = vand.u32 2147483647, %v2366
    %vm2377 = vcmp.eq.f32.partialorder %v2376, 8.507059e+37
    %v2378 = vand.u32 %v2366, 2147483648
    %v2379 = vor.u32 1.1754944e-38, %v2378
    %v2380 = vsel %vm2377, %v2379, %v2375
    %v2381 = vmul.f32 1.0, %v2380
    %v2382 = vadd.f32 %v2357, %v1531
    %v2384 = vrot.slane %v2382, 6
    %2385 = vrot.lane.b32.xlu0 %v2384, 64
    %v2386 = vpop.permute.xlu0 %2385
    %v2388 = vmul.f32 %v2381, %v2386
    %2390 = vrot.lane.b32.xlu0 %v2388, 64
    %v2391 = vpop.permute.xlu0 %2390
    %v2393 = vadd.f32 %v1404, %v2391
    %v2394 = vtanh.pop %v2393
    %v2395 = vsub.f32 1.0, %v2381
    %2397 = vrot.lane.b32.xlu0 %v2394, 96
    %v2398 = vpop.permute.xlu0 %2397
    %v2400 = vmul.f32 %v2395, %v2398
    %v2401 = vrot.slane %v2260, 2
    %v2403 = vmul.f32 %v2381, %v2401
    %v2404 = vadd.f32 %v2400, %v2403
    %v2406 = vrot.slane %v2332, 4
    %2407 = vrot.lane.b32.xlu0 %v2406, 96
    %v2408 = vpop.permute.xlu0 %2407
    %v2409 = vsel %vm160, %v2408, 0
    %2411 = vmatpush.msra.mxu0 0.0
    %2412 = vmatpush.msra.mxu0 0.0
    %2413 = vmatpush.msra.mxu0 0.0
    %2414 = vmatpush.msra.mxu0 0.0
    %2415 = vmatpush.msra.mxu0 0.0
    %2416 = vmatpush.msra.mxu0 0.0
    %2417 = vmatpush.msra.mxu0 0.0
    %2418 = vmatpush.msra.mxu0 0.0
    %2419 = vmatpush.msra.mxu0 0.0
    %2420 = vmatpush.msra.mxu0 0.0
    %2421 = vmatpush.msra.mxu0 0.0
    %2422 = vmatpush.msra.mxu0 0.0
    %2423 = vmatpush.msra.mxu0 %v1412
    %2424 = vmatpush.msra.mxu0 %v1411
    %2425 = vmatpush.msra.mxu0 %v1410
    %2426 = vmatpush.msra.mxu0 %v1409
    %2427 = vmatmul.f32.gmra.mxu0 %v2409
    %v2428 = vpop.f32.mrf.mxu0
    %v2429 = vadd.f32 0.0, %v2428
    %2430 = vdwg.mxu0
    %v2432 = vrot.slane %v2429, 2
    %v2434 = vadd.f32 %v1373, %v2432
    %v2435 = vxor.u32 %v2434, 2147483648
    %v2436 = vmul.f32 %v2435, 1.442695
    %v2437 = vpow.pop %v2436
    %v2438 = vadd.f32 %v2437, 1.0
    %v2439 = vrcp.pop %v2438
    %v2440 = vmul.f32 %v2438, %v2439
    %v2441 = vsub.f32 1.0, %v2440
    %v2442 = vmul.f32 %v2439, %v2441
    %v2443 = vadd.f32 %v2439, %v2442
    %vm2444 = vweird.f32 %v2438
    %vm2445 = vweird.f32 %v2439
    %vm2446 = vmor %vm2444, %vm2445
    %v2447 = vsel %vm2446, %v2439, %v2443
    %v2448 = vand.u32 2147483647, %v2438
    %vm2449 = vcmp.eq.f32.partialorder %v2448, 8.507059e+37
    %v2450 = vand.u32 %v2438, 2147483648
    %v2451 = vor.u32 1.1754944e-38, %v2450
    %v2452 = vsel %vm2449, %v2451, %v2447
    %v2453 = vmul.f32 1.0, %v2452
    %v2454 = vadd.f32 %v2429, %v1463
    %v2456 = vrot.slane %v2454, 2
    %2457 = vrot.lane.b32.xlu0 %v2456, 64
    %v2458 = vpop.permute.xlu0 %2457
    %v2460 = vmul.f32 %v2453, %v2458
    %2462 = vrot.lane.b32.xlu0 %v2460, 64
    %v2463 = vpop.permute.xlu0 %2462
    %v2465 = vadd.f32 %v1373, %v2463
    %v2466 = vtanh.pop %v2465
    %v2467 = vsub.f32 1.0, %v2453
    %2469 = vrot.lane.b32.xlu0 %v2466, 96
    %v2470 = vpop.permute.xlu0 %2469
    %v2472 = vmul.f32 %v2467, %v2470
    %v2473 = vrot.slane %v2332, 6
    %v2475 = vmul.f32 %v2453, %v2473
    %v2476 = vadd.f32 %v2472, %v2475
    %v2478 = vrot.slane %v2404, 2
    %2479 = vrot.lane.b32.xlu0 %v2478, 96
    %v2480 = vpop.permute.xlu0 %2479
    %v2481 = vsel %vm160, %v2480, 0
    %2483 = vmatpush.msra.mxu0 0.0
    %2484 = vmatpush.msra.mxu0 0.0
    %2485 = vmatpush.msra.mxu0 0.0
    %2486 = vmatpush.msra.mxu0 0.0
    %2487 = vmatpush.msra.mxu0 0.0
    %2488 = vmatpush.msra.mxu0 0.0
    %2489 = vmatpush.msra.mxu0 0.0
    %2490 = vmatpush.msra.mxu0 0.0
    %2491 = vmatpush.msra.mxu0 0.0
    %2492 = vmatpush.msra.mxu0 0.0
    %2493 = vmatpush.msra.mxu0 0.0
    %2494 = vmatpush.msra.mxu0 0.0
    %2495 = vmatpush.msra.mxu0 %v1417
    %2496 = vmatpush.msra.mxu0 %v1416
    %2497 = vmatpush.msra.mxu0 %v1415
    %2498 = vmatpush.msra.mxu0 %v1414
    %2499 = vmatmul.f32.gmra.mxu0 %v2481
    %v2500 = vpop.f32.mrf.mxu0
    %v2501 = vadd.f32 0.0, %v2500
    %2502 = vdwg.mxu0
    %v2503 = vadd.f32 %v1404, %v2501
    %v2504 = vxor.u32 %v2503, 2147483648
    %v2505 = vmul.f32 %v2504, 1.442695
    %v2506 = vpow.pop %v2505
    %v2507 = vadd.f32 %v2506, 1.0
    %v2508 = vrcp.pop %v2507
    %v2509 = vmul.f32 %v2507, %v2508
    %v2510 = vsub.f32 1.0, %v2509
    %v2511 = vmul.f32 %v2508, %v2510
    %v2512 = vadd.f32 %v2508, %v2511
    %vm2513 = vweird.f32 %v2507
    %vm2514 = vweird.f32 %v2508
    %vm2515 = vmor %vm2513, %vm2514
    %v2516 = vsel %vm2515, %v2508, %v2512
    %v2517 = vand.u32 2147483647, %v2507
    %vm2518 = vcmp.eq.f32.partialorder %v2517, 8.507059e+37
    %v2519 = vand.u32 %v2507, 2147483648
    %v2520 = vor.u32 1.1754944e-38, %v2519
    %v2521 = vsel %vm2518, %v2520, %v2516
    %v2522 = vmul.f32 1.0, %v2521
    %v2523 = vadd.f32 %v2501, %v1531
    %2525 = vrot.lane.b32.xlu0 %v2523, 64
    %v2526 = vpop.permute.xlu0 %2525
    %v2528 = vmul.f32 %v2522, %v2526
    %2530 = vrot.lane.b32.xlu0 %v2528, 64
    %v2531 = vpop.permute.xlu0 %2530
    %v2533 = vadd.f32 %v1404, %v2531
    %v2534 = vtanh.pop %v2533
    %v2535 = vsub.f32 1.0, %v2522
    %2537 = vrot.lane.b32.xlu0 %v2534, 96
    %v2538 = vpop.permute.xlu0 %2537
    %v2540 = vmul.f32 %v2535, %v2538
    %v2542 = vmul.f32 %v2522, %v2478
    %v2543 = vadd.f32 %v2540, %v2542
    %2545 = vrot.lane.b32.xlu0 %v2476, 96
    %v2546 = vpop.permute.xlu0 %2545
    %2548 = vst.msk [vmem:[#allocation9 - $0x6] sm:$0xc0] %vm747, %v2546
    %2549 = vst.msk [vmem:[#allocation9] sm:$0x3] %vm749, %v2543
    // Predicated region
    $region50: #{tpu_custom_call.1} parent=1 // pred_check
      _
    $region51: #{tpu_custom_call.1} parent=1 // pred_check_branch
      %2551 = sbr.rel (0) target = $region53
    $region52: #{tpu_custom_call.1} parent=1 // pred_region
      %2553 = vsyncadd [#allocation5], 0
      %s2555 = sshll.u32 [#allocation9], 4
      %s2556 = int_to_ptr.vmem [resolvable:$true] %s2555
      %s2557 = sshll.u32 %s9, 4
      %s2558 = int_to_ptr.hbm [resolvable:$true] %s2557
      %2560 = dma.vmem_to_hbm [thread:$0]  %s2556, 32, %s2558, [#allocation5]
    $region53: #{tpu_custom_call.1} parent=1 // pred_fallthru
      _
    // Predicated region
    $region54: #{tpu_custom_call.1} parent=1 // pred_check
      _
    $region55: #{tpu_custom_call.1} parent=1 // pred_check_branch
      %2562 = sbr.rel (0) target = $region57
    $region56: #{tpu_custom_call.1} parent=1 // pred_region
      %2564 = dma.done [#allocation5], 32
    $region57: #{tpu_custom_call.1} parent=1 // pred_fallthru
      _
    %2565 = vsyncpa [#allocation4], 1
    %2566 = vsyncpa [#allocation7], 1
    %2567 = vsyncpa [#allocation5], 1

</llo_original>
